<compile_context>
chip_gen: v7x
topology: tpu7x:2x2x1
jax: 0.10.0
libtpu: 0.0.40
codegen_flags: <defaults>
</compile_context>

<pallas_src>
import functools

import jax
import jax.numpy as jnp
from jax.experimental import pallas as pl
from jax.experimental.pallas import tpu as pltpu


# --------------------------------------------------------------------------
# One-time input / parameter re-layout (outside the hot path)
# --------------------------------------------------------------------------
def _im2col(x_nhwc, kh, kw, stride):
    """Patch tensor for a VALID conv: (B, oh, ow, C*kh*kw); columns ordered
    (c, i, j) to match torch's (OC, IC, KH, KW) weight flattening."""
    B, H, W, C = x_nhwc.shape
    oh = (H - kh) // stride + 1
    ow = (W - kw) // stride + 1
    cols = []
    for i in range(kh):
        for j in range(kw):
            cols.append(x_nhwc[:, i:i + stride * (oh - 1) + 1:stride,
                                  j:j + stride * (ow - 1) + 1:stride, :])
    patches = jnp.stack(cols, axis=-1)                  # (B, oh, ow, C, kh*kw)
    return patches.reshape(B, oh, ow, C * kh * kw), oh, ow


# 128-lane-aligned offsets inside the fused bias vector.
_B1_OFF, _B2_OFF, _B3_OFF, _BH1_OFF = 0, 128, 256, 384


def prepare_params(params, num_actions, n_pad=128):
    """One-time re-layout of the PyTorch parameters into MXU-friendly matrices."""
    A = num_actions
    hid = params["adv1_w"].shape[0]                     # 512
    assert A + 1 <= n_pad

    oc1 = params["conv1_w"].shape[0]
    w1m = params["conv1_w"].reshape(oc1, -1).T          # (IC*8*8, 32), rows (c,i,j)
    w2m = jnp.transpose(params["conv2_w"], (2, 3, 1, 0)).reshape(
        -1, params["conv2_w"].shape[0])                 # (4*4*32, 64), rows (i,j,c)
    w3m = jnp.transpose(params["conv3_w"], (2, 3, 1, 0)).reshape(
        -1, params["conv3_w"].shape[0])                 # (3*3*64, 64), rows (i,j,c)

    # Fused first head layer: [advantage | value] hidden in one matmul.
    wh1 = jnp.concatenate([params["adv1_w"].T, params["val1_w"].T], axis=1)

    # Block-diagonal, lane-dense second head layer: cols [0:A]=adv, col A=value.
    wh2 = jnp.zeros((2 * hid, n_pad), jnp.float32)
    wh2 = wh2.at[:hid, :A].set(params["adv2_w"].T)
    wh2 = wh2.at[hid:, A].set(params["val2_w"][0])

    # All biases fused into one lane-aligned vector (fewer tiny input DMAs).
    def pad128(v):
        out = jnp.zeros((128,), jnp.float32)
        return out.at[:v.shape[0]].set(v)

    bh2 = jnp.zeros((n_pad,), jnp.float32)
    bh2 = bh2.at[:A].set(params["adv2_b"]).at[A].set(params["val2_b"][0])
    biases = jnp.concatenate([
        pad128(params["conv1_b"]),                      # [  0:128)
        pad128(params["conv2_b"]),                      # [128:256)
        pad128(params["conv3_b"]),                      # [256:384)
        jnp.concatenate([params["adv1_b"], params["val1_b"]]),   # [384:384+2*hid)
        bh2,                                            # [384+2*hid: ... +n_pad)
    ]).reshape(1, -1).astype(jnp.float32)

    bf16 = jnp.bfloat16
    return {
        "w1m": w1m.astype(bf16), "w2m": w2m.astype(bf16), "w3m": w3m.astype(bf16),
        "wh1": wh1.astype(bf16), "wh2": wh2.astype(bf16), "biases": biases,
    }


# --------------------------------------------------------------------------
# Fused forward
# --------------------------------------------------------------------------
def dueling_cnn_dqn_forward(prepped, x, num_actions):
    B, C, H, W = x.shape
    A = num_actions

    # Conv geometry: Conv(8,s4) -> Conv(4,s2) -> Conv(3,s1), valid padding.
    OH1, OW1 = (H - 8) // 4 + 1, (W - 8) // 4 + 1
    OH2, OW2 = (OH1 - 4) // 2 + 1, (OW1 - 4) // 2 + 1
    assert (OH2 - 2, OW2 - 2) == (1, 1), (
        "fused kernel assumes conv3 output is 1x1 (NHWC/NCHW flatten coincide)")
    KH2 = KW2 = 4
    C1 = prepped["w1m"].shape[1]                        # conv1 out channels (32)
    C2 = prepped["w2m"].shape[1]                        # conv2 out channels (64)
    C3 = prepped["w3m"].shape[1]                        # conv3 out channels (64)
    P2 = OH2 * OW2                                      # conv2 output positions (9)
    HID2 = prepped["wh1"].shape[1]                      # 1024 = [adv 512 | val 512]
    NPAD = prepped["wh2"].shape[1]                      # 128 lane-dense head output
    BH2_OFF = _BH1_OFF + HID2
    assert prepped["biases"].shape[1] == BH2_OFF + NPAD
    assert KW2 * C1 == 128                              # j-taps form one 128-lane span

    # NCHW -> NHWC once; conv1 im2col stays at the XLA level (tiny, bf16).
    # Patch rows are ordered (ow1, b, oh1) so the kernel can build the
    # lane-dense activation map with 8 contiguous copies (no strided scatter).
    # TODO(synk): at large batch on v5e, move this im2col into the kernel.
    x_nhwc = jnp.transpose(x, (0, 2, 3, 1)).astype(jnp.bfloat16)
    patches, _, _ = _im2col(x_nhwc, 8, 8, 4)            # (B, OH1, OW1, C*64)
    p1 = jnp.transpose(patches, (2, 0, 1, 3)).reshape(OW1 * B * OH1, C * 8 * 8)

    def kernel(p1_ref, w1_ref, w2_ref, w3_ref, wh1_ref, wh2_ref, bias_ref,
               o_ref, act_ref, patch2_ref):
        f32, bf16 = jnp.float32, jnp.bfloat16
        b1 = bias_ref[:, _B1_OFF:_B1_OFF + C1]
        b2 = bias_ref[:, _B2_OFF:_B2_OFF + C2]
        b3 = bias_ref[:, _B3_OFF:_B3_OFF + C3]
        bh1 = bias_ref[:, _BH1_OFF:_BH1_OFF + HID2]
        bh2 = bias_ref[:, BH2_OFF:BH2_OFF + NPAD]

        # ---- conv1: ONE whole-batch MXU matmul (M = B*OH1*OW1) ----
        y1 = jnp.dot(p1_ref[...], w1_ref[...], preferred_element_type=f32)
        y1 = jnp.maximum(y1 + b1, 0.0)                  # rows ordered (ow1, b, oh1)

        # Lane-dense activation map act[(b*OH1+oh1), ow1*C1 + c]: because p1
        # rows are (ow1, b, oh1)-ordered, every ow1 block of y1 is one aligned
        # contiguous 16-row slice -> 8 wide copies (vs. 288 masked 32-lane ones).
        for ow1 in range(OW1):
            act_ref[:, ow1 * C1:(ow1 + 1) * C1] = (
                y1[ow1 * (B * OH1):(ow1 + 1) * (B * OH1), :])

        # ---- conv2 im2col: 24 row reads + 18 full-width (1,512) stores ----
        for b in range(B):
            for h2 in range(OH2):
                base = b * OH1 + 2 * h2
                rows = [act_ref[base + i:base + i + 1, :] for i in range(KH2)]
                for w2p in range(OW2):
                    c0 = 2 * w2p * C1                   # 0 / 64 / 128: 64-aligned
                    patch = jnp.concatenate(
                        [r[:, c0:c0 + KW2 * C1] for r in rows], axis=1)
                    row = (h2 * OW2 + w2p) * B + b      # position-major rows
                    patch2_ref[row:row + 1, :] = patch

        # ---- conv2: single (B*9, 512) x (512, 64) MXU matmul ----
        y2 = jnp.dot(patch2_ref[...].astype(bf16), w2_ref[...],
                     preferred_element_type=f32)
        y2 = jnp.maximum(y2 + b2, 0.0)                  # (B*P2, C2) f32

        # ---- conv3 (1x1 output): 9 tap-accumulated matmuls, no patch buffer ----
        acc = jnp.zeros((B, C3), f32)
        for p in range(P2):
            acc += jnp.dot(y2[p * B:(p + 1) * B, :].astype(bf16),
                           w3_ref[p * C2:(p + 1) * C2, :],
                           preferred_element_type=f32)
        feats = jnp.maximum(acc + b3, 0.0)              # (B, 64) f32

        # ---- dueling heads: fused [adv|val] hidden + block-diagonal 2nd layer
        hid = jnp.dot(feats.astype(bf16), wh1_ref[...], preferred_element_type=f32)
        hid = jnp.maximum(hid + bh1, 0.0)               # (B, 1024)
        yh = jnp.dot(hid.astype(bf16), wh2_ref[...], preferred_element_type=f32)
        yh = yh + bh2                                   # (B, 128) lane-dense
        adv = yh[:, :A]
        val = yh[:, A:A + 1]
        # torch reference: value + advantage - advantage.mean()  (global mean)
        mean = jnp.sum(jnp.sum(adv, axis=1, keepdims=True), axis=0,
                       keepdims=True) * (1.0 / (B * A))
        # Lane-dense output; cols >= A are padding and sliced off in the wrapper.
        o_ref[...] = (yh + val - mean).astype(o_ref.dtype)

    def fs(shape):
        return pl.BlockSpec(shape, lambda i: (0,) * len(shape))

    ins = [p1, prepped["w1m"], prepped["w2m"], prepped["w3m"],
           prepped["wh1"], prepped["wh2"], prepped["biases"]]

    out_padded = pl.pallas_call(
        kernel,
        out_shape=jax.ShapeDtypeStruct((B, NPAD), jnp.float32),
        grid=(1,),
        in_specs=[fs(a.shape) for a in ins],
        out_specs=fs((B, NPAD)),
        scratch_shapes=[
            pltpu.VMEM((B * OH1, OW1 * C1), jnp.float32),       # lane-dense conv1 act
            pltpu.VMEM((B * P2, KH2 * KW2 * C1), jnp.float32),  # conv2 im2col patches
        ],
        compiler_params=pltpu.CompilerParams(
            dimension_semantics=("arbitrary",),
            vmem_limit_bytes=32 * 1024 * 1024),
    )(*ins)
    return out_padded[:, :A]


# --------------------------------------------------------------------------
# Pure-JAX reference (sanity check) + deterministic init
# --------------------------------------------------------------------------
def _reference_forward(params, x):
    def conv(h, w, b, s):
        y = jax.lax.conv_general_dilated(
            h, w, (s, s), "VALID", dimension_numbers=("NCHW", "OIHW", "NCHW"))
        return jax.nn.relu(y + b[None, :, None, None])
    y = conv(x, params["conv1_w"], params["conv1_b"], 4)
    y = conv(y, params["conv2_w"], params["conv2_b"], 2)
    y = conv(y, params["conv3_w"], params["conv3_b"], 1)
    f = y.reshape(y.shape[0], -1)
    adv = jax.nn.relu(f @ params["adv1_w"].T + params["adv1_b"]) @ params["adv2_w"].T + params["adv2_b"]
    val = jax.nn.relu(f @ params["val1_w"].T + params["val1_b"]) @ params["val2_w"].T + params["val2_b"]
    return val + adv - jnp.mean(adv)


def init_params(key, in_channels, feature_size, num_actions, hidden=512):
    ks = jax.random.split(key, 14)
    s = 0.05
    n = lambda k, shape: s * jax.random.normal(k, shape, dtype=jnp.float32)
    return {
        "conv1_w": n(ks[0], (32, in_channels, 8, 8)), "conv1_b": n(ks[1], (32,)),
        "conv2_w": n(ks[2], (64, 32, 4, 4)),          "conv2_b": n(ks[3], (64,)),
        "conv3_w": n(ks[4], (64, 64, 3, 3)),          "conv3_b": n(ks[5], (64,)),
        "adv1_w": n(ks[6], (hidden, feature_size)),   "adv1_b": n(ks[7], (hidden,)),
        "adv2_w": n(ks[8], (num_actions, hidden)),    "adv2_b": n(ks[9], (num_actions,)),
        "val1_w": n(ks[10], (hidden, feature_size)),  "val1_b": n(ks[11], (hidden,)),
        "val2_w": n(ks[12], (1, hidden)),             "val2_b": n(ks[13], (1,)),
    }


if __name__ == "__main__":
    # Smallest input consistent with the conv stack:
    # 36 -> (36-8)/4+1=8 -> (8-4)/2+1=3 -> (3-3)/1+1=1  => feature_size = 64
    B, C, H, W = 2, 4, 36, 36
    num_actions = 6
    feature_size = 64

    key = jax.random.PRNGKey(0)
    pkey, xkey = jax.random.split(key)
    params = init_params(pkey, C, feature_size, num_actions)
    x = jax.random.normal(xkey, (B, C, H, W), dtype=jnp.float32)

    prepped = prepare_params(params, num_actions)       # one-time weight re-layout
    fwd = jax.jit(functools.partial(dueling_cnn_dqn_forward, num_actions=num_actions))
    out = jax.block_until_ready(fwd(prepped, x))

    assert out.shape == (B, num_actions)
    assert bool(jnp.all(jnp.isfinite(out)))
    ref = _reference_forward(params, x)                 # f32 reference; bf16 MXU tolerance
    assert bool(jnp.allclose(out, ref, rtol=2e-1, atol=5e-2))
    print("KERNEL_OK")
</pallas_src>

<mosaic_0001>
module attributes {stable_mosaic.version = 11 : i64} {
  func.func @kernel(%arg0: i32, %arg1: memref<128x256xbf16, #tpu.memory_space<vmem>>, %arg2: memref<256x32xbf16, #tpu.memory_space<vmem>>, %arg3: memref<512x64xbf16, #tpu.memory_space<vmem>>, %arg4: memref<576x64xbf16, #tpu.memory_space<vmem>>, %arg5: memref<64x1024xbf16, #tpu.memory_space<vmem>>, %arg6: memref<1024x128xbf16, #tpu.memory_space<vmem>>, %arg7: memref<1x1536xf32, #tpu.memory_space<vmem>>, %arg8: memref<2x128xf32, #tpu.memory_space<vmem>>, %arg9: memref<16x256xf32, #tpu.memory_space<vmem>>, %arg10: memref<18x512xf32, #tpu.memory_space<vmem>>) attributes {dimension_semantics = [#tpu.dimension_semantics<arbitrary>], iteration_bounds = array<i64: 1>, scalar_prefetch = 0 : i64, scratch_operands = 2 : i64, tpu.core_type = #tpu.core_type<tc>, window_params = [{pipeline_mode = #tpu.pipeline_mode<synchronous>, transform_indices = @transform_0, window_bounds = array<i64: 128, 256>}, {pipeline_mode = #tpu.pipeline_mode<synchronous>, transform_indices = @transform_1, window_bounds = array<i64: 256, 32>}, {pipeline_mode = #tpu.pipeline_mode<synchronous>, transform_indices = @transform_2, window_bounds = array<i64: 512, 64>}, {pipeline_mode = #tpu.pipeline_mode<synchronous>, transform_indices = @transform_3, window_bounds = array<i64: 576, 64>}, {pipeline_mode = #tpu.pipeline_mode<synchronous>, transform_indices = @transform_4, window_bounds = array<i64: 64, 1024>}, {pipeline_mode = #tpu.pipeline_mode<synchronous>, transform_indices = @transform_5, window_bounds = array<i64: 1024, 128>}, {pipeline_mode = #tpu.pipeline_mode<synchronous>, transform_indices = @transform_6, window_bounds = array<i64: 1, 1536>}, {pipeline_mode = #tpu.pipeline_mode<synchronous>, transform_indices = @transform_7, window_bounds = array<i64: 2, 128>}]} {
    %c0 = arith.constant 0 : index
    %c0_0 = arith.constant 0 : index
    %0 = vector.load %arg7[%c0, %c0_0] : memref<1x1536xf32, #tpu.memory_space<vmem>>, vector<1x32xf32>
    %c0_1 = arith.constant 0 : index
    %c128 = arith.constant 128 : index
    %1 = vector.load %arg7[%c0_1, %c128] : memref<1x1536xf32, #tpu.memory_space<vmem>>, vector<1x64xf32>
    %c0_2 = arith.constant 0 : index
    %c256 = arith.constant 256 : index
    %2 = vector.load %arg7[%c0_2, %c256] : memref<1x1536xf32, #tpu.memory_space<vmem>>, vector<1x64xf32>
    %c0_3 = arith.constant 0 : index
    %c384 = arith.constant 384 : index
    %3 = vector.load %arg7[%c0_3, %c384] : memref<1x1536xf32, #tpu.memory_space<vmem>>, vector<1x1024xf32>
    %c0_4 = arith.constant 0 : index
    %c1408 = arith.constant 1408 : index
    %4 = vector.load %arg7[%c0_4, %c1408] : memref<1x1536xf32, #tpu.memory_space<vmem>>, vector<1x128xf32>
    %c0_5 = arith.constant 0 : index
    %c0_6 = arith.constant 0 : index
    %5 = vector.load %arg1[%c0_5, %c0_6] : memref<128x256xbf16, #tpu.memory_space<vmem>>, vector<128x256xbf16>
    %c0_7 = arith.constant 0 : index
    %c0_8 = arith.constant 0 : index
    %6 = vector.load %arg2[%c0_7, %c0_8] : memref<256x32xbf16, #tpu.memory_space<vmem>>, vector<256x32xbf16>
    %cst = arith.constant dense<0.000000e+00> : vector<128x32xf32>
    %7 = tpu.matmul %5, %6, %cst {dimension_numbers = #tpu.dot_dimension_numbers<[1], [0], [0], [1], [0, 0, 1, 1], [], []>} : vector<128x256xbf16>, vector<256x32xbf16>, vector<128x32xf32> -> vector<128x32xf32>
    %8 = vector.broadcast %0 : vector<1x32xf32> to vector<128x32xf32>
    %9 = arith.addf %7, %8 : vector<128x32xf32>
    %cst_9 = arith.constant 0.000000e+00 : f32
    %10 = vector.broadcast %cst_9 : f32 to vector<128x32xf32>
    %11 = arith.maximumf %9, %10 : vector<128x32xf32>
    %12 = vector.extract_strided_slice %11 {offsets = [0, 0], sizes = [16, 32], strides = [1, 1]} : vector<128x32xf32> to vector<16x32xf32>
    %c0_10 = arith.constant 0 : index
    %c0_11 = arith.constant 0 : index
    %13 = vector.load %arg9[%c0_10, %c0_11] : memref<16x256xf32, #tpu.memory_space<vmem>>, vector<16x32xf32>
    tpu.vector_store %arg9[%c0_10, %c0_11], %12 {strides = array<i32>} : memref<16x256xf32, #tpu.memory_space<vmem>>, vector<16x32xf32>,
    %14 = vector.extract_strided_slice %11 {offsets = [16, 0], sizes = [16, 32], strides = [1, 1]} : vector<128x32xf32> to vector<16x32xf32>
    %c0_12 = arith.constant 0 : index
    %c32 = arith.constant 32 : index
    %15 = vector.load %arg9[%c0_12, %c32] : memref<16x256xf32, #tpu.memory_space<vmem>>, vector<16x32xf32>
    tpu.vector_store %arg9[%c0_12, %c32], %14 {strides = array<i32>} : memref<16x256xf32, #tpu.memory_space<vmem>>, vector<16x32xf32>,
    %16 = vector.extract_strided_slice %11 {offsets = [32, 0], sizes = [16, 32], strides = [1, 1]} : vector<128x32xf32> to vector<16x32xf32>
    %c0_13 = arith.constant 0 : index
    %c64 = arith.constant 64 : index
    %17 = vector.load %arg9[%c0_13, %c64] : memref<16x256xf32, #tpu.memory_space<vmem>>, vector<16x32xf32>
    tpu.vector_store %arg9[%c0_13, %c64], %16 {strides = array<i32>} : memref<16x256xf32, #tpu.memory_space<vmem>>, vector<16x32xf32>,
    %18 = vector.extract_strided_slice %11 {offsets = [48, 0], sizes = [16, 32], strides = [1, 1]} : vector<128x32xf32> to vector<16x32xf32>
    %c0_14 = arith.constant 0 : index
    %c96 = arith.constant 96 : index
    %19 = vector.load %arg9[%c0_14, %c96] : memref<16x256xf32, #tpu.memory_space<vmem>>, vector<16x32xf32>
    tpu.vector_store %arg9[%c0_14, %c96], %18 {strides = array<i32>} : memref<16x256xf32, #tpu.memory_space<vmem>>, vector<16x32xf32>,
    %20 = vector.extract_strided_slice %11 {offsets = [64, 0], sizes = [16, 32], strides = [1, 1]} : vector<128x32xf32> to vector<16x32xf32>
    %c0_15 = arith.constant 0 : index
    %c128_16 = arith.constant 128 : index
    %21 = vector.load %arg9[%c0_15, %c128_16] : memref<16x256xf32, #tpu.memory_space<vmem>>, vector<16x32xf32>
    tpu.vector_store %arg9[%c0_15, %c128_16], %20 {strides = array<i32>} : memref<16x256xf32, #tpu.memory_space<vmem>>, vector<16x32xf32>,
    %22 = vector.extract_strided_slice %11 {offsets = [80, 0], sizes = [16, 32], strides = [1, 1]} : vector<128x32xf32> to vector<16x32xf32>
    %c0_17 = arith.constant 0 : index
    %c160 = arith.constant 160 : index
    %23 = vector.load %arg9[%c0_17, %c160] : memref<16x256xf32, #tpu.memory_space<vmem>>, vector<16x32xf32>
    tpu.vector_store %arg9[%c0_17, %c160], %22 {strides = array<i32>} : memref<16x256xf32, #tpu.memory_space<vmem>>, vector<16x32xf32>,
    %24 = vector.extract_strided_slice %11 {offsets = [96, 0], sizes = [16, 32], strides = [1, 1]} : vector<128x32xf32> to vector<16x32xf32>
    %c0_18 = arith.constant 0 : index
    %c192 = arith.constant 192 : index
    %25 = vector.load %arg9[%c0_18, %c192] : memref<16x256xf32, #tpu.memory_space<vmem>>, vector<16x32xf32>
    tpu.vector_store %arg9[%c0_18, %c192], %24 {strides = array<i32>} : memref<16x256xf32, #tpu.memory_space<vmem>>, vector<16x32xf32>,
    %26 = vector.extract_strided_slice %11 {offsets = [112, 0], sizes = [16, 32], strides = [1, 1]} : vector<128x32xf32> to vector<16x32xf32>
    %c0_19 = arith.constant 0 : index
    %c224 = arith.constant 224 : index
    %27 = vector.load %arg9[%c0_19, %c224] : memref<16x256xf32, #tpu.memory_space<vmem>>, vector<16x32xf32>
    tpu.vector_store %arg9[%c0_19, %c224], %26 {strides = array<i32>} : memref<16x256xf32, #tpu.memory_space<vmem>>, vector<16x32xf32>,
    %c0_20 = arith.constant 0 : index
    %c0_21 = arith.constant 0 : index
    %28 = vector.load %arg9[%c0_20, %c0_21] : memref<16x256xf32, #tpu.memory_space<vmem>>, vector<1x256xf32>
    %c1 = arith.constant 1 : index
    %c0_22 = arith.constant 0 : index
    %29 = vector.load %arg9[%c1, %c0_22] : memref<16x256xf32, #tpu.memory_space<vmem>>, vector<1x256xf32>
    %c2 = arith.constant 2 : index
    %c0_23 = arith.constant 0 : index
    %30 = vector.load %arg9[%c2, %c0_23] : memref<16x256xf32, #tpu.memory_space<vmem>>, vector<1x256xf32>
    %c3 = arith.constant 3 : index
    %c0_24 = arith.constant 0 : index
    %31 = vector.load %arg9[%c3, %c0_24] : memref<16x256xf32, #tpu.memory_space<vmem>>, vector<1x256xf32>
    %32 = vector.extract_strided_slice %28 {offsets = [0, 0], sizes = [1, 128], strides = [1, 1]} : vector<1x256xf32> to vector<1x128xf32>
    %33 = vector.extract_strided_slice %29 {offsets = [0, 0], sizes = [1, 128], strides = [1, 1]} : vector<1x256xf32> to vector<1x128xf32>
    %34 = vector.extract_strided_slice %30 {offsets = [0, 0], sizes = [1, 128], strides = [1, 1]} : vector<1x256xf32> to vector<1x128xf32>
    %35 = vector.extract_strided_slice %31 {offsets = [0, 0], sizes = [1, 128], strides = [1, 1]} : vector<1x256xf32> to vector<1x128xf32>
    %36 = tpu.concatenate %32, %33, %34, %35 in 1 : vector<1x128xf32>, vector<1x128xf32>, vector<1x128xf32>, vector<1x128xf32> -> vector<1x512xf32>
    %c0_25 = arith.constant 0 : index
    %c0_26 = arith.constant 0 : index
    %37 = vector.load %arg10[%c0_25, %c0_26] : memref<18x512xf32, #tpu.memory_space<vmem>>, vector<1x512xf32>
    tpu.vector_store %arg10[%c0_25, %c0_26], %36 {strides = array<i32>} : memref<18x512xf32, #tpu.memory_space<vmem>>, vector<1x512xf32>,
    %38 = vector.extract_strided_slice %28 {offsets = [0, 64], sizes = [1, 128], strides = [1, 1]} : vector<1x256xf32> to vector<1x128xf32>
    %39 = vector.extract_strided_slice %29 {offsets = [0, 64], sizes = [1, 128], strides = [1, 1]} : vector<1x256xf32> to vector<1x128xf32>
    %40 = vector.extract_strided_slice %30 {offsets = [0, 64], sizes = [1, 128], strides = [1, 1]} : vector<1x256xf32> to vector<1x128xf32>
    %41 = vector.extract_strided_slice %31 {offsets = [0, 64], sizes = [1, 128], strides = [1, 1]} : vector<1x256xf32> to vector<1x128xf32>
    %42 = tpu.concatenate %38, %39, %40, %41 in 1 : vector<1x128xf32>, vector<1x128xf32>, vector<1x128xf32>, vector<1x128xf32> -> vector<1x512xf32>
    %c2_27 = arith.constant 2 : index
    %c0_28 = arith.constant 0 : index
    %43 = vector.load %arg10[%c2_27, %c0_28] : memref<18x512xf32, #tpu.memory_space<vmem>>, vector<1x512xf32>
    tpu.vector_store %arg10[%c2_27, %c0_28], %42 {strides = array<i32>} : memref<18x512xf32, #tpu.memory_space<vmem>>, vector<1x512xf32>,
    %44 = vector.extract_strided_slice %28 {offsets = [0, 128], sizes = [1, 128], strides = [1, 1]} : vector<1x256xf32> to vector<1x128xf32>
    %45 = vector.extract_strided_slice %29 {offsets = [0, 128], sizes = [1, 128], strides = [1, 1]} : vector<1x256xf32> to vector<1x128xf32>
    %46 = vector.extract_strided_slice %30 {offsets = [0, 128], sizes = [1, 128], strides = [1, 1]} : vector<1x256xf32> to vector<1x128xf32>
    %47 = vector.extract_strided_slice %31 {offsets = [0, 128], sizes = [1, 128], strides = [1, 1]} : vector<1x256xf32> to vector<1x128xf32>
    %48 = tpu.concatenate %44, %45, %46, %47 in 1 : vector<1x128xf32>, vector<1x128xf32>, vector<1x128xf32>, vector<1x128xf32> -> vector<1x512xf32>
    %c4 = arith.constant 4 : index
    %c0_29 = arith.constant 0 : index
    %49 = vector.load %arg10[%c4, %c0_29] : memref<18x512xf32, #tpu.memory_space<vmem>>, vector<1x512xf32>
    tpu.vector_store %arg10[%c4, %c0_29], %48 {strides = array<i32>} : memref<18x512xf32, #tpu.memory_space<vmem>>, vector<1x512xf32>,
    %c2_30 = arith.constant 2 : index
    %c0_31 = arith.constant 0 : index
    %50 = vector.load %arg9[%c2_30, %c0_31] : memref<16x256xf32, #tpu.memory_space<vmem>>, vector<1x256xf32>
    %c3_32 = arith.constant 3 : index
    %c0_33 = arith.constant 0 : index
    %51 = vector.load %arg9[%c3_32, %c0_33] : memref<16x256xf32, #tpu.memory_space<vmem>>, vector<1x256xf32>
    %c4_34 = arith.constant 4 : index
    %c0_35 = arith.constant 0 : index
    %52 = vector.load %arg9[%c4_34, %c0_35] : memref<16x256xf32, #tpu.memory_space<vmem>>, vector<1x256xf32>
    %c5 = arith.constant 5 : index
    %c0_36 = arith.constant 0 : index
    %53 = vector.load %arg9[%c5, %c0_36] : memref<16x256xf32, #tpu.memory_space<vmem>>, vector<1x256xf32>
    %54 = vector.extract_strided_slice %50 {offsets = [0, 0], sizes = [1, 128], strides = [1, 1]} : vector<1x256xf32> to vector<1x128xf32>
    %55 = vector.extract_strided_slice %51 {offsets = [0, 0], sizes = [1, 128], strides = [1, 1]} : vector<1x256xf32> to vector<1x128xf32>
    %56 = vector.extract_strided_slice %52 {offsets = [0, 0], sizes = [1, 128], strides = [1, 1]} : vector<1x256xf32> to vector<1x128xf32>
    %57 = vector.extract_strided_slice %53 {offsets = [0, 0], sizes = [1, 128], strides = [1, 1]} : vector<1x256xf32> to vector<1x128xf32>
    %58 = tpu.concatenate %54, %55, %56, %57 in 1 : vector<1x128xf32>, vector<1x128xf32>, vector<1x128xf32>, vector<1x128xf32> -> vector<1x512xf32>
    %c6 = arith.constant 6 : index
    %c0_37 = arith.constant 0 : index
    %59 = vector.load %arg10[%c6, %c0_37] : memref<18x512xf32, #tpu.memory_space<vmem>>, vector<1x512xf32>
    tpu.vector_store %arg10[%c6, %c0_37], %58 {strides = array<i32>} : memref<18x512xf32, #tpu.memory_space<vmem>>, vector<1x512xf32>,
    %60 = vector.extract_strided_slice %50 {offsets = [0, 64], sizes = [1, 128], strides = [1, 1]} : vector<1x256xf32> to vector<1x128xf32>
    %61 = vector.extract_strided_slice %51 {offsets = [0, 64], sizes = [1, 128], strides = [1, 1]} : vector<1x256xf32> to vector<1x128xf32>
    %62 = vector.extract_strided_slice %52 {offsets = [0, 64], sizes = [1, 128], strides = [1, 1]} : vector<1x256xf32> to vector<1x128xf32>
    %63 = vector.extract_strided_slice %53 {offsets = [0, 64], sizes = [1, 128], strides = [1, 1]} : vector<1x256xf32> to vector<1x128xf32>
    %64 = tpu.concatenate %60, %61, %62, %63 in 1 : vector<1x128xf32>, vector<1x128xf32>, vector<1x128xf32>, vector<1x128xf32> -> vector<1x512xf32>
    %c8 = arith.constant 8 : index
    %c0_38 = arith.constant 0 : index
    %65 = vector.load %arg10[%c8, %c0_38] : memref<18x512xf32, #tpu.memory_space<vmem>>, vector<1x512xf32>
    tpu.vector_store %arg10[%c8, %c0_38], %64 {strides = array<i32>} : memref<18x512xf32, #tpu.memory_space<vmem>>, vector<1x512xf32>,
    %66 = vector.extract_strided_slice %50 {offsets = [0, 128], sizes = [1, 128], strides = [1, 1]} : vector<1x256xf32> to vector<1x128xf32>
    %67 = vector.extract_strided_slice %51 {offsets = [0, 128], sizes = [1, 128], strides = [1, 1]} : vector<1x256xf32> to vector<1x128xf32>
    %68 = vector.extract_strided_slice %52 {offsets = [0, 128], sizes = [1, 128], strides = [1, 1]} : vector<1x256xf32> to vector<1x128xf32>
    %69 = vector.extract_strided_slice %53 {offsets = [0, 128], sizes = [1, 128], strides = [1, 1]} : vector<1x256xf32> to vector<1x128xf32>
    %70 = tpu.concatenate %66, %67, %68, %69 in 1 : vector<1x128xf32>, vector<1x128xf32>, vector<1x128xf32>, vector<1x128xf32> -> vector<1x512xf32>
    %c10 = arith.constant 10 : index
    %c0_39 = arith.constant 0 : index
    %71 = vector.load %arg10[%c10, %c0_39] : memref<18x512xf32, #tpu.memory_space<vmem>>, vector<1x512xf32>
    tpu.vector_store %arg10[%c10, %c0_39], %70 {strides = array<i32>} : memref<18x512xf32, #tpu.memory_space<vmem>>, vector<1x512xf32>,
    %c4_40 = arith.constant 4 : index
    %c0_41 = arith.constant 0 : index
    %72 = vector.load %arg9[%c4_40, %c0_41] : memref<16x256xf32, #tpu.memory_space<vmem>>, vector<1x256xf32>
    %c5_42 = arith.constant 5 : index
    %c0_43 = arith.constant 0 : index
    %73 = vector.load %arg9[%c5_42, %c0_43] : memref<16x256xf32, #tpu.memory_space<vmem>>, vector<1x256xf32>
    %c6_44 = arith.constant 6 : index
    %c0_45 = arith.constant 0 : index
    %74 = vector.load %arg9[%c6_44, %c0_45] : memref<16x256xf32, #tpu.memory_space<vmem>>, vector<1x256xf32>
    %c7 = arith.constant 7 : index
    %c0_46 = arith.constant 0 : index
    %75 = vector.load %arg9[%c7, %c0_46] : memref<16x256xf32, #tpu.memory_space<vmem>>, vector<1x256xf32>
    %76 = vector.extract_strided_slice %72 {offsets = [0, 0], sizes = [1, 128], strides = [1, 1]} : vector<1x256xf32> to vector<1x128xf32>
    %77 = vector.extract_strided_slice %73 {offsets = [0, 0], sizes = [1, 128], strides = [1, 1]} : vector<1x256xf32> to vector<1x128xf32>
    %78 = vector.extract_strided_slice %74 {offsets = [0, 0], sizes = [1, 128], strides = [1, 1]} : vector<1x256xf32> to vector<1x128xf32>
    %79 = vector.extract_strided_slice %75 {offsets = [0, 0], sizes = [1, 128], strides = [1, 1]} : vector<1x256xf32> to vector<1x128xf32>
    %80 = tpu.concatenate %76, %77, %78, %79 in 1 : vector<1x128xf32>, vector<1x128xf32>, vector<1x128xf32>, vector<1x128xf32> -> vector<1x512xf32>
    %c12 = arith.constant 12 : index
    %c0_47 = arith.constant 0 : index
    %81 = vector.load %arg10[%c12, %c0_47] : memref<18x512xf32, #tpu.memory_space<vmem>>, vector<1x512xf32>
    tpu.vector_store %arg10[%c12, %c0_47], %80 {strides = array<i32>} : memref<18x512xf32, #tpu.memory_space<vmem>>, vector<1x512xf32>,
    %82 = vector.extract_strided_slice %72 {offsets = [0, 64], sizes = [1, 128], strides = [1, 1]} : vector<1x256xf32> to vector<1x128xf32>
    %83 = vector.extract_strided_slice %73 {offsets = [0, 64], sizes = [1, 128], strides = [1, 1]} : vector<1x256xf32> to vector<1x128xf32>
    %84 = vector.extract_strided_slice %74 {offsets = [0, 64], sizes = [1, 128], strides = [1, 1]} : vector<1x256xf32> to vector<1x128xf32>
    %85 = vector.extract_strided_slice %75 {offsets = [0, 64], sizes = [1, 128], strides = [1, 1]} : vector<1x256xf32> to vector<1x128xf32>
    %86 = tpu.concatenate %82, %83, %84, %85 in 1 : vector<1x128xf32>, vector<1x128xf32>, vector<1x128xf32>, vector<1x128xf32> -> vector<1x512xf32>
    %c14 = arith.constant 14 : index
    %c0_48 = arith.constant 0 : index
    %87 = vector.load %arg10[%c14, %c0_48] : memref<18x512xf32, #tpu.memory_space<vmem>>, vector<1x512xf32>
    tpu.vector_store %arg10[%c14, %c0_48], %86 {strides = array<i32>} : memref<18x512xf32, #tpu.memory_space<vmem>>, vector<1x512xf32>,
    %88 = vector.extract_strided_slice %72 {offsets = [0, 128], sizes = [1, 128], strides = [1, 1]} : vector<1x256xf32> to vector<1x128xf32>
    %89 = vector.extract_strided_slice %73 {offsets = [0, 128], sizes = [1, 128], strides = [1, 1]} : vector<1x256xf32> to vector<1x128xf32>
    %90 = vector.extract_strided_slice %74 {offsets = [0, 128], sizes = [1, 128], strides = [1, 1]} : vector<1x256xf32> to vector<1x128xf32>
    %91 = vector.extract_strided_slice %75 {offsets = [0, 128], sizes = [1, 128], strides = [1, 1]} : vector<1x256xf32> to vector<1x128xf32>
    %92 = tpu.concatenate %88, %89, %90, %91 in 1 : vector<1x128xf32>, vector<1x128xf32>, vector<1x128xf32>, vector<1x128xf32> -> vector<1x512xf32>
    %c16 = arith.constant 16 : index
    %c0_49 = arith.constant 0 : index
    %93 = vector.load %arg10[%c16, %c0_49] : memref<18x512xf32, #tpu.memory_space<vmem>>, vector<1x512xf32>
    tpu.vector_store %arg10[%c16, %c0_49], %92 {strides = array<i32>} : memref<18x512xf32, #tpu.memory_space<vmem>>, vector<1x512xf32>,
    %c8_50 = arith.constant 8 : index
    %c0_51 = arith.constant 0 : index
    %94 = vector.load %arg9[%c8_50, %c0_51] : memref<16x256xf32, #tpu.memory_space<vmem>>, vector<1x256xf32>
    %c9 = arith.constant 9 : index
    %c0_52 = arith.constant 0 : index
    %95 = vector.load %arg9[%c9, %c0_52] : memref<16x256xf32, #tpu.memory_space<vmem>>, vector<1x256xf32>
    %c10_53 = arith.constant 10 : index
    %c0_54 = arith.constant 0 : index
    %96 = vector.load %arg9[%c10_53, %c0_54] : memref<16x256xf32, #tpu.memory_space<vmem>>, vector<1x256xf32>
    %c11 = arith.constant 11 : index
    %c0_55 = arith.constant 0 : index
    %97 = vector.load %arg9[%c11, %c0_55] : memref<16x256xf32, #tpu.memory_space<vmem>>, vector<1x256xf32>
    %98 = vector.extract_strided_slice %94 {offsets = [0, 0], sizes = [1, 128], strides = [1, 1]} : vector<1x256xf32> to vector<1x128xf32>
    %99 = vector.extract_strided_slice %95 {offsets = [0, 0], sizes = [1, 128], strides = [1, 1]} : vector<1x256xf32> to vector<1x128xf32>
    %100 = vector.extract_strided_slice %96 {offsets = [0, 0], sizes = [1, 128], strides = [1, 1]} : vector<1x256xf32> to vector<1x128xf32>
    %101 = vector.extract_strided_slice %97 {offsets = [0, 0], sizes = [1, 128], strides = [1, 1]} : vector<1x256xf32> to vector<1x128xf32>
    %102 = tpu.concatenate %98, %99, %100, %101 in 1 : vector<1x128xf32>, vector<1x128xf32>, vector<1x128xf32>, vector<1x128xf32> -> vector<1x512xf32>
    %c1_56 = arith.constant 1 : index
    %c0_57 = arith.constant 0 : index
    %103 = vector.load %arg10[%c1_56, %c0_57] : memref<18x512xf32, #tpu.memory_space<vmem>>, vector<1x512xf32>
    tpu.vector_store %arg10[%c1_56, %c0_57], %102 {strides = array<i32>} : memref<18x512xf32, #tpu.memory_space<vmem>>, vector<1x512xf32>,
    %104 = vector.extract_strided_slice %94 {offsets = [0, 64], sizes = [1, 128], strides = [1, 1]} : vector<1x256xf32> to vector<1x128xf32>
    %105 = vector.extract_strided_slice %95 {offsets = [0, 64], sizes = [1, 128], strides = [1, 1]} : vector<1x256xf32> to vector<1x128xf32>
    %106 = vector.extract_strided_slice %96 {offsets = [0, 64], sizes = [1, 128], strides = [1, 1]} : vector<1x256xf32> to vector<1x128xf32>
    %107 = vector.extract_strided_slice %97 {offsets = [0, 64], sizes = [1, 128], strides = [1, 1]} : vector<1x256xf32> to vector<1x128xf32>
    %108 = tpu.concatenate %104, %105, %106, %107 in 1 : vector<1x128xf32>, vector<1x128xf32>, vector<1x128xf32>, vector<1x128xf32> -> vector<1x512xf32>
    %c3_58 = arith.constant 3 : index
    %c0_59 = arith.constant 0 : index
    %109 = vector.load %arg10[%c3_58, %c0_59] : memref<18x512xf32, #tpu.memory_space<vmem>>, vector<1x512xf32>
    tpu.vector_store %arg10[%c3_58, %c0_59], %108 {strides = array<i32>} : memref<18x512xf32, #tpu.memory_space<vmem>>, vector<1x512xf32>,
    %110 = vector.extract_strided_slice %94 {offsets = [0, 128], sizes = [1, 128], strides = [1, 1]} : vector<1x256xf32> to vector<1x128xf32>
    %111 = vector.extract_strided_slice %95 {offsets = [0, 128], sizes = [1, 128], strides = [1, 1]} : vector<1x256xf32> to vector<1x128xf32>
    %112 = vector.extract_strided_slice %96 {offsets = [0, 128], sizes = [1, 128], strides = [1, 1]} : vector<1x256xf32> to vector<1x128xf32>
    %113 = vector.extract_strided_slice %97 {offsets = [0, 128], sizes = [1, 128], strides = [1, 1]} : vector<1x256xf32> to vector<1x128xf32>
    %114 = tpu.concatenate %110, %111, %112, %113 in 1 : vector<1x128xf32>, vector<1x128xf32>, vector<1x128xf32>, vector<1x128xf32> -> vector<1x512xf32>
    %c5_60 = arith.constant 5 : index
    %c0_61 = arith.constant 0 : index
    %115 = vector.load %arg10[%c5_60, %c0_61] : memref<18x512xf32, #tpu.memory_space<vmem>>, vector<1x512xf32>
    tpu.vector_store %arg10[%c5_60, %c0_61], %114 {strides = array<i32>} : memref<18x512xf32, #tpu.memory_space<vmem>>, vector<1x512xf32>,
    %c10_62 = arith.constant 10 : index
    %c0_63 = arith.constant 0 : index
    %116 = vector.load %arg9[%c10_62, %c0_63] : memref<16x256xf32, #tpu.memory_space<vmem>>, vector<1x256xf32>
    %c11_64 = arith.constant 11 : index
    %c0_65 = arith.constant 0 : index
    %117 = vector.load %arg9[%c11_64, %c0_65] : memref<16x256xf32, #tpu.memory_space<vmem>>, vector<1x256xf32>
    %c12_66 = arith.constant 12 : index
    %c0_67 = arith.constant 0 : index
    %118 = vector.load %arg9[%c12_66, %c0_67] : memref<16x256xf32, #tpu.memory_space<vmem>>, vector<1x256xf32>
    %c13 = arith.constant 13 : index
    %c0_68 = arith.constant 0 : index
    %119 = vector.load %arg9[%c13, %c0_68] : memref<16x256xf32, #tpu.memory_space<vmem>>, vector<1x256xf32>
    %120 = vector.extract_strided_slice %116 {offsets = [0, 0], sizes = [1, 128], strides = [1, 1]} : vector<1x256xf32> to vector<1x128xf32>
    %121 = vector.extract_strided_slice %117 {offsets = [0, 0], sizes = [1, 128], strides = [1, 1]} : vector<1x256xf32> to vector<1x128xf32>
    %122 = vector.extract_strided_slice %118 {offsets = [0, 0], sizes = [1, 128], strides = [1, 1]} : vector<1x256xf32> to vector<1x128xf32>
    %123 = vector.extract_strided_slice %119 {offsets = [0, 0], sizes = [1, 128], strides = [1, 1]} : vector<1x256xf32> to vector<1x128xf32>
    %124 = tpu.concatenate %120, %121, %122, %123 in 1 : vector<1x128xf32>, vector<1x128xf32>, vector<1x128xf32>, vector<1x128xf32> -> vector<1x512xf32>
    %c7_69 = arith.constant 7 : index
    %c0_70 = arith.constant 0 : index
    %125 = vector.load %arg10[%c7_69, %c0_70] : memref<18x512xf32, #tpu.memory_space<vmem>>, vector<1x512xf32>
    tpu.vector_store %arg10[%c7_69, %c0_70], %124 {strides = array<i32>} : memref<18x512xf32, #tpu.memory_space<vmem>>, vector<1x512xf32>,
    %126 = vector.extract_strided_slice %116 {offsets = [0, 64], sizes = [1, 128], strides = [1, 1]} : vector<1x256xf32> to vector<1x128xf32>
    %127 = vector.extract_strided_slice %117 {offsets = [0, 64], sizes = [1, 128], strides = [1, 1]} : vector<1x256xf32> to vector<1x128xf32>
    %128 = vector.extract_strided_slice %118 {offsets = [0, 64], sizes = [1, 128], strides = [1, 1]} : vector<1x256xf32> to vector<1x128xf32>
    %129 = vector.extract_strided_slice %119 {offsets = [0, 64], sizes = [1, 128], strides = [1, 1]} : vector<1x256xf32> to vector<1x128xf32>
    %130 = tpu.concatenate %126, %127, %128, %129 in 1 : vector<1x128xf32>, vector<1x128xf32>, vector<1x128xf32>, vector<1x128xf32> -> vector<1x512xf32>
    %c9_71 = arith.constant 9 : index
    %c0_72 = arith.constant 0 : index
    %131 = vector.load %arg10[%c9_71, %c0_72] : memref<18x512xf32, #tpu.memory_space<vmem>>, vector<1x512xf32>
    tpu.vector_store %arg10[%c9_71, %c0_72], %130 {strides = array<i32>} : memref<18x512xf32, #tpu.memory_space<vmem>>, vector<1x512xf32>,
    %132 = vector.extract_strided_slice %116 {offsets = [0, 128], sizes = [1, 128], strides = [1, 1]} : vector<1x256xf32> to vector<1x128xf32>
    %133 = vector.extract_strided_slice %117 {offsets = [0, 128], sizes = [1, 128], strides = [1, 1]} : vector<1x256xf32> to vector<1x128xf32>
    %134 = vector.extract_strided_slice %118 {offsets = [0, 128], sizes = [1, 128], strides = [1, 1]} : vector<1x256xf32> to vector<1x128xf32>
    %135 = vector.extract_strided_slice %119 {offsets = [0, 128], sizes = [1, 128], strides = [1, 1]} : vector<1x256xf32> to vector<1x128xf32>
    %136 = tpu.concatenate %132, %133, %134, %135 in 1 : vector<1x128xf32>, vector<1x128xf32>, vector<1x128xf32>, vector<1x128xf32> -> vector<1x512xf32>
    %c11_73 = arith.constant 11 : index
    %c0_74 = arith.constant 0 : index
    %137 = vector.load %arg10[%c11_73, %c0_74] : memref<18x512xf32, #tpu.memory_space<vmem>>, vector<1x512xf32>
    tpu.vector_store %arg10[%c11_73, %c0_74], %136 {strides = array<i32>} : memref<18x512xf32, #tpu.memory_space<vmem>>, vector<1x512xf32>,
    %c12_75 = arith.constant 12 : index
    %c0_76 = arith.constant 0 : index
    %138 = vector.load %arg9[%c12_75, %c0_76] : memref<16x256xf32, #tpu.memory_space<vmem>>, vector<1x256xf32>
    %c13_77 = arith.constant 13 : index
    %c0_78 = arith.constant 0 : index
    %139 = vector.load %arg9[%c13_77, %c0_78] : memref<16x256xf32, #tpu.memory_space<vmem>>, vector<1x256xf32>
    %c14_79 = arith.constant 14 : index
    %c0_80 = arith.constant 0 : index
    %140 = vector.load %arg9[%c14_79, %c0_80] : memref<16x256xf32, #tpu.memory_space<vmem>>, vector<1x256xf32>
    %c15 = arith.constant 15 : index
    %c0_81 = arith.constant 0 : index
    %141 = vector.load %arg9[%c15, %c0_81] : memref<16x256xf32, #tpu.memory_space<vmem>>, vector<1x256xf32>
    %142 = vector.extract_strided_slice %138 {offsets = [0, 0], sizes = [1, 128], strides = [1, 1]} : vector<1x256xf32> to vector<1x128xf32>
    %143 = vector.extract_strided_slice %139 {offsets = [0, 0], sizes = [1, 128], strides = [1, 1]} : vector<1x256xf32> to vector<1x128xf32>
    %144 = vector.extract_strided_slice %140 {offsets = [0, 0], sizes = [1, 128], strides = [1, 1]} : vector<1x256xf32> to vector<1x128xf32>
    %145 = vector.extract_strided_slice %141 {offsets = [0, 0], sizes = [1, 128], strides = [1, 1]} : vector<1x256xf32> to vector<1x128xf32>
    %146 = tpu.concatenate %142, %143, %144, %145 in 1 : vector<1x128xf32>, vector<1x128xf32>, vector<1x128xf32>, vector<1x128xf32> -> vector<1x512xf32>
    %c13_82 = arith.constant 13 : index
    %c0_83 = arith.constant 0 : index
    %147 = vector.load %arg10[%c13_82, %c0_83] : memref<18x512xf32, #tpu.memory_space<vmem>>, vector<1x512xf32>
    tpu.vector_store %arg10[%c13_82, %c0_83], %146 {strides = array<i32>} : memref<18x512xf32, #tpu.memory_space<vmem>>, vector<1x512xf32>,
    %148 = vector.extract_strided_slice %138 {offsets = [0, 64], sizes = [1, 128], strides = [1, 1]} : vector<1x256xf32> to vector<1x128xf32>
    %149 = vector.extract_strided_slice %139 {offsets = [0, 64], sizes = [1, 128], strides = [1, 1]} : vector<1x256xf32> to vector<1x128xf32>
    %150 = vector.extract_strided_slice %140 {offsets = [0, 64], sizes = [1, 128], strides = [1, 1]} : vector<1x256xf32> to vector<1x128xf32>
    %151 = vector.extract_strided_slice %141 {offsets = [0, 64], sizes = [1, 128], strides = [1, 1]} : vector<1x256xf32> to vector<1x128xf32>
    %152 = tpu.concatenate %148, %149, %150, %151 in 1 : vector<1x128xf32>, vector<1x128xf32>, vector<1x128xf32>, vector<1x128xf32> -> vector<1x512xf32>
    %c15_84 = arith.constant 15 : index
    %c0_85 = arith.constant 0 : index
    %153 = vector.load %arg10[%c15_84, %c0_85] : memref<18x512xf32, #tpu.memory_space<vmem>>, vector<1x512xf32>
    tpu.vector_store %arg10[%c15_84, %c0_85], %152 {strides = array<i32>} : memref<18x512xf32, #tpu.memory_space<vmem>>, vector<1x512xf32>,
    %154 = vector.extract_strided_slice %138 {offsets = [0, 128], sizes = [1, 128], strides = [1, 1]} : vector<1x256xf32> to vector<1x128xf32>
    %155 = vector.extract_strided_slice %139 {offsets = [0, 128], sizes = [1, 128], strides = [1, 1]} : vector<1x256xf32> to vector<1x128xf32>
    %156 = vector.extract_strided_slice %140 {offsets = [0, 128], sizes = [1, 128], strides = [1, 1]} : vector<1x256xf32> to vector<1x128xf32>
    %157 = vector.extract_strided_slice %141 {offsets = [0, 128], sizes = [1, 128], strides = [1, 1]} : vector<1x256xf32> to vector<1x128xf32>
    %158 = tpu.concatenate %154, %155, %156, %157 in 1 : vector<1x128xf32>, vector<1x128xf32>, vector<1x128xf32>, vector<1x128xf32> -> vector<1x512xf32>
    %c17 = arith.constant 17 : index
    %c0_86 = arith.constant 0 : index
    %159 = vector.load %arg10[%c17, %c0_86] : memref<18x512xf32, #tpu.memory_space<vmem>>, vector<1x512xf32>
    tpu.vector_store %arg10[%c17, %c0_86], %158 {strides = array<i32>} : memref<18x512xf32, #tpu.memory_space<vmem>>, vector<1x512xf32>,
    %c0_87 = arith.constant 0 : index
    %c0_88 = arith.constant 0 : index
    %160 = vector.load %arg10[%c0_87, %c0_88] : memref<18x512xf32, #tpu.memory_space<vmem>>, vector<18x512xf32>
    %161 = arith.truncf %160 : vector<18x512xf32> to vector<18x512xbf16>
    %c0_89 = arith.constant 0 : index
    %c0_90 = arith.constant 0 : index
    %162 = vector.load %arg3[%c0_89, %c0_90] : memref<512x64xbf16, #tpu.memory_space<vmem>>, vector<512x64xbf16>
    %cst_91 = arith.constant dense<0.000000e+00> : vector<18x64xf32>
    %163 = tpu.matmul %161, %162, %cst_91 {dimension_numbers = #tpu.dot_dimension_numbers<[1], [0], [0], [1], [0, 0, 1, 1], [], []>} : vector<18x512xbf16>, vector<512x64xbf16>, vector<18x64xf32> -> vector<18x64xf32>
    %164 = vector.broadcast %1 : vector<1x64xf32> to vector<18x64xf32>
    %165 = arith.addf %163, %164 : vector<18x64xf32>
    %cst_92 = arith.constant 0.000000e+00 : f32
    %166 = vector.broadcast %cst_92 : f32 to vector<18x64xf32>
    %167 = arith.maximumf %165, %166 : vector<18x64xf32>
    %cst_93 = arith.constant 0.000000e+00 : f32
    %168 = vector.broadcast %cst_93 : f32 to vector<2x64xf32>
    %169 = vector.extract_strided_slice %167 {offsets = [0, 0], sizes = [2, 64], strides = [1, 1]} : vector<18x64xf32> to vector<2x64xf32>
    %170 = arith.truncf %169 : vector<2x64xf32> to vector<2x64xbf16>
    %c0_94 = arith.constant 0 : index
    %c0_95 = arith.constant 0 : index
    %171 = vector.load %arg4[%c0_94, %c0_95] : memref<576x64xbf16, #tpu.memory_space<vmem>>, vector<64x64xbf16>
    %cst_96 = arith.constant dense<0.000000e+00> : vector<2x64xf32>
    %172 = tpu.matmul %170, %171, %cst_96 {dimension_numbers = #tpu.dot_dimension_numbers<[1], [0], [0], [1], [0, 0, 1, 1], [], []>} : vector<2x64xbf16>, vector<64x64xbf16>, vector<2x64xf32> -> vector<2x64xf32>
    %173 = arith.addf %168, %172 : vector<2x64xf32>
    %174 = vector.extract_strided_slice %167 {offsets = [2, 0], sizes = [2, 64], strides = [1, 1]} : vector<18x64xf32> to vector<2x64xf32>
    %175 = arith.truncf %174 : vector<2x64xf32> to vector<2x64xbf16>
    %c64_97 = arith.constant 64 : index
    %c0_98 = arith.constant 0 : index
    %176 = vector.load %arg4[%c64_97, %c0_98] : memref<576x64xbf16, #tpu.memory_space<vmem>>, vector<64x64xbf16>
    %cst_99 = arith.constant dense<0.000000e+00> : vector<2x64xf32>
    %177 = tpu.matmul %175, %176, %cst_99 {dimension_numbers = #tpu.dot_dimension_numbers<[1], [0], [0], [1], [0, 0, 1, 1], [], []>} : vector<2x64xbf16>, vector<64x64xbf16>, vector<2x64xf32> -> vector<2x64xf32>
    %178 = arith.addf %173, %177 : vector<2x64xf32>
    %179 = vector.extract_strided_slice %167 {offsets = [4, 0], sizes = [2, 64], strides = [1, 1]} : vector<18x64xf32> to vector<2x64xf32>
    %180 = arith.truncf %179 : vector<2x64xf32> to vector<2x64xbf16>
    %c128_100 = arith.constant 128 : index
    %c0_101 = arith.constant 0 : index
    %181 = vector.load %arg4[%c128_100, %c0_101] : memref<576x64xbf16, #tpu.memory_space<vmem>>, vector<64x64xbf16>
    %cst_102 = arith.constant dense<0.000000e+00> : vector<2x64xf32>
    %182 = tpu.matmul %180, %181, %cst_102 {dimension_numbers = #tpu.dot_dimension_numbers<[1], [0], [0], [1], [0, 0, 1, 1], [], []>} : vector<2x64xbf16>, vector<64x64xbf16>, vector<2x64xf32> -> vector<2x64xf32>
    %183 = arith.addf %178, %182 : vector<2x64xf32>
    %184 = vector.extract_strided_slice %167 {offsets = [6, 0], sizes = [2, 64], strides = [1, 1]} : vector<18x64xf32> to vector<2x64xf32>
    %185 = arith.truncf %184 : vector<2x64xf32> to vector<2x64xbf16>
    %c192_103 = arith.constant 192 : index
    %c0_104 = arith.constant 0 : index
    %186 = vector.load %arg4[%c192_103, %c0_104] : memref<576x64xbf16, #tpu.memory_space<vmem>>, vector<64x64xbf16>
    %cst_105 = arith.constant dense<0.000000e+00> : vector<2x64xf32>
    %187 = tpu.matmul %185, %186, %cst_105 {dimension_numbers = #tpu.dot_dimension_numbers<[1], [0], [0], [1], [0, 0, 1, 1], [], []>} : vector<2x64xbf16>, vector<64x64xbf16>, vector<2x64xf32> -> vector<2x64xf32>
    %188 = arith.addf %183, %187 : vector<2x64xf32>
    %189 = vector.extract_strided_slice %167 {offsets = [8, 0], sizes = [2, 64], strides = [1, 1]} : vector<18x64xf32> to vector<2x64xf32>
    %190 = arith.truncf %189 : vector<2x64xf32> to vector<2x64xbf16>
    %c256_106 = arith.constant 256 : index
    %c0_107 = arith.constant 0 : index
    %191 = vector.load %arg4[%c256_106, %c0_107] : memref<576x64xbf16, #tpu.memory_space<vmem>>, vector<64x64xbf16>
    %cst_108 = arith.constant dense<0.000000e+00> : vector<2x64xf32>
    %192 = tpu.matmul %190, %191, %cst_108 {dimension_numbers = #tpu.dot_dimension_numbers<[1], [0], [0], [1], [0, 0, 1, 1], [], []>} : vector<2x64xbf16>, vector<64x64xbf16>, vector<2x64xf32> -> vector<2x64xf32>
    %193 = arith.addf %188, %192 : vector<2x64xf32>
    %194 = vector.extract_strided_slice %167 {offsets = [10, 0], sizes = [2, 64], strides = [1, 1]} : vector<18x64xf32> to vector<2x64xf32>
    %195 = arith.truncf %194 : vector<2x64xf32> to vector<2x64xbf16>
    %c320 = arith.constant 320 : index
    %c0_109 = arith.constant 0 : index
    %196 = vector.load %arg4[%c320, %c0_109] : memref<576x64xbf16, #tpu.memory_space<vmem>>, vector<64x64xbf16>
    %cst_110 = arith.constant dense<0.000000e+00> : vector<2x64xf32>
    %197 = tpu.matmul %195, %196, %cst_110 {dimension_numbers = #tpu.dot_dimension_numbers<[1], [0], [0], [1], [0, 0, 1, 1], [], []>} : vector<2x64xbf16>, vector<64x64xbf16>, vector<2x64xf32> -> vector<2x64xf32>
    %198 = arith.addf %193, %197 : vector<2x64xf32>
    %199 = vector.extract_strided_slice %167 {offsets = [12, 0], sizes = [2, 64], strides = [1, 1]} : vector<18x64xf32> to vector<2x64xf32>
    %200 = arith.truncf %199 : vector<2x64xf32> to vector<2x64xbf16>
    %c384_111 = arith.constant 384 : index
    %c0_112 = arith.constant 0 : index
    %201 = vector.load %arg4[%c384_111, %c0_112] : memref<576x64xbf16, #tpu.memory_space<vmem>>, vector<64x64xbf16>
    %cst_113 = arith.constant dense<0.000000e+00> : vector<2x64xf32>
    %202 = tpu.matmul %200, %201, %cst_113 {dimension_numbers = #tpu.dot_dimension_numbers<[1], [0], [0], [1], [0, 0, 1, 1], [], []>} : vector<2x64xbf16>, vector<64x64xbf16>, vector<2x64xf32> -> vector<2x64xf32>
    %203 = arith.addf %198, %202 : vector<2x64xf32>
    %204 = vector.extract_strided_slice %167 {offsets = [14, 0], sizes = [2, 64], strides = [1, 1]} : vector<18x64xf32> to vector<2x64xf32>
    %205 = arith.truncf %204 : vector<2x64xf32> to vector<2x64xbf16>
    %c448 = arith.constant 448 : index
    %c0_114 = arith.constant 0 : index
    %206 = vector.load %arg4[%c448, %c0_114] : memref<576x64xbf16, #tpu.memory_space<vmem>>, vector<64x64xbf16>
    %cst_115 = arith.constant dense<0.000000e+00> : vector<2x64xf32>
    %207 = tpu.matmul %205, %206, %cst_115 {dimension_numbers = #tpu.dot_dimension_numbers<[1], [0], [0], [1], [0, 0, 1, 1], [], []>} : vector<2x64xbf16>, vector<64x64xbf16>, vector<2x64xf32> -> vector<2x64xf32>
    %208 = arith.addf %203, %207 : vector<2x64xf32>
    %209 = vector.extract_strided_slice %167 {offsets = [16, 0], sizes = [2, 64], strides = [1, 1]} : vector<18x64xf32> to vector<2x64xf32>
    %210 = arith.truncf %209 : vector<2x64xf32> to vector<2x64xbf16>
    %c512 = arith.constant 512 : index
    %c0_116 = arith.constant 0 : index
    %211 = vector.load %arg4[%c512, %c0_116] : memref<576x64xbf16, #tpu.memory_space<vmem>>, vector<64x64xbf16>
    %cst_117 = arith.constant dense<0.000000e+00> : vector<2x64xf32>
    %212 = tpu.matmul %210, %211, %cst_117 {dimension_numbers = #tpu.dot_dimension_numbers<[1], [0], [0], [1], [0, 0, 1, 1], [], []>} : vector<2x64xbf16>, vector<64x64xbf16>, vector<2x64xf32> -> vector<2x64xf32>
    %213 = arith.addf %208, %212 : vector<2x64xf32>
    %214 = vector.broadcast %2 : vector<1x64xf32> to vector<2x64xf32>
    %215 = arith.addf %213, %214 : vector<2x64xf32>
    %cst_118 = arith.constant 0.000000e+00 : f32
    %216 = vector.broadcast %cst_118 : f32 to vector<2x64xf32>
    %217 = arith.maximumf %215, %216 : vector<2x64xf32>
    %218 = arith.truncf %217 : vector<2x64xf32> to vector<2x64xbf16>
    %c0_119 = arith.constant 0 : index
    %c0_120 = arith.constant 0 : index
    %219 = vector.load %arg5[%c0_119, %c0_120] : memref<64x1024xbf16, #tpu.memory_space<vmem>>, vector<64x1024xbf16>
    %cst_121 = arith.constant dense<0.000000e+00> : vector<2x1024xf32>
    %220 = tpu.matmul %218, %219, %cst_121 {dimension_numbers = #tpu.dot_dimension_numbers<[1], [0], [0], [1], [0, 0, 1, 1], [], []>} : vector<2x64xbf16>, vector<64x1024xbf16>, vector<2x1024xf32> -> vector<2x1024xf32>
    %221 = vector.broadcast %3 : vector<1x1024xf32> to vector<2x1024xf32>
    %222 = arith.addf %220, %221 : vector<2x1024xf32>
    %cst_122 = arith.constant 0.000000e+00 : f32
    %223 = vector.broadcast %cst_122 : f32 to vector<2x1024xf32>
    %224 = arith.maximumf %222, %223 : vector<2x1024xf32>
    %225 = arith.truncf %224 : vector<2x1024xf32> to vector<2x1024xbf16>
    %c0_123 = arith.constant 0 : index
    %c0_124 = arith.constant 0 : index
    %226 = vector.load %arg6[%c0_123, %c0_124] : memref<1024x128xbf16, #tpu.memory_space<vmem>>, vector<1024x128xbf16>
    %cst_125 = arith.constant dense<0.000000e+00> : vector<2x128xf32>
    %227 = tpu.matmul %225, %226, %cst_125 {dimension_numbers = #tpu.dot_dimension_numbers<[1], [0], [0], [1], [0, 0, 1, 1], [], []>} : vector<2x1024xbf16>, vector<1024x128xbf16>, vector<2x128xf32> -> vector<2x128xf32>
    %228 = vector.broadcast %4 : vector<1x128xf32> to vector<2x128xf32>
    %229 = arith.addf %227, %228 : vector<2x128xf32>
    %230 = vector.extract_strided_slice %229 {offsets = [0, 0], sizes = [2, 6], strides = [1, 1]} : vector<2x128xf32> to vector<2x6xf32>
    %231 = vector.extract_strided_slice %229 {offsets = [0, 6], sizes = [2, 1], strides = [1, 1]} : vector<2x128xf32> to vector<2x1xf32>
    %cst_126 = arith.constant dense<0.000000e+00> : vector<2xf32>
    %232 = vector.multi_reduction <add>, %230, %cst_126 [1] : vector<2x6xf32> to vector<2xf32>
    %233 = vector.shape_cast %232 : vector<2xf32> to vector<2x1xf32>
    %cst_127 = arith.constant dense<0.000000e+00> : vector<1xf32>
    %234 = vector.multi_reduction <add>, %233, %cst_127 [0] : vector<2x1xf32> to vector<1xf32>
    %235 = vector.shape_cast %234 : vector<1xf32> to vector<1x1xf32>
    %cst_128 = arith.constant 0.0833333358 : f32
    %236 = vector.broadcast %cst_128 : f32 to vector<1x1xf32>
    %237 = arith.mulf %235, %236 : vector<1x1xf32>
    %238 = vector.broadcast %231 : vector<2x1xf32> to vector<2x128xf32>
    %239 = arith.addf %229, %238 : vector<2x128xf32>
    %240 = vector.broadcast %237 : vector<1x1xf32> to vector<2x128xf32>
    %241 = arith.subf %239, %240 : vector<2x128xf32>
    %c0_129 = arith.constant 0 : index
    %c0_130 = arith.constant 0 : index
    %242 = vector.load %arg8[%c0_129, %c0_130] : memref<2x128xf32, #tpu.memory_space<vmem>>, vector<2x128xf32>
    tpu.vector_store %arg8[%c0_129, %c0_130], %241 {strides = array<i32>} : memref<2x128xf32, #tpu.memory_space<vmem>>, vector<2x128xf32>,
    return
  }
  func.func @transform_0(%arg0: i32) -> (i32, i32) {
    %c0_i32 = arith.constant 0 : i32
    %c0_i32_0 = arith.constant 0 : i32
    %c0_i32_1 = arith.constant 0 : i32
    return %c0_i32, %c0_i32_0 : i32, i32
  }
  func.func @transform_1(%arg0: i32) -> (i32, i32) {
    %c0_i32 = arith.constant 0 : i32
    %c0_i32_0 = arith.constant 0 : i32
    %c0_i32_1 = arith.constant 0 : i32
    return %c0_i32, %c0_i32_0 : i32, i32
  }
  func.func @transform_2(%arg0: i32) -> (i32, i32) {
    %c0_i32 = arith.constant 0 : i32
    %c0_i32_0 = arith.constant 0 : i32
    %c0_i32_1 = arith.constant 0 : i32
    return %c0_i32, %c0_i32_0 : i32, i32
  }
  func.func @transform_3(%arg0: i32) -> (i32, i32) {
    %c0_i32 = arith.constant 0 : i32
    %c0_i32_0 = arith.constant 0 : i32
    %c0_i32_1 = arith.constant 0 : i32
    return %c0_i32, %c0_i32_0 : i32, i32
  }
  func.func @transform_4(%arg0: i32) -> (i32, i32) {
    %c0_i32 = arith.constant 0 : i32
    %c0_i32_0 = arith.constant 0 : i32
    %c0_i32_1 = arith.constant 0 : i32
    return %c0_i32, %c0_i32_0 : i32, i32
  }
  func.func @transform_5(%arg0: i32) -> (i32, i32) {
    %c0_i32 = arith.constant 0 : i32
    %c0_i32_0 = arith.constant 0 : i32
    %c0_i32_1 = arith.constant 0 : i32
    return %c0_i32, %c0_i32_0 : i32, i32
  }
  func.func @transform_6(%arg0: i32) -> (i32, i32) {
    %c0_i32 = arith.constant 0 : i32
    %c0_i32_0 = arith.constant 0 : i32
    %c0_i32_1 = arith.constant 0 : i32
    return %c0_i32, %c0_i32_0 : i32, i32
  }
  func.func @transform_7(%arg0: i32) -> (i32, i32) {
    %c0_i32 = arith.constant 0 : i32
    %c0_i32_0 = arith.constant 0 : i32
    %c0_i32_1 = arith.constant 0 : i32
    return %c0_i32, %c0_i32_0 : i32, i32
  }
}

</mosaic_0001>

<llo_original>
// kernel: dueling_cnn_dqn_forward.1
$region0: #{dueling_cnn_dqn_forward.1}
  #allocation0 [shape = 'u32[]', space=smem, size = 0x4, offset = 0x4, fixed_abs, tag = 'smem constant byte address 0x4 - core index']
  #allocation1 [shape = 'u32[144,128]{1,0:T(1,128)}', space=vmem, size = 0x12000, scoped, tag = 'internal scratch']
  #allocation2 [shape = 'f32[16,256]{1,0:T(8,128)}', space=vmem, size = 0x4000, scoped, tag = 'scratch operand']
  #allocation3 [shape = 'f32[18,512]{1,0:T(8,128)}', space=vmem, size = 0xc000, scoped, tag = 'scratch operand']
  %s0 = inlined_call_operand.vmem [shape: bf16[128,256], index: 0, kind: input, shape index: {}]
  %s1 = inlined_call_operand.vmem [shape: bf16[256,32], index: 1, kind: input, shape index: {}]
  %s2 = inlined_call_operand.vmem [shape: bf16[512,64], index: 2, kind: input, shape index: {}]
  %s3 = inlined_call_operand.vmem [shape: bf16[576,64], index: 3, kind: input, shape index: {}]
  %s4 = inlined_call_operand.vmem [shape: bf16[64,1024], index: 4, kind: input, shape index: {}]
  %s5 = inlined_call_operand.vmem [shape: bf16[1024,128], index: 5, kind: input, shape index: {}]
  %s6 = inlined_call_operand.vmem [shape: f32[1,1536], index: 6, kind: input, shape index: {}]
  %s7 = inlined_call_operand.hbm [shape: f32[2,128], index: 7, kind: output, shape index: {}]
  %s8 = sld [smem:[#allocation0]]
  $region38: #{dueling_cnn_dqn_forward.1} parent=0
    _
  %s10 = ssub.s32 1, %s8
  %s11 = scalar_select 0, %s10, %s8
  $region1: #{dueling_cnn_dqn_forward.1} parent=0
    #allocation4 [shape = 'u8[1024]{0}', space=vmem, size = 0x400, scoped, tag = 'output window, operand 0, single buffered']
    #allocation5 [shape = 's32[1]{0}', space=sflag, size = 0x4, scoped, tag = 'scoped memory for dueling_cnn_dqn_forward.1']
    %12 = vsyncpa [#allocation5], 0
    // Predicated region
    $region2: #{dueling_cnn_dqn_forward.1} parent=1 // pred_check
      _
    $region3: #{dueling_cnn_dqn_forward.1} parent=1 // pred_check_branch
      %14 = sbr.rel (0) target = $region5
    $region4: #{dueling_cnn_dqn_forward.1} parent=1 // pred_region
      _
    $region5: #{dueling_cnn_dqn_forward.1} parent=1 // pred_fallthru
      _
    // Predicated region
    $region6: #{dueling_cnn_dqn_forward.1} parent=1 // pred_check
      _
    $region7: #{dueling_cnn_dqn_forward.1} parent=1 // pred_check_branch
      %16 = sbr.rel (0) target = $region9
    $region8: #{dueling_cnn_dqn_forward.1} parent=1 // pred_region
      _
    $region9: #{dueling_cnn_dqn_forward.1} parent=1 // pred_fallthru
      _
    // Predicated region
    $region10: #{dueling_cnn_dqn_forward.1} parent=1 // pred_check
      _
    $region11: #{dueling_cnn_dqn_forward.1} parent=1 // pred_check_branch
      %18 = sbr.rel (0) target = $region13
    $region12: #{dueling_cnn_dqn_forward.1} parent=1 // pred_region
      _
    $region13: #{dueling_cnn_dqn_forward.1} parent=1 // pred_fallthru
      _
    // Predicated region
    $region14: #{dueling_cnn_dqn_forward.1} parent=1 // pred_check
      _
    $region15: #{dueling_cnn_dqn_forward.1} parent=1 // pred_check_branch
      %20 = sbr.rel (0) target = $region17
    $region16: #{dueling_cnn_dqn_forward.1} parent=1 // pred_region
      _
    $region17: #{dueling_cnn_dqn_forward.1} parent=1 // pred_fallthru
      _
    // Predicated region
    $region18: #{dueling_cnn_dqn_forward.1} parent=1 // pred_check
      _
    $region19: #{dueling_cnn_dqn_forward.1} parent=1 // pred_check_branch
      %22 = sbr.rel (0) target = $region21
    $region20: #{dueling_cnn_dqn_forward.1} parent=1 // pred_region
      _
    $region21: #{dueling_cnn_dqn_forward.1} parent=1 // pred_fallthru
      _
    // Predicated region
    $region22: #{dueling_cnn_dqn_forward.1} parent=1 // pred_check
      _
    $region23: #{dueling_cnn_dqn_forward.1} parent=1 // pred_check_branch
      %24 = sbr.rel (0) target = $region25
    $region24: #{dueling_cnn_dqn_forward.1} parent=1 // pred_region
      _
    $region25: #{dueling_cnn_dqn_forward.1} parent=1 // pred_fallthru
      _
    // Predicated region
    $region26: #{dueling_cnn_dqn_forward.1} parent=1 // pred_check
      _
    $region27: #{dueling_cnn_dqn_forward.1} parent=1 // pred_check_branch
      %26 = sbr.rel (0) target = $region29
    $region28: #{dueling_cnn_dqn_forward.1} parent=1 // pred_region
      _
    $region29: #{dueling_cnn_dqn_forward.1} parent=1 // pred_fallthru
      _
    %v28 = vld [vmem:[%s6] sm:$0x1]
    %v29 = vld [vmem:[%s6 + $0x1] sm:$0x1]
    %v30 = vld [vmem:[%s6 + $0x2] sm:$0x1]
    %v31 = vld [vmem:[%s6 + $0x3] sm:$0xff]
    %v32 = vld [vmem:[%s6 + $0xb] sm:$0x1]
    %v33 = vld [vmem:[%s0] sm:$0xff]
    %v34 = vld [vmem:[%s0 + $0x8] sm:$0xff]
    %v35 = vld [vmem:[%s0 + $0x10] sm:$0xff]
    %v36 = vld [vmem:[%s0 + $0x18] sm:$0xff]
    %v37 = vld [vmem:[%s0 + $0x20] sm:$0xff]
    %v38 = vld [vmem:[%s0 + $0x28] sm:$0xff]
    %v39 = vld [vmem:[%s0 + $0x30] sm:$0xff]
    %v40 = vld [vmem:[%s0 + $0x38] sm:$0xff]
    %v41 = vld [vmem:[%s0 + $0x40] sm:$0xff]
    %v42 = vld [vmem:[%s0 + $0x48] sm:$0xff]
    %v43 = vld [vmem:[%s0 + $0x50] sm:$0xff]
    %v44 = vld [vmem:[%s0 + $0x58] sm:$0xff]
    %v45 = vld [vmem:[%s0 + $0x60] sm:$0xff]
    %v46 = vld [vmem:[%s0 + $0x68] sm:$0xff]
    %v47 = vld [vmem:[%s0 + $0x70] sm:$0xff]
    %v48 = vld [vmem:[%s0 + $0x78] sm:$0xff]
    %v49 = vld [vmem:[%s1] sm:$0xf]
    %v50 = vld [vmem:[%s1 + $0x4] sm:$0xf]
    %v51 = vld [vmem:[%s1 + $0x8] sm:$0xf]
    %v52 = vld [vmem:[%s1 + $0xc] sm:$0xf]
    %v53 = vld [vmem:[%s1 + $0x10] sm:$0xf]
    %v54 = vld [vmem:[%s1 + $0x14] sm:$0xf]
    %v55 = vld [vmem:[%s1 + $0x18] sm:$0xf]
    %v56 = vld [vmem:[%s1 + $0x1c] sm:$0xf]
    %v57 = vld [vmem:[%s1 + $0x20] sm:$0xf]
    %v58 = vld [vmem:[%s1 + $0x24] sm:$0xf]
    %v59 = vld [vmem:[%s1 + $0x28] sm:$0xf]
    %v60 = vld [vmem:[%s1 + $0x2c] sm:$0xf]
    %v61 = vld [vmem:[%s1 + $0x30] sm:$0xf]
    %v62 = vld [vmem:[%s1 + $0x34] sm:$0xf]
    %v63 = vld [vmem:[%s1 + $0x38] sm:$0xf]
    %v64 = vld [vmem:[%s1 + $0x3c] sm:$0xf]
    %v65 = vld [vmem:[%s1 + $0x40] sm:$0xf]
    %v66 = vld [vmem:[%s1 + $0x44] sm:$0xf]
    %v67 = vld [vmem:[%s1 + $0x48] sm:$0xf]
    %v68 = vld [vmem:[%s1 + $0x4c] sm:$0xf]
    %v69 = vld [vmem:[%s1 + $0x50] sm:$0xf]
    %v70 = vld [vmem:[%s1 + $0x54] sm:$0xf]
    %v71 = vld [vmem:[%s1 + $0x58] sm:$0xf]
    %v72 = vld [vmem:[%s1 + $0x5c] sm:$0xf]
    %v73 = vld [vmem:[%s1 + $0x60] sm:$0xf]
    %v74 = vld [vmem:[%s1 + $0x64] sm:$0xf]
    %v75 = vld [vmem:[%s1 + $0x68] sm:$0xf]
    %v76 = vld [vmem:[%s1 + $0x6c] sm:$0xf]
    %v77 = vld [vmem:[%s1 + $0x70] sm:$0xf]
    %v78 = vld [vmem:[%s1 + $0x74] sm:$0xf]
    %v79 = vld [vmem:[%s1 + $0x78] sm:$0xf]
    %v80 = vld [vmem:[%s1 + $0x7c] sm:$0xf]
    %v82 = vlaneseq
    %v83 = vshrl.u32 %v82, 7
    %v84 = vsub.s32 0, %v83
    %v85 = vrot.slane %v28, %v84
    %v103 = vunpack.c.l.b16 %v33
    %v104 = vunpack.c.h.b16 %v33
    %v105 = vunpack.c.l.b16 %v34
    %v106 = vunpack.c.h.b16 %v34
    %v107 = vunpack.c.l.b16 %v35
    %v108 = vunpack.c.h.b16 %v35
    %v109 = vunpack.c.l.b16 %v36
    %v110 = vunpack.c.h.b16 %v36
    %v111 = vunpack.c.l.b16 %v37
    %v112 = vunpack.c.h.b16 %v37
    %v113 = vunpack.c.l.b16 %v38
    %v114 = vunpack.c.h.b16 %v38
    %v115 = vunpack.c.l.b16 %v39
    %v116 = vunpack.c.h.b16 %v39
    %v117 = vunpack.c.l.b16 %v40
    %v118 = vunpack.c.h.b16 %v40
    %v119 = vunpack.c.l.b16 %v41
    %v120 = vunpack.c.h.b16 %v41
    %v121 = vunpack.c.l.b16 %v42
    %v122 = vunpack.c.h.b16 %v42
    %v123 = vunpack.c.l.b16 %v43
    %v124 = vunpack.c.h.b16 %v43
    %v125 = vunpack.c.l.b16 %v44
    %v126 = vunpack.c.h.b16 %v44
    %v127 = vunpack.c.l.b16 %v45
    %v128 = vunpack.c.h.b16 %v45
    %v129 = vunpack.c.l.b16 %v46
    %v130 = vunpack.c.h.b16 %v46
    %v131 = vunpack.c.l.b16 %v47
    %v132 = vunpack.c.h.b16 %v47
    %v133 = vunpack.c.l.b16 %v48
    %v134 = vunpack.c.h.b16 %v48
    %v135 = vpack.c.b16 %v105, %v103
    %v136 = vpack.c.b16 %v106, %v104
    %v137 = vpack.c.b16 %v109, %v107
    %v138 = vpack.c.b16 %v110, %v108
    %v139 = vpack.c.b16 %v113, %v111
    %v140 = vpack.c.b16 %v114, %v112
    %v141 = vpack.c.b16 %v117, %v115
    %v142 = vpack.c.b16 %v118, %v116
    %v143 = vpack.c.b16 %v121, %v119
    %v144 = vpack.c.b16 %v122, %v120
    %v145 = vpack.c.b16 %v125, %v123
    %v146 = vpack.c.b16 %v126, %v124
    %v147 = vpack.c.b16 %v129, %v127
    %v148 = vpack.c.b16 %v130, %v128
    %v149 = vpack.c.b16 %v133, %v131
    %v150 = vpack.c.b16 %v134, %v132
    %v199 = vunpack.c.l.b16 %v49
    %v200 = vunpack.c.l.b16 %v50
    %v201 = vunpack.c.l.b16 %v51
    %v202 = vunpack.c.l.b16 %v52
    %v203 = vunpack.c.l.b16 %v53
    %v204 = vunpack.c.l.b16 %v54
    %v205 = vunpack.c.l.b16 %v55
    %v206 = vunpack.c.l.b16 %v56
    %v207 = vunpack.c.l.b16 %v57
    %v208 = vunpack.c.l.b16 %v58
    %v209 = vunpack.c.l.b16 %v59
    %v210 = vunpack.c.l.b16 %v60
    %v211 = vunpack.c.l.b16 %v61
    %v212 = vunpack.c.l.b16 %v62
    %v213 = vunpack.c.l.b16 %v63
    %v214 = vunpack.c.l.b16 %v64
    %v215 = vunpack.c.l.b16 %v65
    %v216 = vunpack.c.l.b16 %v66
    %v217 = vunpack.c.l.b16 %v67
    %v218 = vunpack.c.l.b16 %v68
    %v219 = vunpack.c.l.b16 %v69
    %v220 = vunpack.c.l.b16 %v70
    %v221 = vunpack.c.l.b16 %v71
    %v222 = vunpack.c.l.b16 %v72
    %v223 = vunpack.c.l.b16 %v73
    %v224 = vunpack.c.l.b16 %v74
    %v225 = vunpack.c.l.b16 %v75
    %v226 = vunpack.c.l.b16 %v76
    %v227 = vunpack.c.l.b16 %v77
    %v228 = vunpack.c.l.b16 %v78
    %v229 = vunpack.c.l.b16 %v79
    %v230 = vunpack.c.l.b16 %v80
    %v231 = vpack.c.b16 %v200, %v199
    %v232 = vpack.c.b16 %v202, %v201
    %v233 = vpack.c.b16 %v204, %v203
    %v234 = vpack.c.b16 %v206, %v205
    %v235 = vpack.c.b16 %v208, %v207
    %v236 = vpack.c.b16 %v210, %v209
    %v237 = vpack.c.b16 %v212, %v211
    %v238 = vpack.c.b16 %v214, %v213
    %v239 = vpack.c.b16 %v216, %v215
    %v240 = vpack.c.b16 %v218, %v217
    %v241 = vpack.c.b16 %v220, %v219
    %v242 = vpack.c.b16 %v222, %v221
    %v243 = vpack.c.b16 %v224, %v223
    %v244 = vpack.c.b16 %v226, %v225
    %v245 = vpack.c.b16 %v228, %v227
    %v246 = vpack.c.b16 %v230, %v229
    %263 = vmatprep.subr.bf16.mxu0 0
    %264 = vmatpush1.bf16.msra.mxu0 %v231
    %265 = vmatprep.subr.bf16.mxu0 0
    %266 = vmatpush1.bf16.msra.mxu0 %v232
    %267 = vmatprep.subr.bf16.mxu0 0
    %268 = vmatpush1.bf16.msra.mxu0 %v233
    %269 = vmatprep.subr.bf16.mxu0 0
    %270 = vmatpush1.bf16.msra.mxu0 %v234
    %271 = vmatprep.subr.bf16.mxu0 0
    %272 = vmatpush1.bf16.msra.mxu0 %v235
    %273 = vmatprep.subr.bf16.mxu0 0
    %274 = vmatpush1.bf16.msra.mxu0 %v236
    %275 = vmatprep.subr.bf16.mxu0 0
    %276 = vmatpush1.bf16.msra.mxu0 %v237
    %277 = vmatprep.subr.bf16.mxu0 0
    %278 = vmatpush1.bf16.msra.mxu0 %v238
    %279 = vmatprep.subr.bf16.mxu0 0
    %280 = vmatpush1.bf16.msra.mxu0 %v239
    %281 = vmatprep.subr.bf16.mxu0 0
    %282 = vmatpush1.bf16.msra.mxu0 %v240
    %283 = vmatprep.subr.bf16.mxu0 0
    %284 = vmatpush1.bf16.msra.mxu0 %v241
    %285 = vmatprep.subr.bf16.mxu0 0
    %286 = vmatpush1.bf16.msra.mxu0 %v242
    %287 = vmatprep.subr.bf16.mxu0 0
    %288 = vmatpush1.bf16.msra.mxu0 %v243
    %289 = vmatprep.subr.bf16.mxu0 0
    %290 = vmatpush1.bf16.msra.mxu0 %v244
    %291 = vmatprep.subr.bf16.mxu0 0
    %292 = vmatpush1.bf16.msra.mxu0 %v245
    %293 = vmatprep.subr.bf16.mxu0 0
    %294 = vmatpush1.bf16.msra.mxu0 %v246
    %295 = vmatprep.mubr.bf16.mxu0 %v136
    %296 = vmatmul.mubr.bf16.gmra.mrb[0].mxu0 %v135
    %v297 = vpop.f32.mrb[0].mxu0
    %v298 = vadd.f32 %v85, %v297
    %v299 = vpop.f32.mrb[0].mxu0
    %v300 = vpop.f32.mrb[0].mxu0
    %v301 = vadd.f32 %v85, %v300
    %v302 = vpop.f32.mrb[0].mxu0
    %303 = vmatprep.mubr.bf16.mxu0 %v138
    %304 = vmatmul.mubr.bf16.gmra.mrb[0].mxu0 %v137
    %v305 = vpop.f32.mrb[0].mxu0
    %v306 = vadd.f32 %v85, %v305
    %v307 = vpop.f32.mrb[0].mxu0
    %v308 = vpop.f32.mrb[0].mxu0
    %v309 = vadd.f32 %v85, %v308
    %v310 = vpop.f32.mrb[0].mxu0
    %311 = vmatprep.mubr.bf16.mxu0 %v140
    %312 = vmatmul.mubr.bf16.gmra.mrb[0].mxu0 %v139
    %v313 = vpop.f32.mrb[0].mxu0
    %v314 = vadd.f32 %v85, %v313
    %v315 = vpop.f32.mrb[0].mxu0
    %v316 = vpop.f32.mrb[0].mxu0
    %v317 = vadd.f32 %v85, %v316
    %v318 = vpop.f32.mrb[0].mxu0
    %319 = vmatprep.mubr.bf16.mxu0 %v142
    %320 = vmatmul.mubr.bf16.gmra.mrb[0].mxu0 %v141
    %v321 = vpop.f32.mrb[0].mxu0
    %v322 = vadd.f32 %v85, %v321
    %v323 = vpop.f32.mrb[0].mxu0
    %v324 = vpop.f32.mrb[0].mxu0
    %v325 = vadd.f32 %v85, %v324
    %v326 = vpop.f32.mrb[0].mxu0
    %327 = vmatprep.mubr.bf16.mxu0 %v144
    %328 = vmatmul.mubr.bf16.gmra.mrb[0].mxu0 %v143
    %v329 = vpop.f32.mrb[0].mxu0
    %v330 = vadd.f32 %v85, %v329
    %v331 = vpop.f32.mrb[0].mxu0
    %v332 = vpop.f32.mrb[0].mxu0
    %v333 = vadd.f32 %v85, %v332
    %v334 = vpop.f32.mrb[0].mxu0
    %335 = vmatprep.mubr.bf16.mxu0 %v146
    %336 = vmatmul.mubr.bf16.gmra.mrb[0].mxu0 %v145
    %v337 = vpop.f32.mrb[0].mxu0
    %v338 = vadd.f32 %v85, %v337
    %v339 = vpop.f32.mrb[0].mxu0
    %v340 = vpop.f32.mrb[0].mxu0
    %v341 = vadd.f32 %v85, %v340
    %v342 = vpop.f32.mrb[0].mxu0
    %343 = vmatprep.mubr.bf16.mxu0 %v148
    %344 = vmatmul.mubr.bf16.gmra.mrb[0].mxu0 %v147
    %v345 = vpop.f32.mrb[0].mxu0
    %v346 = vadd.f32 %v85, %v345
    %v347 = vpop.f32.mrb[0].mxu0
    %v348 = vpop.f32.mrb[0].mxu0
    %v349 = vadd.f32 %v85, %v348
    %v350 = vpop.f32.mrb[0].mxu0
    %351 = vmatprep.mubr.bf16.mxu0 %v150
    %352 = vmatmul.mubr.bf16.gmra.mrb[0].mxu0 %v149
    %v353 = vpop.f32.mrb[0].mxu0
    %v354 = vadd.f32 %v85, %v353
    %v355 = vpop.f32.mrb[0].mxu0
    %v356 = vpop.f32.mrb[0].mxu0
    %v357 = vadd.f32 %v85, %v356
    %v358 = vpop.f32.mrb[0].mxu0
    %359 = vdwg.mxu0
    %v360 = vmax.f32 %v298, 0.0
    %v361 = vmax.f32 %v301, 0.0
    %v362 = vmax.f32 %v306, 0.0
    %v363 = vmax.f32 %v309, 0.0
    %v364 = vmax.f32 %v314, 0.0
    %v365 = vmax.f32 %v317, 0.0
    %v366 = vmax.f32 %v322, 0.0
    %v367 = vmax.f32 %v325, 0.0
    %v368 = vmax.f32 %v330, 0.0
    %v369 = vmax.f32 %v333, 0.0
    %v370 = vmax.f32 %v338, 0.0
    %v371 = vmax.f32 %v341, 0.0
    %v372 = vmax.f32 %v346, 0.0
    %v373 = vmax.f32 %v349, 0.0
    %v374 = vmax.f32 %v354, 0.0
    %v375 = vmax.f32 %v357, 0.0
    %vm376 = vcmask 261120
    %377 = vst.msk [vmem:[#allocation2] sm:$0xff] %vm376, %v360
    %378 = vst.msk [vmem:[#allocation2 + $0x10] sm:$0xff] %vm376, %v361
    %381 = vrot.lane.b32.xlu0 %v362, 32
    %v382 = vpop.permute.xlu0 %381
    %383 = vrot.lane.b32.xlu0 %v363, 32
    %v384 = vpop.permute.xlu0 %383
    %vm387 = vcmask 523520
    %388 = vst.msk [vmem:[#allocation2] sm:$0xff] %vm387, %v382
    %389 = vst.msk [vmem:[#allocation2 + $0x10] sm:$0xff] %vm387, %v384
    %392 = vrot.lane.b32.xlu0 %v364, 64
    %v393 = vpop.permute.xlu0 %392
    %394 = vrot.lane.b32.xlu0 %v365, 64
    %v395 = vpop.permute.xlu0 %394
    %vm398 = vcmask 785920
    %399 = vst.msk [vmem:[#allocation2] sm:$0xff] %vm398, %v393
    %400 = vst.msk [vmem:[#allocation2 + $0x10] sm:$0xff] %vm398, %v395
    %403 = vrot.lane.b32.xlu0 %v366, 96
    %v404 = vpop.permute.xlu0 %403
    %405 = vrot.lane.b32.xlu0 %v367, 96
    %v406 = vpop.permute.xlu0 %405
    %vm409 = vcmask 1048320
    %410 = vst.msk [vmem:[#allocation2] sm:$0xff] %vm409, %v404
    %411 = vst.msk [vmem:[#allocation2 + $0x10] sm:$0xff] %vm409, %v406
    %412 = vst.msk [vmem:[#allocation2 + $0x8] sm:$0xff] %vm376, %v368
    %413 = vst.msk [vmem:[#allocation2 + $0x18] sm:$0xff] %vm376, %v369
    %416 = vrot.lane.b32.xlu0 %v370, 32
    %v417 = vpop.permute.xlu0 %416
    %418 = vrot.lane.b32.xlu0 %v371, 32
    %v419 = vpop.permute.xlu0 %418
    %422 = vst.msk [vmem:[#allocation2 + $0x8] sm:$0xff] %vm387, %v417
    %423 = vst.msk [vmem:[#allocation2 + $0x18] sm:$0xff] %vm387, %v419
    %426 = vrot.lane.b32.xlu0 %v372, 64
    %v427 = vpop.permute.xlu0 %426
    %428 = vrot.lane.b32.xlu0 %v373, 64
    %v429 = vpop.permute.xlu0 %428
    %432 = vst.msk [vmem:[#allocation2 + $0x8] sm:$0xff] %vm398, %v427
    %433 = vst.msk [vmem:[#allocation2 + $0x18] sm:$0xff] %vm398, %v429
    %436 = vrot.lane.b32.xlu0 %v374, 96
    %v437 = vpop.permute.xlu0 %436
    %438 = vrot.lane.b32.xlu0 %v375, 96
    %v439 = vpop.permute.xlu0 %438
    %442 = vst.msk [vmem:[#allocation2 + $0x8] sm:$0xff] %vm409, %v437
    %443 = vst.msk [vmem:[#allocation2 + $0x18] sm:$0xff] %vm409, %v439
    %v444 = vld [vmem:[#allocation2] ss:$8 sm:$0x3]
    %s445 = scalar_lea.vmem [#allocation2], 1
    %v446 = vld [vmem:[%s445] ss:$8 sm:$0x3]
    %s447 = scalar_lea.vmem [#allocation2], 2
    %v448 = vld [vmem:[%s447] ss:$8 sm:$0x3]
    %s449 = scalar_lea.vmem [#allocation2], 3
    %v450 = vld [vmem:[%s449] ss:$8 sm:$0x3]
    %v455 = vcombine.low %v444, %v446
    %v456 = vcombine.low %v448, %v450
    %v458 = vunpack.c.l.s4 1966171168
    %v459 = vunpack.c.0.s8 %v458
    %v460 = vlaneseq
    %v461 = vshrl.u32 %v460, 7
    %v462 = vsub.s32 %v459, %v461
    %v463 = vrot.slane %v455, %v462
    %v465 = vunpack.c.l.s4 1966171168
    %v466 = vunpack.c.0.s8 %v465
    %v467 = vlaneseq
    %v468 = vshrl.u32 %v467, 7
    %v469 = vsub.s32 %v466, %v468
    %v470 = vrot.slane %v456, %v469
    %v471 = vcombine.low %v463, %v470
    %v473 = vunpack.c.l.s4 1966171168
    %v474 = vunpack.c.0.s8 %v473
    %v475 = vlaneseq
    %v476 = vshrl.u32 %v475, 7
    %v477 = vsub.s32 %v474, %v476
    %v478 = vrot.slane %v471, %v477
    %v480 = vlaneseq
    %vm481 = vcmp.ge.s32.totalorder %v480, 0
    %vm482 = vcmp.lt.s32.totalorder %v480, 512
    %vm483 = vmand %vm481, %vm482
    %484 = vst.msk [vmem:[#allocation3] ss:$8 sm:$0xf] %vm483, %v478
    %485 = vst.msk [vmem:[#allocation3] ss:$8 sm:$0x0] %vm483, %v478
    %v486 = vlaneseq
    %v487 = vshrl.u32 %v486, 7
    %v488 = vsub.s32 0, %v487
    %v489 = vrot.slane %v444, %v488
    %v490 = vlaneseq
    %v491 = vshrl.u32 %v490, 7
    %v492 = vsub.s32 1, %v491
    %v493 = vrot.slane %v444, %v492
    %494 = vrot.lane.b32.xlu0 %v489, 64
    %v495 = vpop.permute.xlu0 %494
    %496 = vrot.lane.b32.xlu0 %v493, 64
    %v497 = vpop.permute.xlu0 %496
    %vm498 = vcmask 523264
    %v499 = vsel %vm498, %v495, %v497
    %v500 = vlaneseq
    %v501 = vshrl.u32 %v500, 7
    %v502 = vsub.s32 0, %v501
    %v503 = vrot.slane %v446, %v502
    %v504 = vlaneseq
    %v505 = vshrl.u32 %v504, 7
    %v506 = vsub.s32 1, %v505
    %v507 = vrot.slane %v446, %v506
    %508 = vrot.lane.b32.xlu0 %v503, 64
    %v509 = vpop.permute.xlu0 %508
    %510 = vrot.lane.b32.xlu0 %v507, 64
    %v511 = vpop.permute.xlu0 %510
    %v512 = vsel %vm498, %v509, %v511
    %v513 = vlaneseq
    %v514 = vshrl.u32 %v513, 7
    %v515 = vsub.s32 0, %v514
    %v516 = vrot.slane %v448, %v515
    %v517 = vlaneseq
    %v518 = vshrl.u32 %v517, 7
    %v519 = vsub.s32 1, %v518
    %v520 = vrot.slane %v448, %v519
    %521 = vrot.lane.b32.xlu0 %v516, 64
    %v522 = vpop.permute.xlu0 %521
    %523 = vrot.lane.b32.xlu0 %v520, 64
    %v524 = vpop.permute.xlu0 %523
    %v525 = vsel %vm498, %v522, %v524
    %v526 = vlaneseq
    %v527 = vshrl.u32 %v526, 7
    %v528 = vsub.s32 0, %v527
    %v529 = vrot.slane %v450, %v528
    %v530 = vlaneseq
    %v531 = vshrl.u32 %v530, 7
    %v532 = vsub.s32 1, %v531
    %v533 = vrot.slane %v450, %v532
    %534 = vrot.lane.b32.xlu0 %v529, 64
    %v535 = vpop.permute.xlu0 %534
    %536 = vrot.lane.b32.xlu0 %v533, 64
    %v537 = vpop.permute.xlu0 %536
    %v538 = vsel %vm498, %v535, %v537
    %v539 = vcombine.low %v499, %v512
    %v540 = vcombine.low %v525, %v538
    %v542 = vunpack.c.l.s4 1966171168
    %v543 = vunpack.c.0.s8 %v542
    %v544 = vlaneseq
    %v545 = vshrl.u32 %v544, 7
    %v546 = vsub.s32 %v543, %v545
    %v547 = vrot.slane %v539, %v546
    %v549 = vunpack.c.l.s4 1966171168
    %v550 = vunpack.c.0.s8 %v549
    %v551 = vlaneseq
    %v552 = vshrl.u32 %v551, 7
    %v553 = vsub.s32 %v550, %v552
    %v554 = vrot.slane %v540, %v553
    %v555 = vcombine.low %v547, %v554
    %v557 = vunpack.c.l.s4 1966171168
    %v558 = vunpack.c.0.s8 %v557
    %v559 = vlaneseq
    %v560 = vshrl.u32 %v559, 7
    %v561 = vsub.s32 %v558, %v560
    %v562 = vrot.slane %v555, %v561
    %s564 = scalar_lea.vmem [#allocation3], 2
    %565 = vst.msk [vmem:[%s564] ss:$8 sm:$0xf] %vm483, %v562
    %566 = vst.msk [vmem:[%s564] ss:$8 sm:$0x0] %vm483, %v562
    %v567 = vcombine.low %v493, %v507
    %v568 = vcombine.low %v520, %v533
    %v570 = vunpack.c.l.s4 1966171168
    %v571 = vunpack.c.0.s8 %v570
    %v572 = vlaneseq
    %v573 = vshrl.u32 %v572, 7
    %v574 = vsub.s32 %v571, %v573
    %v575 = vrot.slane %v567, %v574
    %v577 = vunpack.c.l.s4 1966171168
    %v578 = vunpack.c.0.s8 %v577
    %v579 = vlaneseq
    %v580 = vshrl.u32 %v579, 7
    %v581 = vsub.s32 %v578, %v580
    %v582 = vrot.slane %v568, %v581
    %v583 = vcombine.low %v575, %v582
    %v585 = vunpack.c.l.s4 1966171168
    %v586 = vunpack.c.0.s8 %v585
    %v587 = vlaneseq
    %v588 = vshrl.u32 %v587, 7
    %v589 = vsub.s32 %v586, %v588
    %v590 = vrot.slane %v583, %v589
    %s592 = scalar_lea.vmem [#allocation3], 4
    %593 = vst.msk [vmem:[%s592] ss:$8 sm:$0xf] %vm483, %v590
    %594 = vst.msk [vmem:[%s592] ss:$8 sm:$0x0] %vm483, %v590
    %v595 = vld [vmem:[%s447] ss:$8 sm:$0x3]
    %v596 = vld [vmem:[%s449] ss:$8 sm:$0x3]
    %s597 = scalar_lea.vmem [#allocation2], 4
    %v598 = vld [vmem:[%s597] ss:$8 sm:$0x3]
    %s599 = scalar_lea.vmem [#allocation2], 5
    %v600 = vld [vmem:[%s599] ss:$8 sm:$0x3]
    %v605 = vcombine.low %v595, %v596
    %v606 = vcombine.low %v598, %v600
    %v608 = vunpack.c.l.s4 1966171168
    %v609 = vunpack.c.0.s8 %v608
    %v610 = vlaneseq
    %v611 = vshrl.u32 %v610, 7
    %v612 = vsub.s32 %v609, %v611
    %v613 = vrot.slane %v605, %v612
    %v615 = vunpack.c.l.s4 1966171168
    %v616 = vunpack.c.0.s8 %v615
    %v617 = vlaneseq
    %v618 = vshrl.u32 %v617, 7
    %v619 = vsub.s32 %v616, %v618
    %v620 = vrot.slane %v606, %v619
    %v621 = vcombine.low %v613, %v620
    %v623 = vunpack.c.l.s4 1966171168
    %v624 = vunpack.c.0.s8 %v623
    %v625 = vlaneseq
    %v626 = vshrl.u32 %v625, 7
    %v627 = vsub.s32 %v624, %v626
    %v628 = vrot.slane %v621, %v627
    %s630 = scalar_lea.vmem [#allocation3], 6
    %631 = vst.msk [vmem:[%s630] ss:$8 sm:$0xf] %vm483, %v628
    %632 = vst.msk [vmem:[%s630] ss:$8 sm:$0x0] %vm483, %v628
    %v633 = vlaneseq
    %v634 = vshrl.u32 %v633, 7
    %v635 = vsub.s32 0, %v634
    %v636 = vrot.slane %v595, %v635
    %v637 = vlaneseq
    %v638 = vshrl.u32 %v637, 7
    %v639 = vsub.s32 1, %v638
    %v640 = vrot.slane %v595, %v639
    %641 = vrot.lane.b32.xlu0 %v636, 64
    %v642 = vpop.permute.xlu0 %641
    %643 = vrot.lane.b32.xlu0 %v640, 64
    %v644 = vpop.permute.xlu0 %643
    %v645 = vsel %vm498, %v642, %v644
    %v646 = vlaneseq
    %v647 = vshrl.u32 %v646, 7
    %v648 = vsub.s32 0, %v647
    %v649 = vrot.slane %v596, %v648
    %v650 = vlaneseq
    %v651 = vshrl.u32 %v650, 7
    %v652 = vsub.s32 1, %v651
    %v653 = vrot.slane %v596, %v652
    %654 = vrot.lane.b32.xlu0 %v649, 64
    %v655 = vpop.permute.xlu0 %654
    %656 = vrot.lane.b32.xlu0 %v653, 64
    %v657 = vpop.permute.xlu0 %656
    %v658 = vsel %vm498, %v655, %v657
    %v659 = vlaneseq
    %v660 = vshrl.u32 %v659, 7
    %v661 = vsub.s32 0, %v660
    %v662 = vrot.slane %v598, %v661
    %v663 = vlaneseq
    %v664 = vshrl.u32 %v663, 7
    %v665 = vsub.s32 1, %v664
    %v666 = vrot.slane %v598, %v665
    %667 = vrot.lane.b32.xlu0 %v662, 64
    %v668 = vpop.permute.xlu0 %667
    %669 = vrot.lane.b32.xlu0 %v666, 64
    %v670 = vpop.permute.xlu0 %669
    %v671 = vsel %vm498, %v668, %v670
    %v672 = vlaneseq
    %v673 = vshrl.u32 %v672, 7
    %v674 = vsub.s32 0, %v673
    %v675 = vrot.slane %v600, %v674
    %v676 = vlaneseq
    %v677 = vshrl.u32 %v676, 7
    %v678 = vsub.s32 1, %v677
    %v679 = vrot.slane %v600, %v678
    %680 = vrot.lane.b32.xlu0 %v675, 64
    %v681 = vpop.permute.xlu0 %680
    %682 = vrot.lane.b32.xlu0 %v679, 64
    %v683 = vpop.permute.xlu0 %682
    %v684 = vsel %vm498, %v681, %v683
    %v685 = vcombine.low %v645, %v658
    %v686 = vcombine.low %v671, %v684
    %v688 = vunpack.c.l.s4 1966171168
    %v689 = vunpack.c.0.s8 %v688
    %v690 = vlaneseq
    %v691 = vshrl.u32 %v690, 7
    %v692 = vsub.s32 %v689, %v691
    %v693 = vrot.slane %v685, %v692
    %v695 = vunpack.c.l.s4 1966171168
    %v696 = vunpack.c.0.s8 %v695
    %v697 = vlaneseq
    %v698 = vshrl.u32 %v697, 7
    %v699 = vsub.s32 %v696, %v698
    %v700 = vrot.slane %v686, %v699
    %v701 = vcombine.low %v693, %v700
    %v703 = vunpack.c.l.s4 1966171168
    %v704 = vunpack.c.0.s8 %v703
    %v705 = vlaneseq
    %v706 = vshrl.u32 %v705, 7
    %v707 = vsub.s32 %v704, %v706
    %v708 = vrot.slane %v701, %v707
    %s710 = scalar_lea.vmem [#allocation3], 32
    %711 = vst.msk [vmem:[%s710] ss:$8 sm:$0xf] %vm483, %v708
    %712 = vst.msk [vmem:[%s710] ss:$8 sm:$0x0] %vm483, %v708
    %v713 = vcombine.low %v640, %v653
    %v714 = vcombine.low %v666, %v679
    %v716 = vunpack.c.l.s4 1966171168
    %v717 = vunpack.c.0.s8 %v716
    %v718 = vlaneseq
    %v719 = vshrl.u32 %v718, 7
    %v720 = vsub.s32 %v717, %v719
    %v721 = vrot.slane %v713, %v720
    %v723 = vunpack.c.l.s4 1966171168
    %v724 = vunpack.c.0.s8 %v723
    %v725 = vlaneseq
    %v726 = vshrl.u32 %v725, 7
    %v727 = vsub.s32 %v724, %v726
    %v728 = vrot.slane %v714, %v727
    %v729 = vcombine.low %v721, %v728
    %v731 = vunpack.c.l.s4 1966171168
    %v732 = vunpack.c.0.s8 %v731
    %v733 = vlaneseq
    %v734 = vshrl.u32 %v733, 7
    %v735 = vsub.s32 %v732, %v734
    %v736 = vrot.slane %v729, %v735
    %s738 = scalar_lea.vmem [#allocation3], 34
    %739 = vst.msk [vmem:[%s738] ss:$8 sm:$0xf] %vm483, %v736
    %740 = vst.msk [vmem:[%s738] ss:$8 sm:$0x0] %vm483, %v736
    %v741 = vld [vmem:[%s597] ss:$8 sm:$0x3]
    %v742 = vld [vmem:[%s599] ss:$8 sm:$0x3]
    %s743 = scalar_lea.vmem [#allocation2], 6
    %v744 = vld [vmem:[%s743] ss:$8 sm:$0x3]
    %s745 = scalar_lea.vmem [#allocation2], 7
    %v746 = vld [vmem:[%s745] ss:$8 sm:$0x3]
    %v751 = vcombine.low %v741, %v742
    %v752 = vcombine.low %v744, %v746
    %v754 = vunpack.c.l.s4 1966171168
    %v755 = vunpack.c.0.s8 %v754
    %v756 = vlaneseq
    %v757 = vshrl.u32 %v756, 7
    %v758 = vsub.s32 %v755, %v757
    %v759 = vrot.slane %v751, %v758
    %v761 = vunpack.c.l.s4 1966171168
    %v762 = vunpack.c.0.s8 %v761
    %v763 = vlaneseq
    %v764 = vshrl.u32 %v763, 7
    %v765 = vsub.s32 %v762, %v764
    %v766 = vrot.slane %v752, %v765
    %v767 = vcombine.low %v759, %v766
    %v769 = vunpack.c.l.s4 1966171168
    %v770 = vunpack.c.0.s8 %v769
    %v771 = vlaneseq
    %v772 = vshrl.u32 %v771, 7
    %v773 = vsub.s32 %v770, %v772
    %v774 = vrot.slane %v767, %v773
    %s776 = scalar_lea.vmem [#allocation3], 36
    %777 = vst.msk [vmem:[%s776] ss:$8 sm:$0xf] %vm483, %v774
    %778 = vst.msk [vmem:[%s776] ss:$8 sm:$0x0] %vm483, %v774
    %v779 = vlaneseq
    %v780 = vshrl.u32 %v779, 7
    %v781 = vsub.s32 0, %v780
    %v782 = vrot.slane %v741, %v781
    %v783 = vlaneseq
    %v784 = vshrl.u32 %v783, 7
    %v785 = vsub.s32 1, %v784
    %v786 = vrot.slane %v741, %v785
    %787 = vrot.lane.b32.xlu0 %v782, 64
    %v788 = vpop.permute.xlu0 %787
    %789 = vrot.lane.b32.xlu0 %v786, 64
    %v790 = vpop.permute.xlu0 %789
    %v791 = vsel %vm498, %v788, %v790
    %v792 = vlaneseq
    %v793 = vshrl.u32 %v792, 7
    %v794 = vsub.s32 0, %v793
    %v795 = vrot.slane %v742, %v794
    %v796 = vlaneseq
    %v797 = vshrl.u32 %v796, 7
    %v798 = vsub.s32 1, %v797
    %v799 = vrot.slane %v742, %v798
    %800 = vrot.lane.b32.xlu0 %v795, 64
    %v801 = vpop.permute.xlu0 %800
    %802 = vrot.lane.b32.xlu0 %v799, 64
    %v803 = vpop.permute.xlu0 %802
    %v804 = vsel %vm498, %v801, %v803
    %v805 = vlaneseq
    %v806 = vshrl.u32 %v805, 7
    %v807 = vsub.s32 0, %v806
    %v808 = vrot.slane %v744, %v807
    %v809 = vlaneseq
    %v810 = vshrl.u32 %v809, 7
    %v811 = vsub.s32 1, %v810
    %v812 = vrot.slane %v744, %v811
    %813 = vrot.lane.b32.xlu0 %v808, 64
    %v814 = vpop.permute.xlu0 %813
    %815 = vrot.lane.b32.xlu0 %v812, 64
    %v816 = vpop.permute.xlu0 %815
    %v817 = vsel %vm498, %v814, %v816
    %v818 = vlaneseq
    %v819 = vshrl.u32 %v818, 7
    %v820 = vsub.s32 0, %v819
    %v821 = vrot.slane %v746, %v820
    %v822 = vlaneseq
    %v823 = vshrl.u32 %v822, 7
    %v824 = vsub.s32 1, %v823
    %v825 = vrot.slane %v746, %v824
    %826 = vrot.lane.b32.xlu0 %v821, 64
    %v827 = vpop.permute.xlu0 %826
    %828 = vrot.lane.b32.xlu0 %v825, 64
    %v829 = vpop.permute.xlu0 %828
    %v830 = vsel %vm498, %v827, %v829
    %v831 = vcombine.low %v791, %v804
    %v832 = vcombine.low %v817, %v830
    %v834 = vunpack.c.l.s4 1966171168
    %v835 = vunpack.c.0.s8 %v834
    %v836 = vlaneseq
    %v837 = vshrl.u32 %v836, 7
    %v838 = vsub.s32 %v835, %v837
    %v839 = vrot.slane %v831, %v838
    %v841 = vunpack.c.l.s4 1966171168
    %v842 = vunpack.c.0.s8 %v841
    %v843 = vlaneseq
    %v844 = vshrl.u32 %v843, 7
    %v845 = vsub.s32 %v842, %v844
    %v846 = vrot.slane %v832, %v845
    %v847 = vcombine.low %v839, %v846
    %v849 = vunpack.c.l.s4 1966171168
    %v850 = vunpack.c.0.s8 %v849
    %v851 = vlaneseq
    %v852 = vshrl.u32 %v851, 7
    %v853 = vsub.s32 %v850, %v852
    %v854 = vrot.slane %v847, %v853
    %s856 = scalar_lea.vmem [#allocation3], 38
    %857 = vst.msk [vmem:[%s856] ss:$8 sm:$0xf] %vm483, %v854
    %858 = vst.msk [vmem:[%s856] ss:$8 sm:$0x0] %vm483, %v854
    %v859 = vcombine.low %v786, %v799
    %v860 = vcombine.low %v812, %v825
    %v862 = vunpack.c.l.s4 1966171168
    %v863 = vunpack.c.0.s8 %v862
    %v864 = vlaneseq
    %v865 = vshrl.u32 %v864, 7
    %v866 = vsub.s32 %v863, %v865
    %v867 = vrot.slane %v859, %v866
    %v869 = vunpack.c.l.s4 1966171168
    %v870 = vunpack.c.0.s8 %v869
    %v871 = vlaneseq
    %v872 = vshrl.u32 %v871, 7
    %v873 = vsub.s32 %v870, %v872
    %v874 = vrot.slane %v860, %v873
    %v875 = vcombine.low %v867, %v874
    %v877 = vunpack.c.l.s4 1966171168
    %v878 = vunpack.c.0.s8 %v877
    %v879 = vlaneseq
    %v880 = vshrl.u32 %v879, 7
    %v881 = vsub.s32 %v878, %v880
    %v882 = vrot.slane %v875, %v881
    %s884 = scalar_lea.vmem [#allocation3], 64
    %885 = vst.msk [vmem:[%s884] ss:$8 sm:$0xf] %vm483, %v882
    %886 = vst.msk [vmem:[%s884] ss:$8 sm:$0x0] %vm483, %v882
    %s887 = scalar_lea.vmem [#allocation2], 16
    %v888 = vld [vmem:[%s887] ss:$8 sm:$0x3]
    %s889 = scalar_lea.vmem [#allocation2], 17
    %v890 = vld [vmem:[%s889] ss:$8 sm:$0x3]
    %s891 = scalar_lea.vmem [#allocation2], 18
    %v892 = vld [vmem:[%s891] ss:$8 sm:$0x3]
    %s893 = scalar_lea.vmem [#allocation2], 19
    %v894 = vld [vmem:[%s893] ss:$8 sm:$0x3]
    %v899 = vcombine.low %v888, %v890
    %v900 = vcombine.low %v892, %v894
    %v902 = vunpack.c.l.s4 1966171168
    %v903 = vunpack.c.0.s8 %v902
    %v904 = vlaneseq
    %v905 = vshrl.u32 %v904, 7
    %v906 = vsub.s32 %v903, %v905
    %v907 = vrot.slane %v899, %v906
    %v909 = vunpack.c.l.s4 1966171168
    %v910 = vunpack.c.0.s8 %v909
    %v911 = vlaneseq
    %v912 = vshrl.u32 %v911, 7
    %v913 = vsub.s32 %v910, %v912
    %v914 = vrot.slane %v900, %v913
    %v915 = vcombine.low %v907, %v914
    %v917 = vunpack.c.l.s4 1966171168
    %v918 = vunpack.c.0.s8 %v917
    %v919 = vlaneseq
    %v920 = vshrl.u32 %v919, 7
    %v921 = vsub.s32 %v918, %v920
    %v922 = vrot.slane %v915, %v921
    %s924 = scalar_lea.vmem [#allocation3], 1
    %925 = vst.msk [vmem:[%s924] ss:$8 sm:$0xf] %vm483, %v922
    %926 = vst.msk [vmem:[%s924] ss:$8 sm:$0x0] %vm483, %v922
    %v927 = vlaneseq
    %v928 = vshrl.u32 %v927, 7
    %v929 = vsub.s32 0, %v928
    %v930 = vrot.slane %v888, %v929
    %v931 = vlaneseq
    %v932 = vshrl.u32 %v931, 7
    %v933 = vsub.s32 1, %v932
    %v934 = vrot.slane %v888, %v933
    %935 = vrot.lane.b32.xlu0 %v930, 64
    %v936 = vpop.permute.xlu0 %935
    %937 = vrot.lane.b32.xlu0 %v934, 64
    %v938 = vpop.permute.xlu0 %937
    %v939 = vsel %vm498, %v936, %v938
    %v940 = vlaneseq
    %v941 = vshrl.u32 %v940, 7
    %v942 = vsub.s32 0, %v941
    %v943 = vrot.slane %v890, %v942
    %v944 = vlaneseq
    %v945 = vshrl.u32 %v944, 7
    %v946 = vsub.s32 1, %v945
    %v947 = vrot.slane %v890, %v946
    %948 = vrot.lane.b32.xlu0 %v943, 64
    %v949 = vpop.permute.xlu0 %948
    %950 = vrot.lane.b32.xlu0 %v947, 64
    %v951 = vpop.permute.xlu0 %950
    %v952 = vsel %vm498, %v949, %v951
    %v953 = vlaneseq
    %v954 = vshrl.u32 %v953, 7
    %v955 = vsub.s32 0, %v954
    %v956 = vrot.slane %v892, %v955
    %v957 = vlaneseq
    %v958 = vshrl.u32 %v957, 7
    %v959 = vsub.s32 1, %v958
    %v960 = vrot.slane %v892, %v959
    %961 = vrot.lane.b32.xlu0 %v956, 64
    %v962 = vpop.permute.xlu0 %961
    %963 = vrot.lane.b32.xlu0 %v960, 64
    %v964 = vpop.permute.xlu0 %963
    %v965 = vsel %vm498, %v962, %v964
    %v966 = vlaneseq
    %v967 = vshrl.u32 %v966, 7
    %v968 = vsub.s32 0, %v967
    %v969 = vrot.slane %v894, %v968
    %v970 = vlaneseq
    %v971 = vshrl.u32 %v970, 7
    %v972 = vsub.s32 1, %v971
    %v973 = vrot.slane %v894, %v972
    %974 = vrot.lane.b32.xlu0 %v969, 64
    %v975 = vpop.permute.xlu0 %974
    %976 = vrot.lane.b32.xlu0 %v973, 64
    %v977 = vpop.permute.xlu0 %976
    %v978 = vsel %vm498, %v975, %v977
    %v979 = vcombine.low %v939, %v952
    %v980 = vcombine.low %v965, %v978
    %v982 = vunpack.c.l.s4 1966171168
    %v983 = vunpack.c.0.s8 %v982
    %v984 = vlaneseq
    %v985 = vshrl.u32 %v984, 7
    %v986 = vsub.s32 %v983, %v985
    %v987 = vrot.slane %v979, %v986
    %v989 = vunpack.c.l.s4 1966171168
    %v990 = vunpack.c.0.s8 %v989
    %v991 = vlaneseq
    %v992 = vshrl.u32 %v991, 7
    %v993 = vsub.s32 %v990, %v992
    %v994 = vrot.slane %v980, %v993
    %v995 = vcombine.low %v987, %v994
    %v997 = vunpack.c.l.s4 1966171168
    %v998 = vunpack.c.0.s8 %v997
    %v999 = vlaneseq
    %v1000 = vshrl.u32 %v999, 7
    %v1001 = vsub.s32 %v998, %v1000
    %v1002 = vrot.slane %v995, %v1001
    %s1004 = scalar_lea.vmem [#allocation3], 3
    %1005 = vst.msk [vmem:[%s1004] ss:$8 sm:$0xf] %vm483, %v1002
    %1006 = vst.msk [vmem:[%s1004] ss:$8 sm:$0x0] %vm483, %v1002
    %v1007 = vcombine.low %v934, %v947
    %v1008 = vcombine.low %v960, %v973
    %v1010 = vunpack.c.l.s4 1966171168
    %v1011 = vunpack.c.0.s8 %v1010
    %v1012 = vlaneseq
    %v1013 = vshrl.u32 %v1012, 7
    %v1014 = vsub.s32 %v1011, %v1013
    %v1015 = vrot.slane %v1007, %v1014
    %v1017 = vunpack.c.l.s4 1966171168
    %v1018 = vunpack.c.0.s8 %v1017
    %v1019 = vlaneseq
    %v1020 = vshrl.u32 %v1019, 7
    %v1021 = vsub.s32 %v1018, %v1020
    %v1022 = vrot.slane %v1008, %v1021
    %v1023 = vcombine.low %v1015, %v1022
    %v1025 = vunpack.c.l.s4 1966171168
    %v1026 = vunpack.c.0.s8 %v1025
    %v1027 = vlaneseq
    %v1028 = vshrl.u32 %v1027, 7
    %v1029 = vsub.s32 %v1026, %v1028
    %v1030 = vrot.slane %v1023, %v1029
    %s1032 = scalar_lea.vmem [#allocation3], 5
    %1033 = vst.msk [vmem:[%s1032] ss:$8 sm:$0xf] %vm483, %v1030
    %1034 = vst.msk [vmem:[%s1032] ss:$8 sm:$0x0] %vm483, %v1030
    %v1035 = vld [vmem:[%s891] ss:$8 sm:$0x3]
    %v1036 = vld [vmem:[%s893] ss:$8 sm:$0x3]
    %s1037 = scalar_lea.vmem [#allocation2], 20
    %v1038 = vld [vmem:[%s1037] ss:$8 sm:$0x3]
    %s1039 = scalar_lea.vmem [#allocation2], 21
    %v1040 = vld [vmem:[%s1039] ss:$8 sm:$0x3]
    %v1045 = vcombine.low %v1035, %v1036
    %v1046 = vcombine.low %v1038, %v1040
    %v1048 = vunpack.c.l.s4 1966171168
    %v1049 = vunpack.c.0.s8 %v1048
    %v1050 = vlaneseq
    %v1051 = vshrl.u32 %v1050, 7
    %v1052 = vsub.s32 %v1049, %v1051
    %v1053 = vrot.slane %v1045, %v1052
    %v1055 = vunpack.c.l.s4 1966171168
    %v1056 = vunpack.c.0.s8 %v1055
    %v1057 = vlaneseq
    %v1058 = vshrl.u32 %v1057, 7
    %v1059 = vsub.s32 %v1056, %v1058
    %v1060 = vrot.slane %v1046, %v1059
    %v1061 = vcombine.low %v1053, %v1060
    %v1063 = vunpack.c.l.s4 1966171168
    %v1064 = vunpack.c.0.s8 %v1063
    %v1065 = vlaneseq
    %v1066 = vshrl.u32 %v1065, 7
    %v1067 = vsub.s32 %v1064, %v1066
    %v1068 = vrot.slane %v1061, %v1067
    %s1070 = scalar_lea.vmem [#allocation3], 7
    %1071 = vst.msk [vmem:[%s1070] ss:$8 sm:$0xf] %vm483, %v1068
    %1072 = vst.msk [vmem:[%s1070] ss:$8 sm:$0x0] %vm483, %v1068
    %v1073 = vlaneseq
    %v1074 = vshrl.u32 %v1073, 7
    %v1075 = vsub.s32 0, %v1074
    %v1076 = vrot.slane %v1035, %v1075
    %v1077 = vlaneseq
    %v1078 = vshrl.u32 %v1077, 7
    %v1079 = vsub.s32 1, %v1078
    %v1080 = vrot.slane %v1035, %v1079
    %1081 = vrot.lane.b32.xlu0 %v1076, 64
    %v1082 = vpop.permute.xlu0 %1081
    %1083 = vrot.lane.b32.xlu0 %v1080, 64
    %v1084 = vpop.permute.xlu0 %1083
    %v1085 = vsel %vm498, %v1082, %v1084
    %v1086 = vlaneseq
    %v1087 = vshrl.u32 %v1086, 7
    %v1088 = vsub.s32 0, %v1087
    %v1089 = vrot.slane %v1036, %v1088
    %v1090 = vlaneseq
    %v1091 = vshrl.u32 %v1090, 7
    %v1092 = vsub.s32 1, %v1091
    %v1093 = vrot.slane %v1036, %v1092
    %1094 = vrot.lane.b32.xlu0 %v1089, 64
    %v1095 = vpop.permute.xlu0 %1094
    %1096 = vrot.lane.b32.xlu0 %v1093, 64
    %v1097 = vpop.permute.xlu0 %1096
    %v1098 = vsel %vm498, %v1095, %v1097
    %v1099 = vlaneseq
    %v1100 = vshrl.u32 %v1099, 7
    %v1101 = vsub.s32 0, %v1100
    %v1102 = vrot.slane %v1038, %v1101
    %v1103 = vlaneseq
    %v1104 = vshrl.u32 %v1103, 7
    %v1105 = vsub.s32 1, %v1104
    %v1106 = vrot.slane %v1038, %v1105
    %1107 = vrot.lane.b32.xlu0 %v1102, 64
    %v1108 = vpop.permute.xlu0 %1107
    %1109 = vrot.lane.b32.xlu0 %v1106, 64
    %v1110 = vpop.permute.xlu0 %1109
    %v1111 = vsel %vm498, %v1108, %v1110
    %v1112 = vlaneseq
    %v1113 = vshrl.u32 %v1112, 7
    %v1114 = vsub.s32 0, %v1113
    %v1115 = vrot.slane %v1040, %v1114
    %v1116 = vlaneseq
    %v1117 = vshrl.u32 %v1116, 7
    %v1118 = vsub.s32 1, %v1117
    %v1119 = vrot.slane %v1040, %v1118
    %1120 = vrot.lane.b32.xlu0 %v1115, 64
    %v1121 = vpop.permute.xlu0 %1120
    %1122 = vrot.lane.b32.xlu0 %v1119, 64
    %v1123 = vpop.permute.xlu0 %1122
    %v1124 = vsel %vm498, %v1121, %v1123
    %v1125 = vcombine.low %v1085, %v1098
    %v1126 = vcombine.low %v1111, %v1124
    %v1128 = vunpack.c.l.s4 1966171168
    %v1129 = vunpack.c.0.s8 %v1128
    %v1130 = vlaneseq
    %v1131 = vshrl.u32 %v1130, 7
    %v1132 = vsub.s32 %v1129, %v1131
    %v1133 = vrot.slane %v1125, %v1132
    %v1135 = vunpack.c.l.s4 1966171168
    %v1136 = vunpack.c.0.s8 %v1135
    %v1137 = vlaneseq
    %v1138 = vshrl.u32 %v1137, 7
    %v1139 = vsub.s32 %v1136, %v1138
    %v1140 = vrot.slane %v1126, %v1139
    %v1141 = vcombine.low %v1133, %v1140
    %v1143 = vunpack.c.l.s4 1966171168
    %v1144 = vunpack.c.0.s8 %v1143
    %v1145 = vlaneseq
    %v1146 = vshrl.u32 %v1145, 7
    %v1147 = vsub.s32 %v1144, %v1146
    %v1148 = vrot.slane %v1141, %v1147
    %s1150 = scalar_lea.vmem [#allocation3], 33
    %1151 = vst.msk [vmem:[%s1150] ss:$8 sm:$0xf] %vm483, %v1148
    %1152 = vst.msk [vmem:[%s1150] ss:$8 sm:$0x0] %vm483, %v1148
    %v1153 = vcombine.low %v1080, %v1093
    %v1154 = vcombine.low %v1106, %v1119
    %v1156 = vunpack.c.l.s4 1966171168
    %v1157 = vunpack.c.0.s8 %v1156
    %v1158 = vlaneseq
    %v1159 = vshrl.u32 %v1158, 7
    %v1160 = vsub.s32 %v1157, %v1159
    %v1161 = vrot.slane %v1153, %v1160
    %v1163 = vunpack.c.l.s4 1966171168
    %v1164 = vunpack.c.0.s8 %v1163
    %v1165 = vlaneseq
    %v1166 = vshrl.u32 %v1165, 7
    %v1167 = vsub.s32 %v1164, %v1166
    %v1168 = vrot.slane %v1154, %v1167
    %v1169 = vcombine.low %v1161, %v1168
    %v1171 = vunpack.c.l.s4 1966171168
    %v1172 = vunpack.c.0.s8 %v1171
    %v1173 = vlaneseq
    %v1174 = vshrl.u32 %v1173, 7
    %v1175 = vsub.s32 %v1172, %v1174
    %v1176 = vrot.slane %v1169, %v1175
    %s1178 = scalar_lea.vmem [#allocation3], 35
    %1179 = vst.msk [vmem:[%s1178] ss:$8 sm:$0xf] %vm483, %v1176
    %1180 = vst.msk [vmem:[%s1178] ss:$8 sm:$0x0] %vm483, %v1176
    %v1181 = vld [vmem:[%s1037] ss:$8 sm:$0x3]
    %v1182 = vld [vmem:[%s1039] ss:$8 sm:$0x3]
    %s1183 = scalar_lea.vmem [#allocation2], 22
    %v1184 = vld [vmem:[%s1183] ss:$8 sm:$0x3]
    %s1185 = scalar_lea.vmem [#allocation2], 23
    %v1186 = vld [vmem:[%s1185] ss:$8 sm:$0x3]
    %v1191 = vcombine.low %v1181, %v1182
    %v1192 = vcombine.low %v1184, %v1186
    %v1194 = vunpack.c.l.s4 1966171168
    %v1195 = vunpack.c.0.s8 %v1194
    %v1196 = vlaneseq
    %v1197 = vshrl.u32 %v1196, 7
    %v1198 = vsub.s32 %v1195, %v1197
    %v1199 = vrot.slane %v1191, %v1198
    %v1201 = vunpack.c.l.s4 1966171168
    %v1202 = vunpack.c.0.s8 %v1201
    %v1203 = vlaneseq
    %v1204 = vshrl.u32 %v1203, 7
    %v1205 = vsub.s32 %v1202, %v1204
    %v1206 = vrot.slane %v1192, %v1205
    %v1207 = vcombine.low %v1199, %v1206
    %v1209 = vunpack.c.l.s4 1966171168
    %v1210 = vunpack.c.0.s8 %v1209
    %v1211 = vlaneseq
    %v1212 = vshrl.u32 %v1211, 7
    %v1213 = vsub.s32 %v1210, %v1212
    %v1214 = vrot.slane %v1207, %v1213
    %s1216 = scalar_lea.vmem [#allocation3], 37
    %1217 = vst.msk [vmem:[%s1216] ss:$8 sm:$0xf] %vm483, %v1214
    %1218 = vst.msk [vmem:[%s1216] ss:$8 sm:$0x0] %vm483, %v1214
    %v1219 = vlaneseq
    %v1220 = vshrl.u32 %v1219, 7
    %v1221 = vsub.s32 0, %v1220
    %v1222 = vrot.slane %v1181, %v1221
    %v1223 = vlaneseq
    %v1224 = vshrl.u32 %v1223, 7
    %v1225 = vsub.s32 1, %v1224
    %v1226 = vrot.slane %v1181, %v1225
    %1227 = vrot.lane.b32.xlu0 %v1222, 64
    %v1228 = vpop.permute.xlu0 %1227
    %1229 = vrot.lane.b32.xlu0 %v1226, 64
    %v1230 = vpop.permute.xlu0 %1229
    %v1231 = vsel %vm498, %v1228, %v1230
    %v1232 = vlaneseq
    %v1233 = vshrl.u32 %v1232, 7
    %v1234 = vsub.s32 0, %v1233
    %v1235 = vrot.slane %v1182, %v1234
    %v1236 = vlaneseq
    %v1237 = vshrl.u32 %v1236, 7
    %v1238 = vsub.s32 1, %v1237
    %v1239 = vrot.slane %v1182, %v1238
    %1240 = vrot.lane.b32.xlu0 %v1235, 64
    %v1241 = vpop.permute.xlu0 %1240
    %1242 = vrot.lane.b32.xlu0 %v1239, 64
    %v1243 = vpop.permute.xlu0 %1242
    %v1244 = vsel %vm498, %v1241, %v1243
    %v1245 = vlaneseq
    %v1246 = vshrl.u32 %v1245, 7
    %v1247 = vsub.s32 0, %v1246
    %v1248 = vrot.slane %v1184, %v1247
    %v1249 = vlaneseq
    %v1250 = vshrl.u32 %v1249, 7
    %v1251 = vsub.s32 1, %v1250
    %v1252 = vrot.slane %v1184, %v1251
    %1253 = vrot.lane.b32.xlu0 %v1248, 64
    %v1254 = vpop.permute.xlu0 %1253
    %1255 = vrot.lane.b32.xlu0 %v1252, 64
    %v1256 = vpop.permute.xlu0 %1255
    %v1257 = vsel %vm498, %v1254, %v1256
    %v1258 = vlaneseq
    %v1259 = vshrl.u32 %v1258, 7
    %v1260 = vsub.s32 0, %v1259
    %v1261 = vrot.slane %v1186, %v1260
    %v1262 = vlaneseq
    %v1263 = vshrl.u32 %v1262, 7
    %v1264 = vsub.s32 1, %v1263
    %v1265 = vrot.slane %v1186, %v1264
    %1266 = vrot.lane.b32.xlu0 %v1261, 64
    %v1267 = vpop.permute.xlu0 %1266
    %1268 = vrot.lane.b32.xlu0 %v1265, 64
    %v1269 = vpop.permute.xlu0 %1268
    %v1270 = vsel %vm498, %v1267, %v1269
    %v1271 = vcombine.low %v1231, %v1244
    %v1272 = vcombine.low %v1257, %v1270
    %v1274 = vunpack.c.l.s4 1966171168
    %v1275 = vunpack.c.0.s8 %v1274
    %v1276 = vlaneseq
    %v1277 = vshrl.u32 %v1276, 7
    %v1278 = vsub.s32 %v1275, %v1277
    %v1279 = vrot.slane %v1271, %v1278
    %v1281 = vunpack.c.l.s4 1966171168
    %v1282 = vunpack.c.0.s8 %v1281
    %v1283 = vlaneseq
    %v1284 = vshrl.u32 %v1283, 7
    %v1285 = vsub.s32 %v1282, %v1284
    %v1286 = vrot.slane %v1272, %v1285
    %v1287 = vcombine.low %v1279, %v1286
    %v1289 = vunpack.c.l.s4 1966171168
    %v1290 = vunpack.c.0.s8 %v1289
    %v1291 = vlaneseq
    %v1292 = vshrl.u32 %v1291, 7
    %v1293 = vsub.s32 %v1290, %v1292
    %v1294 = vrot.slane %v1287, %v1293
    %s1296 = scalar_lea.vmem [#allocation3], 39
    %1297 = vst.msk [vmem:[%s1296] ss:$8 sm:$0xf] %vm483, %v1294
    %1298 = vst.msk [vmem:[%s1296] ss:$8 sm:$0x0] %vm483, %v1294
    %v1299 = vcombine.low %v1226, %v1239
    %v1300 = vcombine.low %v1252, %v1265
    %v1302 = vunpack.c.l.s4 1966171168
    %v1303 = vunpack.c.0.s8 %v1302
    %v1304 = vlaneseq
    %v1305 = vshrl.u32 %v1304, 7
    %v1306 = vsub.s32 %v1303, %v1305
    %v1307 = vrot.slane %v1299, %v1306
    %v1309 = vunpack.c.l.s4 1966171168
    %v1310 = vunpack.c.0.s8 %v1309
    %v1311 = vlaneseq
    %v1312 = vshrl.u32 %v1311, 7
    %v1313 = vsub.s32 %v1310, %v1312
    %v1314 = vrot.slane %v1300, %v1313
    %v1315 = vcombine.low %v1307, %v1314
    %v1317 = vunpack.c.l.s4 1966171168
    %v1318 = vunpack.c.0.s8 %v1317
    %v1319 = vlaneseq
    %v1320 = vshrl.u32 %v1319, 7
    %v1321 = vsub.s32 %v1318, %v1320
    %v1322 = vrot.slane %v1315, %v1321
    %s1324 = scalar_lea.vmem [#allocation3], 65
    %1325 = vst.msk [vmem:[%s1324] ss:$8 sm:$0xf] %vm483, %v1322
    %1326 = vst.msk [vmem:[%s1324] ss:$8 sm:$0x0] %vm483, %v1322
    %v1327 = vld [vmem:[#allocation3] sm:$0xff]
    %v1328 = vld [vmem:[#allocation3 + $0x8] sm:$0xff]
    %v1329 = vld [vmem:[#allocation3 + $0x10] sm:$0xff]
    %v1330 = vld [vmem:[#allocation3 + $0x18] sm:$0xff]
    %v1331 = vld [vmem:[#allocation3 + $0x20] sm:$0xff]
    %v1332 = vld [vmem:[#allocation3 + $0x28] sm:$0xff]
    %v1333 = vld [vmem:[#allocation3 + $0x30] sm:$0xff]
    %v1334 = vld [vmem:[#allocation3 + $0x38] sm:$0xff]
    %v1335 = vld [vmem:[#allocation3 + $0x40] sm:$0x3]
    %v1336 = vld [vmem:[#allocation3 + $0x48] sm:$0x3]
    %v1337 = vld [vmem:[#allocation3 + $0x50] sm:$0x3]
    %v1338 = vld [vmem:[#allocation3 + $0x58] sm:$0x3]
    %v1339 = vpack.c.bf16 %v1331, %v1327
    %v1340 = vpack.c.bf16 %v1332, %v1328
    %v1341 = vpack.c.bf16 %v1333, %v1329
    %v1342 = vpack.c.bf16 %v1334, %v1330
    %v1343 = vpack.c.bf16 %v1335, %v1335
    %v1344 = vpack.c.bf16 %v1336, %v1336
    %v1345 = vpack.c.bf16 %v1337, %v1337
    %v1346 = vpack.c.bf16 %v1338, %v1338
    %v1347 = vld [vmem:[%s2] sm:$0xf]
    %v1348 = vld [vmem:[%s2 + $0x4] sm:$0xf]
    %v1349 = vld [vmem:[%s2 + $0x8] sm:$0xf]
    %v1350 = vld [vmem:[%s2 + $0xc] sm:$0xf]
    %v1351 = vld [vmem:[%s2 + $0x10] sm:$0xf]
    %v1352 = vld [vmem:[%s2 + $0x14] sm:$0xf]
    %v1353 = vld [vmem:[%s2 + $0x18] sm:$0xf]
    %v1354 = vld [vmem:[%s2 + $0x1c] sm:$0xf]
    %v1355 = vld [vmem:[%s2 + $0x20] sm:$0xf]
    %v1356 = vld [vmem:[%s2 + $0x24] sm:$0xf]
    %v1357 = vld [vmem:[%s2 + $0x28] sm:$0xf]
    %v1358 = vld [vmem:[%s2 + $0x2c] sm:$0xf]
    %v1359 = vld [vmem:[%s2 + $0x30] sm:$0xf]
    %v1360 = vld [vmem:[%s2 + $0x34] sm:$0xf]
    %v1361 = vld [vmem:[%s2 + $0x38] sm:$0xf]
    %v1362 = vld [vmem:[%s2 + $0x3c] sm:$0xf]
    %v1363 = vld [vmem:[%s2 + $0x40] sm:$0xf]
    %v1364 = vld [vmem:[%s2 + $0x44] sm:$0xf]
    %v1365 = vld [vmem:[%s2 + $0x48] sm:$0xf]
    %v1366 = vld [vmem:[%s2 + $0x4c] sm:$0xf]
    %v1367 = vld [vmem:[%s2 + $0x50] sm:$0xf]
    %v1368 = vld [vmem:[%s2 + $0x54] sm:$0xf]
    %v1369 = vld [vmem:[%s2 + $0x58] sm:$0xf]
    %v1370 = vld [vmem:[%s2 + $0x5c] sm:$0xf]
    %v1371 = vld [vmem:[%s2 + $0x60] sm:$0xf]
    %v1372 = vld [vmem:[%s2 + $0x64] sm:$0xf]
    %v1373 = vld [vmem:[%s2 + $0x68] sm:$0xf]
    %v1374 = vld [vmem:[%s2 + $0x6c] sm:$0xf]
    %v1375 = vld [vmem:[%s2 + $0x70] sm:$0xf]
    %v1376 = vld [vmem:[%s2 + $0x74] sm:$0xf]
    %v1377 = vld [vmem:[%s2 + $0x78] sm:$0xf]
    %v1378 = vld [vmem:[%s2 + $0x7c] sm:$0xf]
    %v1379 = vld [vmem:[%s2 + $0x80] sm:$0xf]
    %v1380 = vld [vmem:[%s2 + $0x84] sm:$0xf]
    %v1381 = vld [vmem:[%s2 + $0x88] sm:$0xf]
    %v1382 = vld [vmem:[%s2 + $0x8c] sm:$0xf]
    %v1383 = vld [vmem:[%s2 + $0x90] sm:$0xf]
    %v1384 = vld [vmem:[%s2 + $0x94] sm:$0xf]
    %v1385 = vld [vmem:[%s2 + $0x98] sm:$0xf]
    %v1386 = vld [vmem:[%s2 + $0x9c] sm:$0xf]
    %v1387 = vld [vmem:[%s2 + $0xa0] sm:$0xf]
    %v1388 = vld [vmem:[%s2 + $0xa4] sm:$0xf]
    %v1389 = vld [vmem:[%s2 + $0xa8] sm:$0xf]
    %v1390 = vld [vmem:[%s2 + $0xac] sm:$0xf]
    %v1391 = vld [vmem:[%s2 + $0xb0] sm:$0xf]
    %v1392 = vld [vmem:[%s2 + $0xb4] sm:$0xf]
    %v1393 = vld [vmem:[%s2 + $0xb8] sm:$0xf]
    %v1394 = vld [vmem:[%s2 + $0xbc] sm:$0xf]
    %v1395 = vld [vmem:[%s2 + $0xc0] sm:$0xf]
    %v1396 = vld [vmem:[%s2 + $0xc4] sm:$0xf]
    %v1397 = vld [vmem:[%s2 + $0xc8] sm:$0xf]
    %v1398 = vld [vmem:[%s2 + $0xcc] sm:$0xf]
    %v1399 = vld [vmem:[%s2 + $0xd0] sm:$0xf]
    %v1400 = vld [vmem:[%s2 + $0xd4] sm:$0xf]
    %v1401 = vld [vmem:[%s2 + $0xd8] sm:$0xf]
    %v1402 = vld [vmem:[%s2 + $0xdc] sm:$0xf]
    %v1403 = vld [vmem:[%s2 + $0xe0] sm:$0xf]
    %v1404 = vld [vmem:[%s2 + $0xe4] sm:$0xf]
    %v1405 = vld [vmem:[%s2 + $0xe8] sm:$0xf]
    %v1406 = vld [vmem:[%s2 + $0xec] sm:$0xf]
    %v1407 = vld [vmem:[%s2 + $0xf0] sm:$0xf]
    %v1408 = vld [vmem:[%s2 + $0xf4] sm:$0xf]
    %v1409 = vld [vmem:[%s2 + $0xf8] sm:$0xf]
    %v1410 = vld [vmem:[%s2 + $0xfc] sm:$0xf]
    %v1412 = vlaneseq
    %v1413 = vshrl.u32 %v1412, 7
    %v1414 = vsub.s32 0, %v1413
    %v1415 = vrot.slane %v29, %v1414
    %v1481 = vunpack.c.l.b16 %v1347
    %v1482 = vunpack.c.l.b16 %v1348
    %v1483 = vunpack.c.l.b16 %v1349
    %v1484 = vunpack.c.l.b16 %v1350
    %v1485 = vunpack.c.l.b16 %v1351
    %v1486 = vunpack.c.l.b16 %v1352
    %v1487 = vunpack.c.l.b16 %v1353
    %v1488 = vunpack.c.l.b16 %v1354
    %v1489 = vunpack.c.l.b16 %v1355
    %v1490 = vunpack.c.l.b16 %v1356
    %v1491 = vunpack.c.l.b16 %v1357
    %v1492 = vunpack.c.l.b16 %v1358
    %v1493 = vunpack.c.l.b16 %v1359
    %v1494 = vunpack.c.l.b16 %v1360
    %v1495 = vunpack.c.l.b16 %v1361
    %v1496 = vunpack.c.l.b16 %v1362
    %v1497 = vunpack.c.l.b16 %v1363
    %v1498 = vunpack.c.l.b16 %v1364
    %v1499 = vunpack.c.l.b16 %v1365
    %v1500 = vunpack.c.l.b16 %v1366
    %v1501 = vunpack.c.l.b16 %v1367
    %v1502 = vunpack.c.l.b16 %v1368
    %v1503 = vunpack.c.l.b16 %v1369
    %v1504 = vunpack.c.l.b16 %v1370
    %v1505 = vunpack.c.l.b16 %v1371
    %v1506 = vunpack.c.l.b16 %v1372
    %v1507 = vunpack.c.l.b16 %v1373
    %v1508 = vunpack.c.l.b16 %v1374
    %v1509 = vunpack.c.l.b16 %v1375
    %v1510 = vunpack.c.l.b16 %v1376
    %v1511 = vunpack.c.l.b16 %v1377
    %v1512 = vunpack.c.l.b16 %v1378
    %v1513 = vunpack.c.l.b16 %v1379
    %v1514 = vunpack.c.l.b16 %v1380
    %v1515 = vunpack.c.l.b16 %v1381
    %v1516 = vunpack.c.l.b16 %v1382
    %v1517 = vunpack.c.l.b16 %v1383
    %v1518 = vunpack.c.l.b16 %v1384
    %v1519 = vunpack.c.l.b16 %v1385
    %v1520 = vunpack.c.l.b16 %v1386
    %v1521 = vunpack.c.l.b16 %v1387
    %v1522 = vunpack.c.l.b16 %v1388
    %v1523 = vunpack.c.l.b16 %v1389
    %v1524 = vunpack.c.l.b16 %v1390
    %v1525 = vunpack.c.l.b16 %v1391
    %v1526 = vunpack.c.l.b16 %v1392
    %v1527 = vunpack.c.l.b16 %v1393
    %v1528 = vunpack.c.l.b16 %v1394
    %v1529 = vunpack.c.l.b16 %v1395
    %v1530 = vunpack.c.l.b16 %v1396
    %v1531 = vunpack.c.l.b16 %v1397
    %v1532 = vunpack.c.l.b16 %v1398
    %v1533 = vunpack.c.l.b16 %v1399
    %v1534 = vunpack.c.l.b16 %v1400
    %v1535 = vunpack.c.l.b16 %v1401
    %v1536 = vunpack.c.l.b16 %v1402
    %v1537 = vunpack.c.l.b16 %v1403
    %v1538 = vunpack.c.l.b16 %v1404
    %v1539 = vunpack.c.l.b16 %v1405
    %v1540 = vunpack.c.l.b16 %v1406
    %v1541 = vunpack.c.l.b16 %v1407
    %v1542 = vunpack.c.l.b16 %v1408
    %v1543 = vunpack.c.l.b16 %v1409
    %v1544 = vunpack.c.l.b16 %v1410
    %v1545 = vpack.c.b16 %v1482, %v1481
    %v1546 = vpack.c.b16 %v1484, %v1483
    %v1547 = vpack.c.b16 %v1486, %v1485
    %v1548 = vpack.c.b16 %v1488, %v1487
    %v1549 = vpack.c.b16 %v1490, %v1489
    %v1550 = vpack.c.b16 %v1492, %v1491
    %v1551 = vpack.c.b16 %v1494, %v1493
    %v1552 = vpack.c.b16 %v1496, %v1495
    %v1553 = vpack.c.b16 %v1498, %v1497
    %v1554 = vpack.c.b16 %v1500, %v1499
    %v1555 = vpack.c.b16 %v1502, %v1501
    %v1556 = vpack.c.b16 %v1504, %v1503
    %v1557 = vpack.c.b16 %v1506, %v1505
    %v1558 = vpack.c.b16 %v1508, %v1507
    %v1559 = vpack.c.b16 %v1510, %v1509
    %v1560 = vpack.c.b16 %v1512, %v1511
    %v1561 = vpack.c.b16 %v1514, %v1513
    %v1562 = vpack.c.b16 %v1516, %v1515
    %v1563 = vpack.c.b16 %v1518, %v1517
    %v1564 = vpack.c.b16 %v1520, %v1519
    %v1565 = vpack.c.b16 %v1522, %v1521
    %v1566 = vpack.c.b16 %v1524, %v1523
    %v1567 = vpack.c.b16 %v1526, %v1525
    %v1568 = vpack.c.b16 %v1528, %v1527
    %v1569 = vpack.c.b16 %v1530, %v1529
    %v1570 = vpack.c.b16 %v1532, %v1531
    %v1571 = vpack.c.b16 %v1534, %v1533
    %v1572 = vpack.c.b16 %v1536, %v1535
    %v1573 = vpack.c.b16 %v1538, %v1537
    %v1574 = vpack.c.b16 %v1540, %v1539
    %v1575 = vpack.c.b16 %v1542, %v1541
    %v1576 = vpack.c.b16 %v1544, %v1543
    %1609 = vmatprep.subr.bf16.mxu0 0
    %1610 = vmatpush1.bf16.msra.mxu0 %v1545
    %1611 = vmatprep.subr.bf16.mxu0 0
    %1612 = vmatpush1.bf16.msra.mxu0 %v1546
    %1613 = vmatprep.subr.bf16.mxu0 0
    %1614 = vmatpush1.bf16.msra.mxu0 %v1547
    %1615 = vmatprep.subr.bf16.mxu0 0
    %1616 = vmatpush1.bf16.msra.mxu0 %v1548
    %1617 = vmatprep.subr.bf16.mxu0 0
    %1618 = vmatpush1.bf16.msra.mxu0 %v1549
    %1619 = vmatprep.subr.bf16.mxu0 0
    %1620 = vmatpush1.bf16.msra.mxu0 %v1550
    %1621 = vmatprep.subr.bf16.mxu0 0
    %1622 = vmatpush1.bf16.msra.mxu0 %v1551
    %1623 = vmatprep.subr.bf16.mxu0 0
    %1624 = vmatpush1.bf16.msra.mxu0 %v1552
    %1625 = vmatprep.subr.bf16.mxu0 0
    %1626 = vmatpush1.bf16.msra.mxu0 %v1553
    %1627 = vmatprep.subr.bf16.mxu0 0
    %1628 = vmatpush1.bf16.msra.mxu0 %v1554
    %1629 = vmatprep.subr.bf16.mxu0 0
    %1630 = vmatpush1.bf16.msra.mxu0 %v1555
    %1631 = vmatprep.subr.bf16.mxu0 0
    %1632 = vmatpush1.bf16.msra.mxu0 %v1556
    %1633 = vmatprep.subr.bf16.mxu0 0
    %1634 = vmatpush1.bf16.msra.mxu0 %v1557
    %1635 = vmatprep.subr.bf16.mxu0 0
    %1636 = vmatpush1.bf16.msra.mxu0 %v1558
    %1637 = vmatprep.subr.bf16.mxu0 0
    %1638 = vmatpush1.bf16.msra.mxu0 %v1559
    %1639 = vmatprep.subr.bf16.mxu0 0
    %1640 = vmatpush1.bf16.msra.mxu0 %v1560
    %1641 = vmatprep.mubr.bf16.mxu0 %v1340
    %1642 = vmatmul.mubr.bf16.gmra.mrb[0].mxu0 %v1339
    %v1643 = vpop.f32.mrb[0].mxu0
    %v1644 = vadd.f32 %v1415, %v1643
    %v1645 = vpop.f32.mrb[0].mxu0
    %v1646 = vpop.f32.mrb[0].mxu0
    %v1647 = vadd.f32 %v1415, %v1646
    %v1648 = vpop.f32.mrb[0].mxu0
    %1649 = vmatprep.mubr.bf16.mxu0 %v1344
    %1650 = vmatmul.mubr.bf16.gmra.mrb[0].mxu0 %v1343
    %v1651 = vpop.f32.mrb[0].mxu0
    %v1652 = vadd.f32 %v1415, %v1651
    %v1653 = vpop.f32.mrb[0].mxu0
    %v1654 = vpop.f32.mrb[0].mxu0
    %v1655 = vpop.f32.mrb[0].mxu0
    %1656 = vdwg.mxu0
    %1657 = vmatprep.subr.bf16.mxu0 0
    %1658 = vmatpush1.bf16.msra.mxu0 %v1561
    %1659 = vmatprep.subr.bf16.mxu0 0
    %1660 = vmatpush1.bf16.msra.mxu0 %v1562
    %1661 = vmatprep.subr.bf16.mxu0 0
    %1662 = vmatpush1.bf16.msra.mxu0 %v1563
    %1663 = vmatprep.subr.bf16.mxu0 0
    %1664 = vmatpush1.bf16.msra.mxu0 %v1564
    %1665 = vmatprep.subr.bf16.mxu0 0
    %1666 = vmatpush1.bf16.msra.mxu0 %v1565
    %1667 = vmatprep.subr.bf16.mxu0 0
    %1668 = vmatpush1.bf16.msra.mxu0 %v1566
    %1669 = vmatprep.subr.bf16.mxu0 0
    %1670 = vmatpush1.bf16.msra.mxu0 %v1567
    %1671 = vmatprep.subr.bf16.mxu0 0
    %1672 = vmatpush1.bf16.msra.mxu0 %v1568
    %1673 = vmatprep.subr.bf16.mxu0 0
    %1674 = vmatpush1.bf16.msra.mxu0 %v1569
    %1675 = vmatprep.subr.bf16.mxu0 0
    %1676 = vmatpush1.bf16.msra.mxu0 %v1570
    %1677 = vmatprep.subr.bf16.mxu0 0
    %1678 = vmatpush1.bf16.msra.mxu0 %v1571
    %1679 = vmatprep.subr.bf16.mxu0 0
    %1680 = vmatpush1.bf16.msra.mxu0 %v1572
    %1681 = vmatprep.subr.bf16.mxu0 0
    %1682 = vmatpush1.bf16.msra.mxu0 %v1573
    %1683 = vmatprep.subr.bf16.mxu0 0
    %1684 = vmatpush1.bf16.msra.mxu0 %v1574
    %1685 = vmatprep.subr.bf16.mxu0 0
    %1686 = vmatpush1.bf16.msra.mxu0 %v1575
    %1687 = vmatprep.subr.bf16.mxu0 0
    %1688 = vmatpush1.bf16.msra.mxu0 %v1576
    %1689 = vmatprep.mubr.bf16.mxu0 %v1342
    %1690 = vmatmul.mubr.bf16.gmra.mrb[0].mxu0 %v1341
    %v1691 = vpop.f32.mrb[0].mxu0
    %v1692 = vadd.f32 %v1644, %v1691
    %v1693 = vpop.f32.mrb[0].mxu0
    %v1694 = vpop.f32.mrb[0].mxu0
    %v1695 = vadd.f32 %v1647, %v1694
    %v1696 = vpop.f32.mrb[0].mxu0
    %1697 = vmatprep.mubr.bf16.mxu0 %v1346
    %1698 = vmatmul.mubr.bf16.gmra.mrb[0].mxu0 %v1345
    %v1699 = vpop.f32.mrb[0].mxu0
    %v1700 = vadd.f32 %v1652, %v1699
    %v1701 = vpop.f32.mrb[0].mxu0
    %v1702 = vpop.f32.mrb[0].mxu0
    %v1703 = vpop.f32.mrb[0].mxu0
    %1704 = vdwg.mxu0
    %v1705 = vmax.f32 %v1692, 0.0
    %v1706 = vmax.f32 %v1695, 0.0
    %v1707 = vmax.f32 %v1700, 0.0
    %v1708 = vpack.c.bf16 %v1705, %v1705
    %v1709 = vld [vmem:[%s3] sm:$0xf]
    %v1710 = vld [vmem:[%s3 + $0x4] sm:$0xf]
    %v1711 = vld [vmem:[%s3 + $0x8] sm:$0xf]
    %v1712 = vld [vmem:[%s3 + $0xc] sm:$0xf]
    %v1713 = vld [vmem:[%s3 + $0x10] sm:$0xf]
    %v1714 = vld [vmem:[%s3 + $0x14] sm:$0xf]
    %v1715 = vld [vmem:[%s3 + $0x18] sm:$0xf]
    %v1716 = vld [vmem:[%s3 + $0x1c] sm:$0xf]
    %v1717 = vld [vmem:[%s3 + $0x20] sm:$0xf]
    %v1718 = vld [vmem:[%s3 + $0x24] sm:$0xf]
    %v1719 = vld [vmem:[%s3 + $0x28] sm:$0xf]
    %v1720 = vld [vmem:[%s3 + $0x2c] sm:$0xf]
    %v1721 = vld [vmem:[%s3 + $0x30] sm:$0xf]
    %v1722 = vld [vmem:[%s3 + $0x34] sm:$0xf]
    %v1723 = vld [vmem:[%s3 + $0x38] sm:$0xf]
    %v1724 = vld [vmem:[%s3 + $0x3c] sm:$0xf]
    %v1726 = vrot.slane %v1708, 1
    %v1735 = vunpack.c.l.b16 %v1717
    %v1736 = vunpack.c.l.b16 %v1718
    %v1737 = vunpack.c.l.b16 %v1719
    %v1738 = vunpack.c.l.b16 %v1720
    %v1739 = vunpack.c.l.b16 %v1721
    %v1740 = vunpack.c.l.b16 %v1722
    %v1741 = vunpack.c.l.b16 %v1723
    %v1742 = vunpack.c.l.b16 %v1724
    %v1743 = vpack.c.b16 %v1736, %v1735
    %v1744 = vpack.c.b16 %v1738, %v1737
    %v1745 = vpack.c.b16 %v1740, %v1739
    %v1746 = vpack.c.b16 %v1742, %v1741
    %v1752 = vsel %vm498, %v1726, 0
    %1754 = vmatprep.subr.bf16.mxu0 0
    %1755 = vmatpush1.bf16.msra.mxu0 %v1743
    %1756 = vmatprep.subr.bf16.mxu0 0
    %1757 = vmatpush1.bf16.msra.mxu0 %v1744
    %1758 = vmatprep.subr.bf16.mxu0 0
    %1759 = vmatpush1.bf16.msra.mxu0 %v1745
    %1760 = vmatprep.subr.bf16.mxu0 0
    %1761 = vmatpush1.bf16.msra.mxu0 %v1746
    %1762 = vmatprep.subr.bf16.mxu0 0
    %1763 = vmatpush1.bf16.msra.mxu0 0
    %1764 = vmatprep.subr.bf16.mxu0 0
    %1765 = vmatpush1.bf16.msra.mxu0 0
    %1766 = vmatprep.subr.bf16.mxu0 0
    %1767 = vmatpush1.bf16.msra.mxu0 0
    %1768 = vmatprep.subr.bf16.mxu0 0
    %1769 = vmatpush1.bf16.msra.mxu0 0
    %1770 = vmatprep.subr.bf16.mxu0 0
    %1771 = vmatpush1.bf16.msra.mxu0 0
    %1772 = vmatprep.subr.bf16.mxu0 0
    %1773 = vmatpush1.bf16.msra.mxu0 0
    %1774 = vmatprep.subr.bf16.mxu0 0
    %1775 = vmatpush1.bf16.msra.mxu0 0
    %1776 = vmatprep.subr.bf16.mxu0 0
    %1777 = vmatpush1.bf16.msra.mxu0 0
    %1778 = vmatprep.subr.bf16.mxu0 0
    %1779 = vmatpush1.bf16.msra.mxu0 0
    %1780 = vmatprep.subr.bf16.mxu0 0
    %1781 = vmatpush1.bf16.msra.mxu0 0
    %1782 = vmatprep.subr.bf16.mxu0 0
    %1783 = vmatpush1.bf16.msra.mxu0 0
    %1784 = vmatprep.subr.bf16.mxu0 0
    %1785 = vmatpush1.bf16.msra.mxu0 0
    %1786 = vmatprep.mubr.bf16.mxu0 0
    %1787 = vmatmul.mubr.bf16.gmra.mrb[0].mxu0 %v1752
    %v1788 = vpop.f32.mrb[0].mxu0
    %v1789 = vadd.f32 0.0, %v1788
    %v1790 = vpop.f32.mrb[0].mxu0
    %v1791 = vpop.f32.mrb[0].mxu0
    %v1792 = vpop.f32.mrb[0].mxu0
    %1793 = vdwg.mxu0
    %v1802 = vunpack.c.l.b16 %v1709
    %v1803 = vunpack.c.l.b16 %v1710
    %v1804 = vunpack.c.l.b16 %v1711
    %v1805 = vunpack.c.l.b16 %v1712
    %v1806 = vunpack.c.l.b16 %v1713
    %v1807 = vunpack.c.l.b16 %v1714
    %v1808 = vunpack.c.l.b16 %v1715
    %v1809 = vunpack.c.l.b16 %v1716
    %v1810 = vpack.c.b16 %v1803, %v1802
    %v1811 = vpack.c.b16 %v1805, %v1804
    %v1812 = vpack.c.b16 %v1807, %v1806
    %v1813 = vpack.c.b16 %v1809, %v1808
    %v1819 = vsel %vm498, %v1708, 0
    %1821 = vmatprep.subr.bf16.mxu0 0
    %1822 = vmatpush1.bf16.msra.mxu0 %v1810
    %1823 = vmatprep.subr.bf16.mxu0 0
    %1824 = vmatpush1.bf16.msra.mxu0 %v1811
    %1825 = vmatprep.subr.bf16.mxu0 0
    %1826 = vmatpush1.bf16.msra.mxu0 %v1812
    %1827 = vmatprep.subr.bf16.mxu0 0
    %1828 = vmatpush1.bf16.msra.mxu0 %v1813
    %1829 = vmatprep.subr.bf16.mxu0 0
    %1830 = vmatpush1.bf16.msra.mxu0 0
    %1831 = vmatprep.subr.bf16.mxu0 0
    %1832 = vmatpush1.bf16.msra.mxu0 0
    %1833 = vmatprep.subr.bf16.mxu0 0
    %1834 = vmatpush1.bf16.msra.mxu0 0
    %1835 = vmatprep.subr.bf16.mxu0 0
    %1836 = vmatpush1.bf16.msra.mxu0 0
    %1837 = vmatprep.subr.bf16.mxu0 0
    %1838 = vmatpush1.bf16.msra.mxu0 0
    %1839 = vmatprep.subr.bf16.mxu0 0
    %1840 = vmatpush1.bf16.msra.mxu0 0
    %1841 = vmatprep.subr.bf16.mxu0 0
    %1842 = vmatpush1.bf16.msra.mxu0 0
    %1843 = vmatprep.subr.bf16.mxu0 0
    %1844 = vmatpush1.bf16.msra.mxu0 0
    %1845 = vmatprep.subr.bf16.mxu0 0
    %1846 = vmatpush1.bf16.msra.mxu0 0
    %1847 = vmatprep.subr.bf16.mxu0 0
    %1848 = vmatpush1.bf16.msra.mxu0 0
    %1849 = vmatprep.subr.bf16.mxu0 0
    %1850 = vmatpush1.bf16.msra.mxu0 0
    %1851 = vmatprep.subr.bf16.mxu0 0
    %1852 = vmatpush1.bf16.msra.mxu0 0
    %1853 = vmatprep.mubr.bf16.mxu0 0
    %1854 = vmatmul.mubr.bf16.gmra.mrb[0].mxu0 %v1819
    %v1855 = vpop.f32.mrb[0].mxu0
    %v1856 = vadd.f32 %v1789, %v1855
    %v1857 = vpop.f32.mrb[0].mxu0
    %v1858 = vpop.f32.mrb[0].mxu0
    %v1859 = vpop.f32.mrb[0].mxu0
    %1860 = vdwg.mxu0
    %v1861 = vld [vmem:[%s3 + $0x40] sm:$0xf]
    %v1862 = vld [vmem:[%s3 + $0x44] sm:$0xf]
    %v1863 = vld [vmem:[%s3 + $0x48] sm:$0xf]
    %v1864 = vld [vmem:[%s3 + $0x4c] sm:$0xf]
    %v1865 = vld [vmem:[%s3 + $0x50] sm:$0xf]
    %v1866 = vld [vmem:[%s3 + $0x54] sm:$0xf]
    %v1867 = vld [vmem:[%s3 + $0x58] sm:$0xf]
    %v1868 = vld [vmem:[%s3 + $0x5c] sm:$0xf]
    %v1869 = vrot.slane %v1708, 2
    %v1878 = vunpack.c.l.b16 %v1861
    %v1879 = vunpack.c.l.b16 %v1862
    %v1880 = vunpack.c.l.b16 %v1863
    %v1881 = vunpack.c.l.b16 %v1864
    %v1882 = vunpack.c.l.b16 %v1865
    %v1883 = vunpack.c.l.b16 %v1866
    %v1884 = vunpack.c.l.b16 %v1867
    %v1885 = vunpack.c.l.b16 %v1868
    %v1886 = vpack.c.b16 %v1879, %v1878
    %v1887 = vpack.c.b16 %v1881, %v1880
    %v1888 = vpack.c.b16 %v1883, %v1882
    %v1889 = vpack.c.b16 %v1885, %v1884
    %v1895 = vsel %vm498, %v1869, 0
    %1897 = vmatprep.subr.bf16.mxu0 0
    %1898 = vmatpush1.bf16.msra.mxu0 %v1886
    %1899 = vmatprep.subr.bf16.mxu0 0
    %1900 = vmatpush1.bf16.msra.mxu0 %v1887
    %1901 = vmatprep.subr.bf16.mxu0 0
    %1902 = vmatpush1.bf16.msra.mxu0 %v1888
    %1903 = vmatprep.subr.bf16.mxu0 0
    %1904 = vmatpush1.bf16.msra.mxu0 %v1889
    %1905 = vmatprep.subr.bf16.mxu0 0
    %1906 = vmatpush1.bf16.msra.mxu0 0
    %1907 = vmatprep.subr.bf16.mxu0 0
    %1908 = vmatpush1.bf16.msra.mxu0 0
    %1909 = vmatprep.subr.bf16.mxu0 0
    %1910 = vmatpush1.bf16.msra.mxu0 0
    %1911 = vmatprep.subr.bf16.mxu0 0
    %1912 = vmatpush1.bf16.msra.mxu0 0
    %1913 = vmatprep.subr.bf16.mxu0 0
    %1914 = vmatpush1.bf16.msra.mxu0 0
    %1915 = vmatprep.subr.bf16.mxu0 0
    %1916 = vmatpush1.bf16.msra.mxu0 0
    %1917 = vmatprep.subr.bf16.mxu0 0
    %1918 = vmatpush1.bf16.msra.mxu0 0
    %1919 = vmatprep.subr.bf16.mxu0 0
    %1920 = vmatpush1.bf16.msra.mxu0 0
    %1921 = vmatprep.subr.bf16.mxu0 0
    %1922 = vmatpush1.bf16.msra.mxu0 0
    %1923 = vmatprep.subr.bf16.mxu0 0
    %1924 = vmatpush1.bf16.msra.mxu0 0
    %1925 = vmatprep.subr.bf16.mxu0 0
    %1926 = vmatpush1.bf16.msra.mxu0 0
    %1927 = vmatprep.subr.bf16.mxu0 0
    %1928 = vmatpush1.bf16.msra.mxu0 0
    %1929 = vmatprep.mubr.bf16.mxu0 0
    %1930 = vmatmul.mubr.bf16.gmra.mrb[0].mxu0 %v1895
    %v1931 = vpop.f32.mrb[0].mxu0
    %v1932 = vadd.f32 0.0, %v1931
    %v1933 = vpop.f32.mrb[0].mxu0
    %v1934 = vpop.f32.mrb[0].mxu0
    %v1935 = vpop.f32.mrb[0].mxu0
    %1936 = vdwg.mxu0
    %v1937 = vadd.f32 %v1856, %v1932
    %v1938 = vld [vmem:[%s3 + $0x60] sm:$0xf]
    %v1939 = vld [vmem:[%s3 + $0x64] sm:$0xf]
    %v1940 = vld [vmem:[%s3 + $0x68] sm:$0xf]
    %v1941 = vld [vmem:[%s3 + $0x6c] sm:$0xf]
    %v1942 = vld [vmem:[%s3 + $0x70] sm:$0xf]
    %v1943 = vld [vmem:[%s3 + $0x74] sm:$0xf]
    %v1944 = vld [vmem:[%s3 + $0x78] sm:$0xf]
    %v1945 = vld [vmem:[%s3 + $0x7c] sm:$0xf]
    %v1946 = vrot.slane %v1708, 3
    %v1955 = vunpack.c.l.b16 %v1938
    %v1956 = vunpack.c.l.b16 %v1939
    %v1957 = vunpack.c.l.b16 %v1940
    %v1958 = vunpack.c.l.b16 %v1941
    %v1959 = vunpack.c.l.b16 %v1942
    %v1960 = vunpack.c.l.b16 %v1943
    %v1961 = vunpack.c.l.b16 %v1944
    %v1962 = vunpack.c.l.b16 %v1945
    %v1963 = vpack.c.b16 %v1956, %v1955
    %v1964 = vpack.c.b16 %v1958, %v1957
    %v1965 = vpack.c.b16 %v1960, %v1959
    %v1966 = vpack.c.b16 %v1962, %v1961
    %v1972 = vsel %vm498, %v1946, 0
    %1974 = vmatprep.subr.bf16.mxu0 0
    %1975 = vmatpush1.bf16.msra.mxu0 %v1963
    %1976 = vmatprep.subr.bf16.mxu0 0
    %1977 = vmatpush1.bf16.msra.mxu0 %v1964
    %1978 = vmatprep.subr.bf16.mxu0 0
    %1979 = vmatpush1.bf16.msra.mxu0 %v1965
    %1980 = vmatprep.subr.bf16.mxu0 0
    %1981 = vmatpush1.bf16.msra.mxu0 %v1966
    %1982 = vmatprep.subr.bf16.mxu0 0
    %1983 = vmatpush1.bf16.msra.mxu0 0
    %1984 = vmatprep.subr.bf16.mxu0 0
    %1985 = vmatpush1.bf16.msra.mxu0 0
    %1986 = vmatprep.subr.bf16.mxu0 0
    %1987 = vmatpush1.bf16.msra.mxu0 0
    %1988 = vmatprep.subr.bf16.mxu0 0
    %1989 = vmatpush1.bf16.msra.mxu0 0
    %1990 = vmatprep.subr.bf16.mxu0 0
    %1991 = vmatpush1.bf16.msra.mxu0 0
    %1992 = vmatprep.subr.bf16.mxu0 0
    %1993 = vmatpush1.bf16.msra.mxu0 0
    %1994 = vmatprep.subr.bf16.mxu0 0
    %1995 = vmatpush1.bf16.msra.mxu0 0
    %1996 = vmatprep.subr.bf16.mxu0 0
    %1997 = vmatpush1.bf16.msra.mxu0 0
    %1998 = vmatprep.subr.bf16.mxu0 0
    %1999 = vmatpush1.bf16.msra.mxu0 0
    %2000 = vmatprep.subr.bf16.mxu0 0
    %2001 = vmatpush1.bf16.msra.mxu0 0
    %2002 = vmatprep.subr.bf16.mxu0 0
    %2003 = vmatpush1.bf16.msra.mxu0 0
    %2004 = vmatprep.subr.bf16.mxu0 0
    %2005 = vmatpush1.bf16.msra.mxu0 0
    %2006 = vmatprep.mubr.bf16.mxu0 0
    %2007 = vmatmul.mubr.bf16.gmra.mrb[0].mxu0 %v1972
    %v2008 = vpop.f32.mrb[0].mxu0
    %v2009 = vadd.f32 0.0, %v2008
    %v2010 = vpop.f32.mrb[0].mxu0
    %v2011 = vpop.f32.mrb[0].mxu0
    %v2012 = vpop.f32.mrb[0].mxu0
    %2013 = vdwg.mxu0
    %v2014 = vadd.f32 %v1937, %v2009
    %v2015 = vpack.c.bf16 %v1706, %v1706
    %v2016 = vld [vmem:[%s3 + $0x80] sm:$0xf]
    %v2017 = vld [vmem:[%s3 + $0x84] sm:$0xf]
    %v2018 = vld [vmem:[%s3 + $0x88] sm:$0xf]
    %v2019 = vld [vmem:[%s3 + $0x8c] sm:$0xf]
    %v2020 = vld [vmem:[%s3 + $0x90] sm:$0xf]
    %v2021 = vld [vmem:[%s3 + $0x94] sm:$0xf]
    %v2022 = vld [vmem:[%s3 + $0x98] sm:$0xf]
    %v2023 = vld [vmem:[%s3 + $0x9c] sm:$0xf]
    %v2032 = vunpack.c.l.b16 %v2016
    %v2033 = vunpack.c.l.b16 %v2017
    %v2034 = vunpack.c.l.b16 %v2018
    %v2035 = vunpack.c.l.b16 %v2019
    %v2036 = vunpack.c.l.b16 %v2020
    %v2037 = vunpack.c.l.b16 %v2021
    %v2038 = vunpack.c.l.b16 %v2022
    %v2039 = vunpack.c.l.b16 %v2023
    %v2040 = vpack.c.b16 %v2033, %v2032
    %v2041 = vpack.c.b16 %v2035, %v2034
    %v2042 = vpack.c.b16 %v2037, %v2036
    %v2043 = vpack.c.b16 %v2039, %v2038
    %v2049 = vsel %vm498, %v2015, 0
    %2051 = vmatprep.subr.bf16.mxu0 0
    %2052 = vmatpush1.bf16.msra.mxu0 %v2040
    %2053 = vmatprep.subr.bf16.mxu0 0
    %2054 = vmatpush1.bf16.msra.mxu0 %v2041
    %2055 = vmatprep.subr.bf16.mxu0 0
    %2056 = vmatpush1.bf16.msra.mxu0 %v2042
    %2057 = vmatprep.subr.bf16.mxu0 0
    %2058 = vmatpush1.bf16.msra.mxu0 %v2043
    %2059 = vmatprep.subr.bf16.mxu0 0
    %2060 = vmatpush1.bf16.msra.mxu0 0
    %2061 = vmatprep.subr.bf16.mxu0 0
    %2062 = vmatpush1.bf16.msra.mxu0 0
    %2063 = vmatprep.subr.bf16.mxu0 0
    %2064 = vmatpush1.bf16.msra.mxu0 0
    %2065 = vmatprep.subr.bf16.mxu0 0
    %2066 = vmatpush1.bf16.msra.mxu0 0
    %2067 = vmatprep.subr.bf16.mxu0 0
    %2068 = vmatpush1.bf16.msra.mxu0 0
    %2069 = vmatprep.subr.bf16.mxu0 0
    %2070 = vmatpush1.bf16.msra.mxu0 0
    %2071 = vmatprep.subr.bf16.mxu0 0
    %2072 = vmatpush1.bf16.msra.mxu0 0
    %2073 = vmatprep.subr.bf16.mxu0 0
    %2074 = vmatpush1.bf16.msra.mxu0 0
    %2075 = vmatprep.subr.bf16.mxu0 0
    %2076 = vmatpush1.bf16.msra.mxu0 0
    %2077 = vmatprep.subr.bf16.mxu0 0
    %2078 = vmatpush1.bf16.msra.mxu0 0
    %2079 = vmatprep.subr.bf16.mxu0 0
    %2080 = vmatpush1.bf16.msra.mxu0 0
    %2081 = vmatprep.subr.bf16.mxu0 0
    %2082 = vmatpush1.bf16.msra.mxu0 0
    %2083 = vmatprep.mubr.bf16.mxu0 0
    %2084 = vmatmul.mubr.bf16.gmra.mrb[0].mxu0 %v2049
    %v2085 = vpop.f32.mrb[0].mxu0
    %v2086 = vadd.f32 0.0, %v2085
    %v2087 = vpop.f32.mrb[0].mxu0
    %v2088 = vpop.f32.mrb[0].mxu0
    %v2089 = vpop.f32.mrb[0].mxu0
    %2090 = vdwg.mxu0
    %v2091 = vadd.f32 %v2014, %v2086
    %v2092 = vld [vmem:[%s3 + $0xa0] sm:$0xf]
    %v2093 = vld [vmem:[%s3 + $0xa4] sm:$0xf]
    %v2094 = vld [vmem:[%s3 + $0xa8] sm:$0xf]
    %v2095 = vld [vmem:[%s3 + $0xac] sm:$0xf]
    %v2096 = vld [vmem:[%s3 + $0xb0] sm:$0xf]
    %v2097 = vld [vmem:[%s3 + $0xb4] sm:$0xf]
    %v2098 = vld [vmem:[%s3 + $0xb8] sm:$0xf]
    %v2099 = vld [vmem:[%s3 + $0xbc] sm:$0xf]
    %v2101 = vrot.slane %v2015, 1
    %v2110 = vunpack.c.l.b16 %v2092
    %v2111 = vunpack.c.l.b16 %v2093
    %v2112 = vunpack.c.l.b16 %v2094
    %v2113 = vunpack.c.l.b16 %v2095
    %v2114 = vunpack.c.l.b16 %v2096
    %v2115 = vunpack.c.l.b16 %v2097
    %v2116 = vunpack.c.l.b16 %v2098
    %v2117 = vunpack.c.l.b16 %v2099
    %v2118 = vpack.c.b16 %v2111, %v2110
    %v2119 = vpack.c.b16 %v2113, %v2112
    %v2120 = vpack.c.b16 %v2115, %v2114
    %v2121 = vpack.c.b16 %v2117, %v2116
    %v2127 = vsel %vm498, %v2101, 0
    %2129 = vmatprep.subr.bf16.mxu0 0
    %2130 = vmatpush1.bf16.msra.mxu0 %v2118
    %2131 = vmatprep.subr.bf16.mxu0 0
    %2132 = vmatpush1.bf16.msra.mxu0 %v2119
    %2133 = vmatprep.subr.bf16.mxu0 0
    %2134 = vmatpush1.bf16.msra.mxu0 %v2120
    %2135 = vmatprep.subr.bf16.mxu0 0
    %2136 = vmatpush1.bf16.msra.mxu0 %v2121
    %2137 = vmatprep.subr.bf16.mxu0 0
    %2138 = vmatpush1.bf16.msra.mxu0 0
    %2139 = vmatprep.subr.bf16.mxu0 0
    %2140 = vmatpush1.bf16.msra.mxu0 0
    %2141 = vmatprep.subr.bf16.mxu0 0
    %2142 = vmatpush1.bf16.msra.mxu0 0
    %2143 = vmatprep.subr.bf16.mxu0 0
    %2144 = vmatpush1.bf16.msra.mxu0 0
    %2145 = vmatprep.subr.bf16.mxu0 0
    %2146 = vmatpush1.bf16.msra.mxu0 0
    %2147 = vmatprep.subr.bf16.mxu0 0
    %2148 = vmatpush1.bf16.msra.mxu0 0
    %2149 = vmatprep.subr.bf16.mxu0 0
    %2150 = vmatpush1.bf16.msra.mxu0 0
    %2151 = vmatprep.subr.bf16.mxu0 0
    %2152 = vmatpush1.bf16.msra.mxu0 0
    %2153 = vmatprep.subr.bf16.mxu0 0
    %2154 = vmatpush1.bf16.msra.mxu0 0
    %2155 = vmatprep.subr.bf16.mxu0 0
    %2156 = vmatpush1.bf16.msra.mxu0 0
    %2157 = vmatprep.subr.bf16.mxu0 0
    %2158 = vmatpush1.bf16.msra.mxu0 0
    %2159 = vmatprep.subr.bf16.mxu0 0
    %2160 = vmatpush1.bf16.msra.mxu0 0
    %2161 = vmatprep.mubr.bf16.mxu0 0
    %2162 = vmatmul.mubr.bf16.gmra.mrb[0].mxu0 %v2127
    %v2163 = vpop.f32.mrb[0].mxu0
    %v2164 = vadd.f32 0.0, %v2163
    %v2165 = vpop.f32.mrb[0].mxu0
    %v2166 = vpop.f32.mrb[0].mxu0
    %v2167 = vpop.f32.mrb[0].mxu0
    %2168 = vdwg.mxu0
    %v2169 = vadd.f32 %v2091, %v2164
    %v2170 = vld [vmem:[%s3 + $0xc0] sm:$0xf]
    %v2171 = vld [vmem:[%s3 + $0xc4] sm:$0xf]
    %v2172 = vld [vmem:[%s3 + $0xc8] sm:$0xf]
    %v2173 = vld [vmem:[%s3 + $0xcc] sm:$0xf]
    %v2174 = vld [vmem:[%s3 + $0xd0] sm:$0xf]
    %v2175 = vld [vmem:[%s3 + $0xd4] sm:$0xf]
    %v2176 = vld [vmem:[%s3 + $0xd8] sm:$0xf]
    %v2177 = vld [vmem:[%s3 + $0xdc] sm:$0xf]
    %v2178 = vrot.slane %v2015, 2
    %v2187 = vunpack.c.l.b16 %v2170
    %v2188 = vunpack.c.l.b16 %v2171
    %v2189 = vunpack.c.l.b16 %v2172
    %v2190 = vunpack.c.l.b16 %v2173
    %v2191 = vunpack.c.l.b16 %v2174
    %v2192 = vunpack.c.l.b16 %v2175
    %v2193 = vunpack.c.l.b16 %v2176
    %v2194 = vunpack.c.l.b16 %v2177
    %v2195 = vpack.c.b16 %v2188, %v2187
    %v2196 = vpack.c.b16 %v2190, %v2189
    %v2197 = vpack.c.b16 %v2192, %v2191
    %v2198 = vpack.c.b16 %v2194, %v2193
    %v2204 = vsel %vm498, %v2178, 0
    %2206 = vmatprep.subr.bf16.mxu0 0
    %2207 = vmatpush1.bf16.msra.mxu0 %v2195
    %2208 = vmatprep.subr.bf16.mxu0 0
    %2209 = vmatpush1.bf16.msra.mxu0 %v2196
    %2210 = vmatprep.subr.bf16.mxu0 0
    %2211 = vmatpush1.bf16.msra.mxu0 %v2197
    %2212 = vmatprep.subr.bf16.mxu0 0
    %2213 = vmatpush1.bf16.msra.mxu0 %v2198
    %2214 = vmatprep.subr.bf16.mxu0 0
    %2215 = vmatpush1.bf16.msra.mxu0 0
    %2216 = vmatprep.subr.bf16.mxu0 0
    %2217 = vmatpush1.bf16.msra.mxu0 0
    %2218 = vmatprep.subr.bf16.mxu0 0
    %2219 = vmatpush1.bf16.msra.mxu0 0
    %2220 = vmatprep.subr.bf16.mxu0 0
    %2221 = vmatpush1.bf16.msra.mxu0 0
    %2222 = vmatprep.subr.bf16.mxu0 0
    %2223 = vmatpush1.bf16.msra.mxu0 0
    %2224 = vmatprep.subr.bf16.mxu0 0
    %2225 = vmatpush1.bf16.msra.mxu0 0
    %2226 = vmatprep.subr.bf16.mxu0 0
    %2227 = vmatpush1.bf16.msra.mxu0 0
    %2228 = vmatprep.subr.bf16.mxu0 0
    %2229 = vmatpush1.bf16.msra.mxu0 0
    %2230 = vmatprep.subr.bf16.mxu0 0
    %2231 = vmatpush1.bf16.msra.mxu0 0
    %2232 = vmatprep.subr.bf16.mxu0 0
    %2233 = vmatpush1.bf16.msra.mxu0 0
    %2234 = vmatprep.subr.bf16.mxu0 0
    %2235 = vmatpush1.bf16.msra.mxu0 0
    %2236 = vmatprep.subr.bf16.mxu0 0
    %2237 = vmatpush1.bf16.msra.mxu0 0
    %2238 = vmatprep.mubr.bf16.mxu0 0
    %2239 = vmatmul.mubr.bf16.gmra.mrb[0].mxu0 %v2204
    %v2240 = vpop.f32.mrb[0].mxu0
    %v2241 = vadd.f32 0.0, %v2240
    %v2242 = vpop.f32.mrb[0].mxu0
    %v2243 = vpop.f32.mrb[0].mxu0
    %v2244 = vpop.f32.mrb[0].mxu0
    %2245 = vdwg.mxu0
    %v2246 = vadd.f32 %v2169, %v2241
    %v2247 = vld [vmem:[%s3 + $0xe0] sm:$0xf]
    %v2248 = vld [vmem:[%s3 + $0xe4] sm:$0xf]
    %v2249 = vld [vmem:[%s3 + $0xe8] sm:$0xf]
    %v2250 = vld [vmem:[%s3 + $0xec] sm:$0xf]
    %v2251 = vld [vmem:[%s3 + $0xf0] sm:$0xf]
    %v2252 = vld [vmem:[%s3 + $0xf4] sm:$0xf]
    %v2253 = vld [vmem:[%s3 + $0xf8] sm:$0xf]
    %v2254 = vld [vmem:[%s3 + $0xfc] sm:$0xf]
    %v2255 = vrot.slane %v2015, 3
    %v2264 = vunpack.c.l.b16 %v2247
    %v2265 = vunpack.c.l.b16 %v2248
    %v2266 = vunpack.c.l.b16 %v2249
    %v2267 = vunpack.c.l.b16 %v2250
    %v2268 = vunpack.c.l.b16 %v2251
    %v2269 = vunpack.c.l.b16 %v2252
    %v2270 = vunpack.c.l.b16 %v2253
    %v2271 = vunpack.c.l.b16 %v2254
    %v2272 = vpack.c.b16 %v2265, %v2264
    %v2273 = vpack.c.b16 %v2267, %v2266
    %v2274 = vpack.c.b16 %v2269, %v2268
    %v2275 = vpack.c.b16 %v2271, %v2270
    %v2281 = vsel %vm498, %v2255, 0
    %2283 = vmatprep.subr.bf16.mxu0 0
    %2284 = vmatpush1.bf16.msra.mxu0 %v2272
    %2285 = vmatprep.subr.bf16.mxu0 0
    %2286 = vmatpush1.bf16.msra.mxu0 %v2273
    %2287 = vmatprep.subr.bf16.mxu0 0
    %2288 = vmatpush1.bf16.msra.mxu0 %v2274
    %2289 = vmatprep.subr.bf16.mxu0 0
    %2290 = vmatpush1.bf16.msra.mxu0 %v2275
    %2291 = vmatprep.subr.bf16.mxu0 0
    %2292 = vmatpush1.bf16.msra.mxu0 0
    %2293 = vmatprep.subr.bf16.mxu0 0
    %2294 = vmatpush1.bf16.msra.mxu0 0
    %2295 = vmatprep.subr.bf16.mxu0 0
    %2296 = vmatpush1.bf16.msra.mxu0 0
    %2297 = vmatprep.subr.bf16.mxu0 0
    %2298 = vmatpush1.bf16.msra.mxu0 0
    %2299 = vmatprep.subr.bf16.mxu0 0
    %2300 = vmatpush1.bf16.msra.mxu0 0
    %2301 = vmatprep.subr.bf16.mxu0 0
    %2302 = vmatpush1.bf16.msra.mxu0 0
    %2303 = vmatprep.subr.bf16.mxu0 0
    %2304 = vmatpush1.bf16.msra.mxu0 0
    %2305 = vmatprep.subr.bf16.mxu0 0
    %2306 = vmatpush1.bf16.msra.mxu0 0
    %2307 = vmatprep.subr.bf16.mxu0 0
    %2308 = vmatpush1.bf16.msra.mxu0 0
    %2309 = vmatprep.subr.bf16.mxu0 0
    %2310 = vmatpush1.bf16.msra.mxu0 0
    %2311 = vmatprep.subr.bf16.mxu0 0
    %2312 = vmatpush1.bf16.msra.mxu0 0
    %2313 = vmatprep.subr.bf16.mxu0 0
    %2314 = vmatpush1.bf16.msra.mxu0 0
    %2315 = vmatprep.mubr.bf16.mxu0 0
    %2316 = vmatmul.mubr.bf16.gmra.mrb[0].mxu0 %v2281
    %v2317 = vpop.f32.mrb[0].mxu0
    %v2318 = vadd.f32 0.0, %v2317
    %v2319 = vpop.f32.mrb[0].mxu0
    %v2320 = vpop.f32.mrb[0].mxu0
    %v2321 = vpop.f32.mrb[0].mxu0
    %2322 = vdwg.mxu0
    %v2323 = vadd.f32 %v2246, %v2318
    %v2324 = vpack.c.bf16 %v1707, %v1707
    %v2325 = vld [vmem:[%s3 + $0x100] sm:$0xf]
    %v2326 = vld [vmem:[%s3 + $0x104] sm:$0xf]
    %v2327 = vld [vmem:[%s3 + $0x108] sm:$0xf]
    %v2328 = vld [vmem:[%s3 + $0x10c] sm:$0xf]
    %v2329 = vld [vmem:[%s3 + $0x110] sm:$0xf]
    %v2330 = vld [vmem:[%s3 + $0x114] sm:$0xf]
    %v2331 = vld [vmem:[%s3 + $0x118] sm:$0xf]
    %v2332 = vld [vmem:[%s3 + $0x11c] sm:$0xf]
    %v2341 = vunpack.c.l.b16 %v2325
    %v2342 = vunpack.c.l.b16 %v2326
    %v2343 = vunpack.c.l.b16 %v2327
    %v2344 = vunpack.c.l.b16 %v2328
    %v2345 = vunpack.c.l.b16 %v2329
    %v2346 = vunpack.c.l.b16 %v2330
    %v2347 = vunpack.c.l.b16 %v2331
    %v2348 = vunpack.c.l.b16 %v2332
    %v2349 = vpack.c.b16 %v2342, %v2341
    %v2350 = vpack.c.b16 %v2344, %v2343
    %v2351 = vpack.c.b16 %v2346, %v2345
    %v2352 = vpack.c.b16 %v2348, %v2347
    %v2358 = vsel %vm498, %v2324, 0
    %2360 = vmatprep.subr.bf16.mxu0 0
    %2361 = vmatpush1.bf16.msra.mxu0 %v2349
    %2362 = vmatprep.subr.bf16.mxu0 0
    %2363 = vmatpush1.bf16.msra.mxu0 %v2350
    %2364 = vmatprep.subr.bf16.mxu0 0
    %2365 = vmatpush1.bf16.msra.mxu0 %v2351
    %2366 = vmatprep.subr.bf16.mxu0 0
    %2367 = vmatpush1.bf16.msra.mxu0 %v2352
    %2368 = vmatprep.subr.bf16.mxu0 0
    %2369 = vmatpush1.bf16.msra.mxu0 0
    %2370 = vmatprep.subr.bf16.mxu0 0
    %2371 = vmatpush1.bf16.msra.mxu0 0
    %2372 = vmatprep.subr.bf16.mxu0 0
    %2373 = vmatpush1.bf16.msra.mxu0 0
    %2374 = vmatprep.subr.bf16.mxu0 0
    %2375 = vmatpush1.bf16.msra.mxu0 0
    %2376 = vmatprep.subr.bf16.mxu0 0
    %2377 = vmatpush1.bf16.msra.mxu0 0
    %2378 = vmatprep.subr.bf16.mxu0 0
    %2379 = vmatpush1.bf16.msra.mxu0 0
    %2380 = vmatprep.subr.bf16.mxu0 0
    %2381 = vmatpush1.bf16.msra.mxu0 0
    %2382 = vmatprep.subr.bf16.mxu0 0
    %2383 = vmatpush1.bf16.msra.mxu0 0
    %2384 = vmatprep.subr.bf16.mxu0 0
    %2385 = vmatpush1.bf16.msra.mxu0 0
    %2386 = vmatprep.subr.bf16.mxu0 0
    %2387 = vmatpush1.bf16.msra.mxu0 0
    %2388 = vmatprep.subr.bf16.mxu0 0
    %2389 = vmatpush1.bf16.msra.mxu0 0
    %2390 = vmatprep.subr.bf16.mxu0 0
    %2391 = vmatpush1.bf16.msra.mxu0 0
    %2392 = vmatprep.mubr.bf16.mxu0 0
    %2393 = vmatmul.mubr.bf16.gmra.mrb[0].mxu0 %v2358
    %v2394 = vpop.f32.mrb[0].mxu0
    %v2395 = vadd.f32 0.0, %v2394
    %v2396 = vpop.f32.mrb[0].mxu0
    %v2397 = vpop.f32.mrb[0].mxu0
    %v2398 = vpop.f32.mrb[0].mxu0
    %2399 = vdwg.mxu0
    %v2400 = vadd.f32 %v2323, %v2395
    %v2402 = vlaneseq
    %v2403 = vshrl.u32 %v2402, 7
    %v2404 = vsub.s32 0, %v2403
    %v2405 = vrot.slane %v30, %v2404
    %v2407 = vadd.f32 %v2400, %v2405
    %v2408 = vmax.f32 %v2407, 0.0
    %v2409 = vpack.c.bf16 %v2408, %v2408
    %v2410 = vld [vmem:[%s4] sm:$0xff]
    %v2411 = vld [vmem:[%s4 + $0x8] sm:$0xff]
    %v2412 = vld [vmem:[%s4 + $0x10] sm:$0xff]
    %v2413 = vld [vmem:[%s4 + $0x18] sm:$0xff]
    %v2414 = vld [vmem:[%s4 + $0x20] sm:$0xff]
    %v2415 = vld [vmem:[%s4 + $0x28] sm:$0xff]
    %v2416 = vld [vmem:[%s4 + $0x30] sm:$0xff]
    %v2417 = vld [vmem:[%s4 + $0x38] sm:$0xff]
    %v2418 = vld [vmem:[%s4 + $0x40] sm:$0xff]
    %v2419 = vld [vmem:[%s4 + $0x48] sm:$0xff]
    %v2420 = vld [vmem:[%s4 + $0x50] sm:$0xff]
    %v2421 = vld [vmem:[%s4 + $0x58] sm:$0xff]
    %v2422 = vld [vmem:[%s4 + $0x60] sm:$0xff]
    %v2423 = vld [vmem:[%s4 + $0x68] sm:$0xff]
    %v2424 = vld [vmem:[%s4 + $0x70] sm:$0xff]
    %v2425 = vld [vmem:[%s4 + $0x78] sm:$0xff]
    %v2426 = vld [vmem:[%s4 + $0x80] sm:$0xff]
    %v2427 = vld [vmem:[%s4 + $0x88] sm:$0xff]
    %v2428 = vld [vmem:[%s4 + $0x90] sm:$0xff]
    %v2429 = vld [vmem:[%s4 + $0x98] sm:$0xff]
    %v2430 = vld [vmem:[%s4 + $0xa0] sm:$0xff]
    %v2431 = vld [vmem:[%s4 + $0xa8] sm:$0xff]
    %v2432 = vld [vmem:[%s4 + $0xb0] sm:$0xff]
    %v2433 = vld [vmem:[%s4 + $0xb8] sm:$0xff]
    %v2434 = vld [vmem:[%s4 + $0xc0] sm:$0xff]
    %v2435 = vld [vmem:[%s4 + $0xc8] sm:$0xff]
    %v2436 = vld [vmem:[%s4 + $0xd0] sm:$0xff]
    %v2437 = vld [vmem:[%s4 + $0xd8] sm:$0xff]
    %v2438 = vld [vmem:[%s4 + $0xe0] sm:$0xff]
    %v2439 = vld [vmem:[%s4 + $0xe8] sm:$0xff]
    %v2440 = vld [vmem:[%s4 + $0xf0] sm:$0xff]
    %v2441 = vld [vmem:[%s4 + $0xf8] sm:$0xff]
    %v2443 = vlaneseq
    %v2444 = vshrl.u32 %v2443, 7
    %v2445 = vsub.s32 0, %v2444
    %v2446 = vrot.slane %v31, %v2445
    %v2447 = vlaneseq
    %v2448 = vshrl.u32 %v2447, 7
    %v2449 = vsub.s32 1, %v2448
    %v2450 = vrot.slane %v31, %v2449
    %v2451 = vlaneseq
    %v2452 = vshrl.u32 %v2451, 7
    %v2453 = vsub.s32 2, %v2452
    %v2454 = vrot.slane %v31, %v2453
    %v2455 = vlaneseq
    %v2456 = vshrl.u32 %v2455, 7
    %v2457 = vsub.s32 3, %v2456
    %v2458 = vrot.slane %v31, %v2457
    %v2459 = vlaneseq
    %v2460 = vshrl.u32 %v2459, 7
    %v2461 = vsub.s32 4, %v2460
    %v2462 = vrot.slane %v31, %v2461
    %v2463 = vlaneseq
    %v2464 = vshrl.u32 %v2463, 7
    %v2465 = vsub.s32 5, %v2464
    %v2466 = vrot.slane %v31, %v2465
    %v2467 = vlaneseq
    %v2468 = vshrl.u32 %v2467, 7
    %v2469 = vsub.s32 6, %v2468
    %v2470 = vrot.slane %v31, %v2469
    %v2471 = vlaneseq
    %v2472 = vshrl.u32 %v2471, 7
    %v2473 = vsub.s32 7, %v2472
    %v2474 = vrot.slane %v31, %v2473
    %v2515 = vunpack.c.l.b16 %v2410
    %v2516 = vunpack.c.h.b16 %v2410
    %v2517 = vunpack.c.l.b16 %v2411
    %v2518 = vunpack.c.h.b16 %v2411
    %v2519 = vunpack.c.l.b16 %v2412
    %v2520 = vunpack.c.h.b16 %v2412
    %v2521 = vunpack.c.l.b16 %v2413
    %v2522 = vunpack.c.h.b16 %v2413
    %v2523 = vunpack.c.l.b16 %v2414
    %v2524 = vunpack.c.h.b16 %v2414
    %v2525 = vunpack.c.l.b16 %v2415
    %v2526 = vunpack.c.h.b16 %v2415
    %v2527 = vunpack.c.l.b16 %v2416
    %v2528 = vunpack.c.h.b16 %v2416
    %v2529 = vunpack.c.l.b16 %v2417
    %v2530 = vunpack.c.h.b16 %v2417
    %v2531 = vunpack.c.l.b16 %v2418
    %v2532 = vunpack.c.h.b16 %v2418
    %v2533 = vunpack.c.l.b16 %v2419
    %v2534 = vunpack.c.h.b16 %v2419
    %v2535 = vunpack.c.l.b16 %v2420
    %v2536 = vunpack.c.h.b16 %v2420
    %v2537 = vunpack.c.l.b16 %v2421
    %v2538 = vunpack.c.h.b16 %v2421
    %v2539 = vunpack.c.l.b16 %v2422
    %v2540 = vunpack.c.h.b16 %v2422
    %v2541 = vunpack.c.l.b16 %v2423
    %v2542 = vunpack.c.h.b16 %v2423
    %v2543 = vunpack.c.l.b16 %v2424
    %v2544 = vunpack.c.h.b16 %v2424
    %v2545 = vunpack.c.l.b16 %v2425
    %v2546 = vunpack.c.h.b16 %v2425
    %v2547 = vunpack.c.l.b16 %v2426
    %v2548 = vunpack.c.h.b16 %v2426
    %v2549 = vunpack.c.l.b16 %v2427
    %v2550 = vunpack.c.h.b16 %v2427
    %v2551 = vunpack.c.l.b16 %v2428
    %v2552 = vunpack.c.h.b16 %v2428
    %v2553 = vunpack.c.l.b16 %v2429
    %v2554 = vunpack.c.h.b16 %v2429
    %v2555 = vunpack.c.l.b16 %v2430
    %v2556 = vunpack.c.h.b16 %v2430
    %v2557 = vunpack.c.l.b16 %v2431
    %v2558 = vunpack.c.h.b16 %v2431
    %v2559 = vunpack.c.l.b16 %v2432
    %v2560 = vunpack.c.h.b16 %v2432
    %v2561 = vunpack.c.l.b16 %v2433
    %v2562 = vunpack.c.h.b16 %v2433
    %v2563 = vunpack.c.l.b16 %v2434
    %v2564 = vunpack.c.h.b16 %v2434
    %v2565 = vunpack.c.l.b16 %v2435
    %v2566 = vunpack.c.h.b16 %v2435
    %v2567 = vunpack.c.l.b16 %v2436
    %v2568 = vunpack.c.h.b16 %v2436
    %v2569 = vunpack.c.l.b16 %v2437
    %v2570 = vunpack.c.h.b16 %v2437
    %v2571 = vunpack.c.l.b16 %v2438
    %v2572 = vunpack.c.h.b16 %v2438
    %v2573 = vunpack.c.l.b16 %v2439
    %v2574 = vunpack.c.h.b16 %v2439
    %v2575 = vunpack.c.l.b16 %v2440
    %v2576 = vunpack.c.h.b16 %v2440
    %v2577 = vunpack.c.l.b16 %v2441
    %v2578 = vunpack.c.h.b16 %v2441
    %v2579 = vpack.c.b16 %v2523, %v2515
    %v2580 = vpack.c.b16 %v2524, %v2516
    %v2581 = vpack.c.b16 %v2525, %v2517
    %v2582 = vpack.c.b16 %v2526, %v2518
    %v2583 = vpack.c.b16 %v2527, %v2519
    %v2584 = vpack.c.b16 %v2528, %v2520
    %v2585 = vpack.c.b16 %v2529, %v2521
    %v2586 = vpack.c.b16 %v2530, %v2522
    %v2587 = vpack.c.b16 %v2539, %v2531
    %v2588 = vpack.c.b16 %v2540, %v2532
    %v2589 = vpack.c.b16 %v2541, %v2533
    %v2590 = vpack.c.b16 %v2542, %v2534
    %v2591 = vpack.c.b16 %v2543, %v2535
    %v2592 = vpack.c.b16 %v2544, %v2536
    %v2593 = vpack.c.b16 %v2545, %v2537
    %v2594 = vpack.c.b16 %v2546, %v2538
    %v2595 = vpack.c.b16 %v2555, %v2547
    %v2596 = vpack.c.b16 %v2556, %v2548
    %v2597 = vpack.c.b16 %v2557, %v2549
    %v2598 = vpack.c.b16 %v2558, %v2550
    %v2599 = vpack.c.b16 %v2559, %v2551
    %v2600 = vpack.c.b16 %v2560, %v2552
    %v2601 = vpack.c.b16 %v2561, %v2553
    %v2602 = vpack.c.b16 %v2562, %v2554
    %v2603 = vpack.c.b16 %v2571, %v2563
    %v2604 = vpack.c.b16 %v2572, %v2564
    %v2605 = vpack.c.b16 %v2573, %v2565
    %v2606 = vpack.c.b16 %v2574, %v2566
    %v2607 = vpack.c.b16 %v2575, %v2567
    %v2608 = vpack.c.b16 %v2576, %v2568
    %v2609 = vpack.c.b16 %v2577, %v2569
    %v2610 = vpack.c.b16 %v2578, %v2570
    %v2644 = vsel %vm498, %v2409, 0
    %2646 = vmatprep.subr.bf16.mxu0 %v2580
    %2647 = vmatpush1.bf16.msra.mxu0 %v2579
    %2648 = vmatprep.subr.bf16.mxu0 %v2588
    %2649 = vmatpush1.bf16.msra.mxu0 %v2587
    %2650 = vmatprep.subr.bf16.mxu0 %v2596
    %2651 = vmatpush1.bf16.msra.mxu0 %v2595
    %2652 = vmatprep.subr.bf16.mxu0 %v2604
    %2653 = vmatpush1.bf16.msra.mxu0 %v2603
    %2654 = vmatprep.subr.bf16.mxu0 0
    %2655 = vmatpush1.bf16.msra.mxu0 0
    %2656 = vmatprep.subr.bf16.mxu0 0
    %2657 = vmatpush1.bf16.msra.mxu0 0
    %2658 = vmatprep.subr.bf16.mxu0 0
    %2659 = vmatpush1.bf16.msra.mxu0 0
    %2660 = vmatprep.subr.bf16.mxu0 0
    %2661 = vmatpush1.bf16.msra.mxu0 0
    %2662 = vmatprep.subr.bf16.mxu0 0
    %2663 = vmatpush1.bf16.msra.mxu0 0
    %2664 = vmatprep.subr.bf16.mxu0 0
    %2665 = vmatpush1.bf16.msra.mxu0 0
    %2666 = vmatprep.subr.bf16.mxu0 0
    %2667 = vmatpush1.bf16.msra.mxu0 0
    %2668 = vmatprep.subr.bf16.mxu0 0
    %2669 = vmatpush1.bf16.msra.mxu0 0
    %2670 = vmatprep.subr.bf16.mxu0 0
    %2671 = vmatpush1.bf16.msra.mxu0 0
    %2672 = vmatprep.subr.bf16.mxu0 0
    %2673 = vmatpush1.bf16.msra.mxu0 0
    %2674 = vmatprep.subr.bf16.mxu0 0
    %2675 = vmatpush1.bf16.msra.mxu0 0
    %2676 = vmatprep.subr.bf16.mxu0 0
    %2677 = vmatpush1.bf16.msra.mxu0 0
    %2678 = vmatprep.mubr.bf16.mxu0 0
    %2679 = vmatmul.mubr.bf16.gmra.mrb[0].mxu0 %v2644
    %v2680 = vpop.f32.mrb[0].mxu0
    %v2681 = vadd.f32 %v2446, %v2680
    %v2682 = vpop.f32.mrb[0].mxu0
    %v2683 = vadd.f32 %v2450, %v2682
    %v2684 = vpop.f32.mrb[0].mxu0
    %v2685 = vpop.f32.mrb[0].mxu0
    %2686 = vdwg.mxu0
    %2687 = vmatprep.subr.bf16.mxu0 %v2582
    %2688 = vmatpush1.bf16.msra.mxu0 %v2581
    %2689 = vmatprep.subr.bf16.mxu0 %v2590
    %2690 = vmatpush1.bf16.msra.mxu0 %v2589
    %2691 = vmatprep.subr.bf16.mxu0 %v2598
    %2692 = vmatpush1.bf16.msra.mxu0 %v2597
    %2693 = vmatprep.subr.bf16.mxu0 %v2606
    %2694 = vmatpush1.bf16.msra.mxu0 %v2605
    %2695 = vmatprep.subr.bf16.mxu0 0
    %2696 = vmatpush1.bf16.msra.mxu0 0
    %2697 = vmatprep.subr.bf16.mxu0 0
    %2698 = vmatpush1.bf16.msra.mxu0 0
    %2699 = vmatprep.subr.bf16.mxu0 0
    %2700 = vmatpush1.bf16.msra.mxu0 0
    %2701 = vmatprep.subr.bf16.mxu0 0
    %2702 = vmatpush1.bf16.msra.mxu0 0
    %2703 = vmatprep.subr.bf16.mxu0 0
    %2704 = vmatpush1.bf16.msra.mxu0 0
    %2705 = vmatprep.subr.bf16.mxu0 0
    %2706 = vmatpush1.bf16.msra.mxu0 0
    %2707 = vmatprep.subr.bf16.mxu0 0
    %2708 = vmatpush1.bf16.msra.mxu0 0
    %2709 = vmatprep.subr.bf16.mxu0 0
    %2710 = vmatpush1.bf16.msra.mxu0 0
    %2711 = vmatprep.subr.bf16.mxu0 0
    %2712 = vmatpush1.bf16.msra.mxu0 0
    %2713 = vmatprep.subr.bf16.mxu0 0
    %2714 = vmatpush1.bf16.msra.mxu0 0
    %2715 = vmatprep.subr.bf16.mxu0 0
    %2716 = vmatpush1.bf16.msra.mxu0 0
    %2717 = vmatprep.subr.bf16.mxu0 0
    %2718 = vmatpush1.bf16.msra.mxu0 0
    %2719 = vmatprep.mubr.bf16.mxu0 0
    %2720 = vmatmul.mubr.bf16.gmra.mrb[0].mxu0 %v2644
    %v2721 = vpop.f32.mrb[0].mxu0
    %v2722 = vadd.f32 %v2454, %v2721
    %v2723 = vpop.f32.mrb[0].mxu0
    %v2724 = vadd.f32 %v2458, %v2723
    %v2725 = vpop.f32.mrb[0].mxu0
    %v2726 = vpop.f32.mrb[0].mxu0
    %2727 = vdwg.mxu0
    %2728 = vmatprep.subr.bf16.mxu0 %v2584
    %2729 = vmatpush1.bf16.msra.mxu0 %v2583
    %2730 = vmatprep.subr.bf16.mxu0 %v2592
    %2731 = vmatpush1.bf16.msra.mxu0 %v2591
    %2732 = vmatprep.subr.bf16.mxu0 %v2600
    %2733 = vmatpush1.bf16.msra.mxu0 %v2599
    %2734 = vmatprep.subr.bf16.mxu0 %v2608
    %2735 = vmatpush1.bf16.msra.mxu0 %v2607
    %2736 = vmatprep.subr.bf16.mxu0 0
    %2737 = vmatpush1.bf16.msra.mxu0 0
    %2738 = vmatprep.subr.bf16.mxu0 0
    %2739 = vmatpush1.bf16.msra.mxu0 0
    %2740 = vmatprep.subr.bf16.mxu0 0
    %2741 = vmatpush1.bf16.msra.mxu0 0
    %2742 = vmatprep.subr.bf16.mxu0 0
    %2743 = vmatpush1.bf16.msra.mxu0 0
    %2744 = vmatprep.subr.bf16.mxu0 0
    %2745 = vmatpush1.bf16.msra.mxu0 0
    %2746 = vmatprep.subr.bf16.mxu0 0
    %2747 = vmatpush1.bf16.msra.mxu0 0
    %2748 = vmatprep.subr.bf16.mxu0 0
    %2749 = vmatpush1.bf16.msra.mxu0 0
    %2750 = vmatprep.subr.bf16.mxu0 0
    %2751 = vmatpush1.bf16.msra.mxu0 0
    %2752 = vmatprep.subr.bf16.mxu0 0
    %2753 = vmatpush1.bf16.msra.mxu0 0
    %2754 = vmatprep.subr.bf16.mxu0 0
    %2755 = vmatpush1.bf16.msra.mxu0 0
    %2756 = vmatprep.subr.bf16.mxu0 0
    %2757 = vmatpush1.bf16.msra.mxu0 0
    %2758 = vmatprep.subr.bf16.mxu0 0
    %2759 = vmatpush1.bf16.msra.mxu0 0
    %2760 = vmatprep.mubr.bf16.mxu0 0
    %2761 = vmatmul.mubr.bf16.gmra.mrb[0].mxu0 %v2644
    %v2762 = vpop.f32.mrb[0].mxu0
    %v2763 = vadd.f32 %v2462, %v2762
    %v2764 = vpop.f32.mrb[0].mxu0
    %v2765 = vadd.f32 %v2466, %v2764
    %v2766 = vpop.f32.mrb[0].mxu0
    %v2767 = vpop.f32.mrb[0].mxu0
    %2768 = vdwg.mxu0
    %2769 = vmatprep.subr.bf16.mxu0 %v2586
    %2770 = vmatpush1.bf16.msra.mxu0 %v2585
    %2771 = vmatprep.subr.bf16.mxu0 %v2594
    %2772 = vmatpush1.bf16.msra.mxu0 %v2593
    %2773 = vmatprep.subr.bf16.mxu0 %v2602
    %2774 = vmatpush1.bf16.msra.mxu0 %v2601
    %2775 = vmatprep.subr.bf16.mxu0 %v2610
    %2776 = vmatpush1.bf16.msra.mxu0 %v2609
    %2777 = vmatprep.subr.bf16.mxu0 0
    %2778 = vmatpush1.bf16.msra.mxu0 0
    %2779 = vmatprep.subr.bf16.mxu0 0
    %2780 = vmatpush1.bf16.msra.mxu0 0
    %2781 = vmatprep.subr.bf16.mxu0 0
    %2782 = vmatpush1.bf16.msra.mxu0 0
    %2783 = vmatprep.subr.bf16.mxu0 0
    %2784 = vmatpush1.bf16.msra.mxu0 0
    %2785 = vmatprep.subr.bf16.mxu0 0
    %2786 = vmatpush1.bf16.msra.mxu0 0
    %2787 = vmatprep.subr.bf16.mxu0 0
    %2788 = vmatpush1.bf16.msra.mxu0 0
    %2789 = vmatprep.subr.bf16.mxu0 0
    %2790 = vmatpush1.bf16.msra.mxu0 0
    %2791 = vmatprep.subr.bf16.mxu0 0
    %2792 = vmatpush1.bf16.msra.mxu0 0
    %2793 = vmatprep.subr.bf16.mxu0 0
    %2794 = vmatpush1.bf16.msra.mxu0 0
    %2795 = vmatprep.subr.bf16.mxu0 0
    %2796 = vmatpush1.bf16.msra.mxu0 0
    %2797 = vmatprep.subr.bf16.mxu0 0
    %2798 = vmatpush1.bf16.msra.mxu0 0
    %2799 = vmatprep.subr.bf16.mxu0 0
    %2800 = vmatpush1.bf16.msra.mxu0 0
    %2801 = vmatprep.mubr.bf16.mxu0 0
    %2802 = vmatmul.mubr.bf16.gmra.mrb[0].mxu0 %v2644
    %v2803 = vpop.f32.mrb[0].mxu0
    %v2804 = vadd.f32 %v2470, %v2803
    %v2805 = vpop.f32.mrb[0].mxu0
    %v2806 = vadd.f32 %v2474, %v2805
    %v2807 = vpop.f32.mrb[0].mxu0
    %v2808 = vpop.f32.mrb[0].mxu0
    %2809 = vdwg.mxu0
    %v2810 = vmax.f32 %v2681, 0.0
    %v2811 = vmax.f32 %v2683, 0.0
    %v2812 = vmax.f32 %v2722, 0.0
    %v2813 = vmax.f32 %v2724, 0.0
    %v2814 = vmax.f32 %v2763, 0.0
    %v2815 = vmax.f32 %v2765, 0.0
    %v2816 = vmax.f32 %v2804, 0.0
    %v2817 = vmax.f32 %v2806, 0.0
    %v2818 = vpack.c.bf16 %v2810, %v2810
    %v2819 = vpack.c.bf16 %v2811, %v2811
    %v2820 = vpack.c.bf16 %v2812, %v2812
    %v2821 = vpack.c.bf16 %v2813, %v2813
    %v2822 = vpack.c.bf16 %v2814, %v2814
    %v2823 = vpack.c.bf16 %v2815, %v2815
    %v2824 = vpack.c.bf16 %v2816, %v2816
    %v2825 = vpack.c.bf16 %v2817, %v2817
    %v2826 = vld [vmem:[%s5] sm:$0xf]
    %v2827 = vld [vmem:[%s5 + $0x4] sm:$0xf]
    %v2828 = vld [vmem:[%s5 + $0x8] sm:$0xf]
    %v2829 = vld [vmem:[%s5 + $0xc] sm:$0xf]
    %v2830 = vld [vmem:[%s5 + $0x10] sm:$0xf]
    %v2831 = vld [vmem:[%s5 + $0x14] sm:$0xf]
    %v2832 = vld [vmem:[%s5 + $0x18] sm:$0xf]
    %v2833 = vld [vmem:[%s5 + $0x1c] sm:$0xf]
    %v2834 = vld [vmem:[%s5 + $0x20] sm:$0xf]
    %v2835 = vld [vmem:[%s5 + $0x24] sm:$0xf]
    %v2836 = vld [vmem:[%s5 + $0x28] sm:$0xf]
    %v2837 = vld [vmem:[%s5 + $0x2c] sm:$0xf]
    %v2838 = vld [vmem:[%s5 + $0x30] sm:$0xf]
    %v2839 = vld [vmem:[%s5 + $0x34] sm:$0xf]
    %v2840 = vld [vmem:[%s5 + $0x38] sm:$0xf]
    %v2841 = vld [vmem:[%s5 + $0x3c] sm:$0xf]
    %v2842 = vld [vmem:[%s5 + $0x40] sm:$0xf]
    %v2843 = vld [vmem:[%s5 + $0x44] sm:$0xf]
    %v2844 = vld [vmem:[%s5 + $0x48] sm:$0xf]
    %v2845 = vld [vmem:[%s5 + $0x4c] sm:$0xf]
    %v2846 = vld [vmem:[%s5 + $0x50] sm:$0xf]
    %v2847 = vld [vmem:[%s5 + $0x54] sm:$0xf]
    %v2848 = vld [vmem:[%s5 + $0x58] sm:$0xf]
    %v2849 = vld [vmem:[%s5 + $0x5c] sm:$0xf]
    %v2850 = vld [vmem:[%s5 + $0x60] sm:$0xf]
    %v2851 = vld [vmem:[%s5 + $0x64] sm:$0xf]
    %v2852 = vld [vmem:[%s5 + $0x68] sm:$0xf]
    %v2853 = vld [vmem:[%s5 + $0x6c] sm:$0xf]
    %v2854 = vld [vmem:[%s5 + $0x70] sm:$0xf]
    %v2855 = vld [vmem:[%s5 + $0x74] sm:$0xf]
    %v2856 = vld [vmem:[%s5 + $0x78] sm:$0xf]
    %v2857 = vld [vmem:[%s5 + $0x7c] sm:$0xf]
    %v2858 = vld [vmem:[%s5 + $0x80] sm:$0xf]
    %v2859 = vld [vmem:[%s5 + $0x84] sm:$0xf]
    %v2860 = vld [vmem:[%s5 + $0x88] sm:$0xf]
    %v2861 = vld [vmem:[%s5 + $0x8c] sm:$0xf]
    %v2862 = vld [vmem:[%s5 + $0x90] sm:$0xf]
    %v2863 = vld [vmem:[%s5 + $0x94] sm:$0xf]
    %v2864 = vld [vmem:[%s5 + $0x98] sm:$0xf]
    %v2865 = vld [vmem:[%s5 + $0x9c] sm:$0xf]
    %v2866 = vld [vmem:[%s5 + $0xa0] sm:$0xf]
    %v2867 = vld [vmem:[%s5 + $0xa4] sm:$0xf]
    %v2868 = vld [vmem:[%s5 + $0xa8] sm:$0xf]
    %v2869 = vld [vmem:[%s5 + $0xac] sm:$0xf]
    %v2870 = vld [vmem:[%s5 + $0xb0] sm:$0xf]
    %v2871 = vld [vmem:[%s5 + $0xb4] sm:$0xf]
    %v2872 = vld [vmem:[%s5 + $0xb8] sm:$0xf]
    %v2873 = vld [vmem:[%s5 + $0xbc] sm:$0xf]
    %v2874 = vld [vmem:[%s5 + $0xc0] sm:$0xf]
    %v2875 = vld [vmem:[%s5 + $0xc4] sm:$0xf]
    %v2876 = vld [vmem:[%s5 + $0xc8] sm:$0xf]
    %v2877 = vld [vmem:[%s5 + $0xcc] sm:$0xf]
    %v2878 = vld [vmem:[%s5 + $0xd0] sm:$0xf]
    %v2879 = vld [vmem:[%s5 + $0xd4] sm:$0xf]
    %v2880 = vld [vmem:[%s5 + $0xd8] sm:$0xf]
    %v2881 = vld [vmem:[%s5 + $0xdc] sm:$0xf]
    %v2882 = vld [vmem:[%s5 + $0xe0] sm:$0xf]
    %v2883 = vld [vmem:[%s5 + $0xe4] sm:$0xf]
    %v2884 = vld [vmem:[%s5 + $0xe8] sm:$0xf]
    %v2885 = vld [vmem:[%s5 + $0xec] sm:$0xf]
    %v2886 = vld [vmem:[%s5 + $0xf0] sm:$0xf]
    %v2887 = vld [vmem:[%s5 + $0xf4] sm:$0xf]
    %v2888 = vld [vmem:[%s5 + $0xf8] sm:$0xf]
    %v2889 = vld [vmem:[%s5 + $0xfc] sm:$0xf]
    %v2890 = vld [vmem:[%s5 + $0x100] sm:$0xf]
    %v2891 = vld [vmem:[%s5 + $0x104] sm:$0xf]
    %v2892 = vld [vmem:[%s5 + $0x108] sm:$0xf]
    %v2893 = vld [vmem:[%s5 + $0x10c] sm:$0xf]
    %v2894 = vld [vmem:[%s5 + $0x110] sm:$0xf]
    %v2895 = vld [vmem:[%s5 + $0x114] sm:$0xf]
    %v2896 = vld [vmem:[%s5 + $0x118] sm:$0xf]
    %v2897 = vld [vmem:[%s5 + $0x11c] sm:$0xf]
    %v2898 = vld [vmem:[%s5 + $0x120] sm:$0xf]
    %v2899 = vld [vmem:[%s5 + $0x124] sm:$0xf]
    %v2900 = vld [vmem:[%s5 + $0x128] sm:$0xf]
    %v2901 = vld [vmem:[%s5 + $0x12c] sm:$0xf]
    %v2902 = vld [vmem:[%s5 + $0x130] sm:$0xf]
    %v2903 = vld [vmem:[%s5 + $0x134] sm:$0xf]
    %v2904 = vld [vmem:[%s5 + $0x138] sm:$0xf]
    %v2905 = vld [vmem:[%s5 + $0x13c] sm:$0xf]
    %v2906 = vld [vmem:[%s5 + $0x140] sm:$0xf]
    %v2907 = vld [vmem:[%s5 + $0x144] sm:$0xf]
    %v2908 = vld [vmem:[%s5 + $0x148] sm:$0xf]
    %v2909 = vld [vmem:[%s5 + $0x14c] sm:$0xf]
    %v2910 = vld [vmem:[%s5 + $0x150] sm:$0xf]
    %v2911 = vld [vmem:[%s5 + $0x154] sm:$0xf]
    %v2912 = vld [vmem:[%s5 + $0x158] sm:$0xf]
    %v2913 = vld [vmem:[%s5 + $0x15c] sm:$0xf]
    %v2914 = vld [vmem:[%s5 + $0x160] sm:$0xf]
    %v2915 = vld [vmem:[%s5 + $0x164] sm:$0xf]
    %v2916 = vld [vmem:[%s5 + $0x168] sm:$0xf]
    %v2917 = vld [vmem:[%s5 + $0x16c] sm:$0xf]
    %v2918 = vld [vmem:[%s5 + $0x170] sm:$0xf]
    %v2919 = vld [vmem:[%s5 + $0x174] sm:$0xf]
    %v2920 = vld [vmem:[%s5 + $0x178] sm:$0xf]
    %v2921 = vld [vmem:[%s5 + $0x17c] sm:$0xf]
    %v2922 = vld [vmem:[%s5 + $0x180] sm:$0xf]
    %v2923 = vld [vmem:[%s5 + $0x184] sm:$0xf]
    %v2924 = vld [vmem:[%s5 + $0x188] sm:$0xf]
    %v2925 = vld [vmem:[%s5 + $0x18c] sm:$0xf]
    %v2926 = vld [vmem:[%s5 + $0x190] sm:$0xf]
    %v2927 = vld [vmem:[%s5 + $0x194] sm:$0xf]
    %v2928 = vld [vmem:[%s5 + $0x198] sm:$0xf]
    %v2929 = vld [vmem:[%s5 + $0x19c] sm:$0xf]
    %v2930 = vld [vmem:[%s5 + $0x1a0] sm:$0xf]
    %v2931 = vld [vmem:[%s5 + $0x1a4] sm:$0xf]
    %v2932 = vld [vmem:[%s5 + $0x1a8] sm:$0xf]
    %v2933 = vld [vmem:[%s5 + $0x1ac] sm:$0xf]
    %v2934 = vld [vmem:[%s5 + $0x1b0] sm:$0xf]
    %v2935 = vld [vmem:[%s5 + $0x1b4] sm:$0xf]
    %v2936 = vld [vmem:[%s5 + $0x1b8] sm:$0xf]
    %v2937 = vld [vmem:[%s5 + $0x1bc] sm:$0xf]
    %v2938 = vld [vmem:[%s5 + $0x1c0] sm:$0xf]
    %v2939 = vld [vmem:[%s5 + $0x1c4] sm:$0xf]
    %v2940 = vld [vmem:[%s5 + $0x1c8] sm:$0xf]
    %v2941 = vld [vmem:[%s5 + $0x1cc] sm:$0xf]
    %v2942 = vld [vmem:[%s5 + $0x1d0] sm:$0xf]
    %v2943 = vld [vmem:[%s5 + $0x1d4] sm:$0xf]
    %v2944 = vld [vmem:[%s5 + $0x1d8] sm:$0xf]
    %v2945 = vld [vmem:[%s5 + $0x1dc] sm:$0xf]
    %v2946 = vld [vmem:[%s5 + $0x1e0] sm:$0xf]
    %v2947 = vld [vmem:[%s5 + $0x1e4] sm:$0xf]
    %v2948 = vld [vmem:[%s5 + $0x1e8] sm:$0xf]
    %v2949 = vld [vmem:[%s5 + $0x1ec] sm:$0xf]
    %v2950 = vld [vmem:[%s5 + $0x1f0] sm:$0xf]
    %v2951 = vld [vmem:[%s5 + $0x1f4] sm:$0xf]
    %v2952 = vld [vmem:[%s5 + $0x1f8] sm:$0xf]
    %v2953 = vld [vmem:[%s5 + $0x1fc] sm:$0xf]
    %v2955 = vlaneseq
    %v2956 = vshrl.u32 %v2955, 7
    %v2957 = vsub.s32 0, %v2956
    %v2958 = vrot.slane %v32, %v2957
    %v3088 = vunpack.c.l.b16 %v2826
    %v3089 = vunpack.c.l.b16 %v2827
    %v3090 = vunpack.c.l.b16 %v2828
    %v3091 = vunpack.c.l.b16 %v2829
    %v3092 = vunpack.c.l.b16 %v2830
    %v3093 = vunpack.c.l.b16 %v2831
    %v3094 = vunpack.c.l.b16 %v2832
    %v3095 = vunpack.c.l.b16 %v2833
    %v3096 = vunpack.c.l.b16 %v2834
    %v3097 = vunpack.c.l.b16 %v2835
    %v3098 = vunpack.c.l.b16 %v2836
    %v3099 = vunpack.c.l.b16 %v2837
    %v3100 = vunpack.c.l.b16 %v2838
    %v3101 = vunpack.c.l.b16 %v2839
    %v3102 = vunpack.c.l.b16 %v2840
    %v3103 = vunpack.c.l.b16 %v2841
    %v3104 = vunpack.c.l.b16 %v2842
    %v3105 = vunpack.c.l.b16 %v2843
    %v3106 = vunpack.c.l.b16 %v2844
    %v3107 = vunpack.c.l.b16 %v2845
    %v3108 = vunpack.c.l.b16 %v2846
    %v3109 = vunpack.c.l.b16 %v2847
    %v3110 = vunpack.c.l.b16 %v2848
    %v3111 = vunpack.c.l.b16 %v2849
    %v3112 = vunpack.c.l.b16 %v2850
    %v3113 = vunpack.c.l.b16 %v2851
    %v3114 = vunpack.c.l.b16 %v2852
    %v3115 = vunpack.c.l.b16 %v2853
    %v3116 = vunpack.c.l.b16 %v2854
    %v3117 = vunpack.c.l.b16 %v2855
    %v3118 = vunpack.c.l.b16 %v2856
    %v3119 = vunpack.c.l.b16 %v2857
    %v3120 = vunpack.c.l.b16 %v2858
    %v3121 = vunpack.c.l.b16 %v2859
    %v3122 = vunpack.c.l.b16 %v2860
    %v3123 = vunpack.c.l.b16 %v2861
    %v3124 = vunpack.c.l.b16 %v2862
    %v3125 = vunpack.c.l.b16 %v2863
    %v3126 = vunpack.c.l.b16 %v2864
    %v3127 = vunpack.c.l.b16 %v2865
    %v3128 = vunpack.c.l.b16 %v2866
    %v3129 = vunpack.c.l.b16 %v2867
    %v3130 = vunpack.c.l.b16 %v2868
    %v3131 = vunpack.c.l.b16 %v2869
    %v3132 = vunpack.c.l.b16 %v2870
    %v3133 = vunpack.c.l.b16 %v2871
    %v3134 = vunpack.c.l.b16 %v2872
    %v3135 = vunpack.c.l.b16 %v2873
    %v3136 = vunpack.c.l.b16 %v2874
    %v3137 = vunpack.c.l.b16 %v2875
    %v3138 = vunpack.c.l.b16 %v2876
    %v3139 = vunpack.c.l.b16 %v2877
    %v3140 = vunpack.c.l.b16 %v2878
    %v3141 = vunpack.c.l.b16 %v2879
    %v3142 = vunpack.c.l.b16 %v2880
    %v3143 = vunpack.c.l.b16 %v2881
    %v3144 = vunpack.c.l.b16 %v2882
    %v3145 = vunpack.c.l.b16 %v2883
    %v3146 = vunpack.c.l.b16 %v2884
    %v3147 = vunpack.c.l.b16 %v2885
    %v3148 = vunpack.c.l.b16 %v2886
    %v3149 = vunpack.c.l.b16 %v2887
    %v3150 = vunpack.c.l.b16 %v2888
    %v3151 = vunpack.c.l.b16 %v2889
    %v3152 = vunpack.c.l.b16 %v2890
    %v3153 = vunpack.c.l.b16 %v2891
    %v3154 = vunpack.c.l.b16 %v2892
    %v3155 = vunpack.c.l.b16 %v2893
    %v3156 = vunpack.c.l.b16 %v2894
    %v3157 = vunpack.c.l.b16 %v2895
    %v3158 = vunpack.c.l.b16 %v2896
    %v3159 = vunpack.c.l.b16 %v2897
    %v3160 = vunpack.c.l.b16 %v2898
    %v3161 = vunpack.c.l.b16 %v2899
    %v3162 = vunpack.c.l.b16 %v2900
    %v3163 = vunpack.c.l.b16 %v2901
    %v3164 = vunpack.c.l.b16 %v2902
    %v3165 = vunpack.c.l.b16 %v2903
    %v3166 = vunpack.c.l.b16 %v2904
    %v3167 = vunpack.c.l.b16 %v2905
    %v3168 = vunpack.c.l.b16 %v2906
    %v3169 = vunpack.c.l.b16 %v2907
    %v3170 = vunpack.c.l.b16 %v2908
    %v3171 = vunpack.c.l.b16 %v2909
    %v3172 = vunpack.c.l.b16 %v2910
    %v3173 = vunpack.c.l.b16 %v2911
    %v3174 = vunpack.c.l.b16 %v2912
    %v3175 = vunpack.c.l.b16 %v2913
    %v3176 = vunpack.c.l.b16 %v2914
    %v3177 = vunpack.c.l.b16 %v2915
    %v3178 = vunpack.c.l.b16 %v2916
    %v3179 = vunpack.c.l.b16 %v2917
    %v3180 = vunpack.c.l.b16 %v2918
    %v3181 = vunpack.c.l.b16 %v2919
    %v3182 = vunpack.c.l.b16 %v2920
    %v3183 = vunpack.c.l.b16 %v2921
    %v3184 = vunpack.c.l.b16 %v2922
    %v3185 = vunpack.c.l.b16 %v2923
    %v3186 = vunpack.c.l.b16 %v2924
    %v3187 = vunpack.c.l.b16 %v2925
    %v3188 = vunpack.c.l.b16 %v2926
    %v3189 = vunpack.c.l.b16 %v2927
    %v3190 = vunpack.c.l.b16 %v2928
    %v3191 = vunpack.c.l.b16 %v2929
    %v3192 = vunpack.c.l.b16 %v2930
    %v3193 = vunpack.c.l.b16 %v2931
    %v3194 = vunpack.c.l.b16 %v2932
    %v3195 = vunpack.c.l.b16 %v2933
    %v3196 = vunpack.c.l.b16 %v2934
    %v3197 = vunpack.c.l.b16 %v2935
    %v3198 = vunpack.c.l.b16 %v2936
    %v3199 = vunpack.c.l.b16 %v2937
    %v3200 = vunpack.c.l.b16 %v2938
    %v3201 = vunpack.c.l.b16 %v2939
    %v3202 = vunpack.c.l.b16 %v2940
    %v3203 = vunpack.c.l.b16 %v2941
    %v3204 = vunpack.c.l.b16 %v2942
    %v3205 = vunpack.c.l.b16 %v2943
    %v3206 = vunpack.c.l.b16 %v2944
    %v3207 = vunpack.c.l.b16 %v2945
    %v3208 = vunpack.c.l.b16 %v2946
    %v3209 = vunpack.c.l.b16 %v2947
    %v3210 = vunpack.c.l.b16 %v2948
    %v3211 = vunpack.c.l.b16 %v2949
    %v3212 = vunpack.c.l.b16 %v2950
    %v3213 = vunpack.c.l.b16 %v2951
    %v3214 = vunpack.c.l.b16 %v2952
    %v3215 = vunpack.c.l.b16 %v2953
    %v3216 = vpack.c.b16 %v3089, %v3088
    %v3217 = vpack.c.b16 %v3091, %v3090
    %v3218 = vpack.c.b16 %v3093, %v3092
    %v3219 = vpack.c.b16 %v3095, %v3094
    %v3220 = vpack.c.b16 %v3097, %v3096
    %v3221 = vpack.c.b16 %v3099, %v3098
    %v3222 = vpack.c.b16 %v3101, %v3100
    %v3223 = vpack.c.b16 %v3103, %v3102
    %v3224 = vpack.c.b16 %v3105, %v3104
    %v3225 = vpack.c.b16 %v3107, %v3106
    %v3226 = vpack.c.b16 %v3109, %v3108
    %v3227 = vpack.c.b16 %v3111, %v3110
    %v3228 = vpack.c.b16 %v3113, %v3112
    %v3229 = vpack.c.b16 %v3115, %v3114
    %v3230 = vpack.c.b16 %v3117, %v3116
    %v3231 = vpack.c.b16 %v3119, %v3118
    %v3232 = vpack.c.b16 %v3121, %v3120
    %v3233 = vpack.c.b16 %v3123, %v3122
    %v3234 = vpack.c.b16 %v3125, %v3124
    %v3235 = vpack.c.b16 %v3127, %v3126
    %v3236 = vpack.c.b16 %v3129, %v3128
    %v3237 = vpack.c.b16 %v3131, %v3130
    %v3238 = vpack.c.b16 %v3133, %v3132
    %v3239 = vpack.c.b16 %v3135, %v3134
    %v3240 = vpack.c.b16 %v3137, %v3136
    %v3241 = vpack.c.b16 %v3139, %v3138
    %v3242 = vpack.c.b16 %v3141, %v3140
    %v3243 = vpack.c.b16 %v3143, %v3142
    %v3244 = vpack.c.b16 %v3145, %v3144
    %v3245 = vpack.c.b16 %v3147, %v3146
    %v3246 = vpack.c.b16 %v3149, %v3148
    %v3247 = vpack.c.b16 %v3151, %v3150
    %v3248 = vpack.c.b16 %v3153, %v3152
    %v3249 = vpack.c.b16 %v3155, %v3154
    %v3250 = vpack.c.b16 %v3157, %v3156
    %v3251 = vpack.c.b16 %v3159, %v3158
    %v3252 = vpack.c.b16 %v3161, %v3160
    %v3253 = vpack.c.b16 %v3163, %v3162
    %v3254 = vpack.c.b16 %v3165, %v3164
    %v3255 = vpack.c.b16 %v3167, %v3166
    %v3256 = vpack.c.b16 %v3169, %v3168
    %v3257 = vpack.c.b16 %v3171, %v3170
    %v3258 = vpack.c.b16 %v3173, %v3172
    %v3259 = vpack.c.b16 %v3175, %v3174
    %v3260 = vpack.c.b16 %v3177, %v3176
    %v3261 = vpack.c.b16 %v3179, %v3178
    %v3262 = vpack.c.b16 %v3181, %v3180
    %v3263 = vpack.c.b16 %v3183, %v3182
    %v3264 = vpack.c.b16 %v3185, %v3184
    %v3265 = vpack.c.b16 %v3187, %v3186
    %v3266 = vpack.c.b16 %v3189, %v3188
    %v3267 = vpack.c.b16 %v3191, %v3190
    %v3268 = vpack.c.b16 %v3193, %v3192
    %v3269 = vpack.c.b16 %v3195, %v3194
    %v3270 = vpack.c.b16 %v3197, %v3196
    %v3271 = vpack.c.b16 %v3199, %v3198
    %v3272 = vpack.c.b16 %v3201, %v3200
    %v3273 = vpack.c.b16 %v3203, %v3202
    %v3274 = vpack.c.b16 %v3205, %v3204
    %v3275 = vpack.c.b16 %v3207, %v3206
    %v3276 = vpack.c.b16 %v3209, %v3208
    %v3277 = vpack.c.b16 %v3211, %v3210
    %v3278 = vpack.c.b16 %v3213, %v3212
    %v3279 = vpack.c.b16 %v3215, %v3214
    %3344 = vmatprep.subr.bf16.mxu0 0
    %3345 = vmatpush1.bf16.msra.mxu0 %v3216
    %3346 = vmatprep.subr.bf16.mxu0 0
    %3347 = vmatpush1.bf16.msra.mxu0 %v3217
    %3348 = vmatprep.subr.bf16.mxu0 0
    %3349 = vmatpush1.bf16.msra.mxu0 %v3218
    %3350 = vmatprep.subr.bf16.mxu0 0
    %3351 = vmatpush1.bf16.msra.mxu0 %v3219
    %3352 = vmatprep.subr.bf16.mxu0 0
    %3353 = vmatpush1.bf16.msra.mxu0 %v3220
    %3354 = vmatprep.subr.bf16.mxu0 0
    %3355 = vmatpush1.bf16.msra.mxu0 %v3221
    %3356 = vmatprep.subr.bf16.mxu0 0
    %3357 = vmatpush1.bf16.msra.mxu0 %v3222
    %3358 = vmatprep.subr.bf16.mxu0 0
    %3359 = vmatpush1.bf16.msra.mxu0 %v3223
    %3360 = vmatprep.subr.bf16.mxu0 0
    %3361 = vmatpush1.bf16.msra.mxu0 %v3224
    %3362 = vmatprep.subr.bf16.mxu0 0
    %3363 = vmatpush1.bf16.msra.mxu0 %v3225
    %3364 = vmatprep.subr.bf16.mxu0 0
    %3365 = vmatpush1.bf16.msra.mxu0 %v3226
    %3366 = vmatprep.subr.bf16.mxu0 0
    %3367 = vmatpush1.bf16.msra.mxu0 %v3227
    %3368 = vmatprep.subr.bf16.mxu0 0
    %3369 = vmatpush1.bf16.msra.mxu0 %v3228
    %3370 = vmatprep.subr.bf16.mxu0 0
    %3371 = vmatpush1.bf16.msra.mxu0 %v3229
    %3372 = vmatprep.subr.bf16.mxu0 0
    %3373 = vmatpush1.bf16.msra.mxu0 %v3230
    %3374 = vmatprep.subr.bf16.mxu0 0
    %3375 = vmatpush1.bf16.msra.mxu0 %v3231
    %3376 = vmatprep.mubr.bf16.mxu0 %v2819
    %3377 = vmatmul.mubr.bf16.gmra.mrb[0].mxu0 %v2818
    %v3378 = vpop.f32.mrb[0].mxu0
    %v3379 = vadd.f32 %v2958, %v3378
    %v3380 = vpop.f32.mrb[0].mxu0
    %v3381 = vpop.f32.mrb[0].mxu0
    %v3382 = vpop.f32.mrb[0].mxu0
    %3383 = vdwg.mxu0
    %3384 = vmatprep.subr.bf16.mxu0 0
    %3385 = vmatpush1.bf16.msra.mxu0 %v3232
    %3386 = vmatprep.subr.bf16.mxu0 0
    %3387 = vmatpush1.bf16.msra.mxu0 %v3233
    %3388 = vmatprep.subr.bf16.mxu0 0
    %3389 = vmatpush1.bf16.msra.mxu0 %v3234
    %3390 = vmatprep.subr.bf16.mxu0 0
    %3391 = vmatpush1.bf16.msra.mxu0 %v3235
    %3392 = vmatprep.subr.bf16.mxu0 0
    %3393 = vmatpush1.bf16.msra.mxu0 %v3236
    %3394 = vmatprep.subr.bf16.mxu0 0
    %3395 = vmatpush1.bf16.msra.mxu0 %v3237
    %3396 = vmatprep.subr.bf16.mxu0 0
    %3397 = vmatpush1.bf16.msra.mxu0 %v3238
    %3398 = vmatprep.subr.bf16.mxu0 0
    %3399 = vmatpush1.bf16.msra.mxu0 %v3239
    %3400 = vmatprep.subr.bf16.mxu0 0
    %3401 = vmatpush1.bf16.msra.mxu0 %v3240
    %3402 = vmatprep.subr.bf16.mxu0 0
    %3403 = vmatpush1.bf16.msra.mxu0 %v3241
    %3404 = vmatprep.subr.bf16.mxu0 0
    %3405 = vmatpush1.bf16.msra.mxu0 %v3242
    %3406 = vmatprep.subr.bf16.mxu0 0
    %3407 = vmatpush1.bf16.msra.mxu0 %v3243
    %3408 = vmatprep.subr.bf16.mxu0 0
    %3409 = vmatpush1.bf16.msra.mxu0 %v3244
    %3410 = vmatprep.subr.bf16.mxu0 0
    %3411 = vmatpush1.bf16.msra.mxu0 %v3245
    %3412 = vmatprep.subr.bf16.mxu0 0
    %3413 = vmatpush1.bf16.msra.mxu0 %v3246
    %3414 = vmatprep.subr.bf16.mxu0 0
    %3415 = vmatpush1.bf16.msra.mxu0 %v3247
    %3416 = vmatprep.mubr.bf16.mxu0 %v2821
    %3417 = vmatmul.mubr.bf16.gmra.mrb[0].mxu0 %v2820
    %v3418 = vpop.f32.mrb[0].mxu0
    %v3419 = vadd.f32 %v3379, %v3418
    %v3420 = vpop.f32.mrb[0].mxu0
    %v3421 = vpop.f32.mrb[0].mxu0
    %v3422 = vpop.f32.mrb[0].mxu0
    %3423 = vdwg.mxu0
    %3424 = vmatprep.subr.bf16.mxu0 0
    %3425 = vmatpush1.bf16.msra.mxu0 %v3248
    %3426 = vmatprep.subr.bf16.mxu0 0
    %3427 = vmatpush1.bf16.msra.mxu0 %v3249
    %3428 = vmatprep.subr.bf16.mxu0 0
    %3429 = vmatpush1.bf16.msra.mxu0 %v3250
    %3430 = vmatprep.subr.bf16.mxu0 0
    %3431 = vmatpush1.bf16.msra.mxu0 %v3251
    %3432 = vmatprep.subr.bf16.mxu0 0
    %3433 = vmatpush1.bf16.msra.mxu0 %v3252
    %3434 = vmatprep.subr.bf16.mxu0 0
    %3435 = vmatpush1.bf16.msra.mxu0 %v3253
    %3436 = vmatprep.subr.bf16.mxu0 0
    %3437 = vmatpush1.bf16.msra.mxu0 %v3254
    %3438 = vmatprep.subr.bf16.mxu0 0
    %3439 = vmatpush1.bf16.msra.mxu0 %v3255
    %3440 = vmatprep.subr.bf16.mxu0 0
    %3441 = vmatpush1.bf16.msra.mxu0 %v3256
    %3442 = vmatprep.subr.bf16.mxu0 0
    %3443 = vmatpush1.bf16.msra.mxu0 %v3257
    %3444 = vmatprep.subr.bf16.mxu0 0
    %3445 = vmatpush1.bf16.msra.mxu0 %v3258
    %3446 = vmatprep.subr.bf16.mxu0 0
    %3447 = vmatpush1.bf16.msra.mxu0 %v3259
    %3448 = vmatprep.subr.bf16.mxu0 0
    %3449 = vmatpush1.bf16.msra.mxu0 %v3260
    %3450 = vmatprep.subr.bf16.mxu0 0
    %3451 = vmatpush1.bf16.msra.mxu0 %v3261
    %3452 = vmatprep.subr.bf16.mxu0 0
    %3453 = vmatpush1.bf16.msra.mxu0 %v3262
    %3454 = vmatprep.subr.bf16.mxu0 0
    %3455 = vmatpush1.bf16.msra.mxu0 %v3263
    %3456 = vmatprep.mubr.bf16.mxu0 %v2823
    %3457 = vmatmul.mubr.bf16.gmra.mrb[0].mxu0 %v2822
    %v3458 = vpop.f32.mrb[0].mxu0
    %v3459 = vadd.f32 %v3419, %v3458
    %v3460 = vpop.f32.mrb[0].mxu0
    %v3461 = vpop.f32.mrb[0].mxu0
    %v3462 = vpop.f32.mrb[0].mxu0
    %3463 = vdwg.mxu0
    %3464 = vmatprep.subr.bf16.mxu0 0
    %3465 = vmatpush1.bf16.msra.mxu0 %v3264
    %3466 = vmatprep.subr.bf16.mxu0 0
    %3467 = vmatpush1.bf16.msra.mxu0 %v3265
    %3468 = vmatprep.subr.bf16.mxu0 0
    %3469 = vmatpush1.bf16.msra.mxu0 %v3266
    %3470 = vmatprep.subr.bf16.mxu0 0
    %3471 = vmatpush1.bf16.msra.mxu0 %v3267
    %3472 = vmatprep.subr.bf16.mxu0 0
    %3473 = vmatpush1.bf16.msra.mxu0 %v3268
    %3474 = vmatprep.subr.bf16.mxu0 0
    %3475 = vmatpush1.bf16.msra.mxu0 %v3269
    %3476 = vmatprep.subr.bf16.mxu0 0
    %3477 = vmatpush1.bf16.msra.mxu0 %v3270
    %3478 = vmatprep.subr.bf16.mxu0 0
    %3479 = vmatpush1.bf16.msra.mxu0 %v3271
    %3480 = vmatprep.subr.bf16.mxu0 0
    %3481 = vmatpush1.bf16.msra.mxu0 %v3272
    %3482 = vmatprep.subr.bf16.mxu0 0
    %3483 = vmatpush1.bf16.msra.mxu0 %v3273
    %3484 = vmatprep.subr.bf16.mxu0 0
    %3485 = vmatpush1.bf16.msra.mxu0 %v3274
    %3486 = vmatprep.subr.bf16.mxu0 0
    %3487 = vmatpush1.bf16.msra.mxu0 %v3275
    %3488 = vmatprep.subr.bf16.mxu0 0
    %3489 = vmatpush1.bf16.msra.mxu0 %v3276
    %3490 = vmatprep.subr.bf16.mxu0 0
    %3491 = vmatpush1.bf16.msra.mxu0 %v3277
    %3492 = vmatprep.subr.bf16.mxu0 0
    %3493 = vmatpush1.bf16.msra.mxu0 %v3278
    %3494 = vmatprep.subr.bf16.mxu0 0
    %3495 = vmatpush1.bf16.msra.mxu0 %v3279
    %3496 = vmatprep.mubr.bf16.mxu0 %v2825
    %3497 = vmatmul.mubr.bf16.gmra.mrb[0].mxu0 %v2824
    %v3498 = vpop.f32.mrb[0].mxu0
    %v3499 = vadd.f32 %v3459, %v3498
    %v3500 = vpop.f32.mrb[0].mxu0
    %v3501 = vpop.f32.mrb[0].mxu0
    %v3502 = vpop.f32.mrb[0].mxu0
    %3503 = vdwg.mxu0
    %vm3504 = vcmask 41984
    %v3505 = vsel %vm3504, %v3499, 0.0
    %3506 = vadd.xlane.f32.xlu0 %v3505
    %v3507 = vpop.xlane.xlu0 %3506
    %vm3508 = vcmask 1041408
    %v3509 = vsel %vm3508, %v3507, 0.0
    %v3510 = vrot.slane %v3509, 4
    %v3511 = vadd.f32 %v3509, %v3510
    %v3512 = vrot.slane %v3511, 2
    %v3513 = vadd.f32 %v3511, %v3512
    %v3514 = vrot.slane %v3513, 1
    %v3515 = vadd.f32 %v3513, %v3514
    %v3516 = vmul.f32 %v3515, 0.083333336
    %3518 = vset.pattern.permute.xlu0 6
    %3519 = vperm.xlu0 %3518, %v3499
    %v3520 = vpop.permute.xlu0 %3519
    %v3522 = vadd.f32 %v3499, %v3520
    %v3523 = vsub.f32 %v3522, %v3516
    %3524 = vst [vmem:[#allocation4] sm:$0x3] %v3523
    // Predicated region
    $region30: #{dueling_cnn_dqn_forward.1} parent=1 // pred_check
      _
    $region31: #{dueling_cnn_dqn_forward.1} parent=1 // pred_check_branch
      %3526 = sbr.rel (0) target = $region33
    $region32: #{dueling_cnn_dqn_forward.1} parent=1 // pred_region
      %s3528 = ssub.s32 32, 32
      %3529 = vsyncadd [#allocation5], %s3528
      %s3531 = sshll.u32 [#allocation4], 4
      %s3532 = int_to_ptr.vmem [resolvable:$true] %s3531
      %3534 = dma.vmem_to_hbm [thread:$0]  %s3532, 32, %s7, [#allocation5]
    $region33: #{dueling_cnn_dqn_forward.1} parent=1 // pred_fallthru
      _
    // Predicated region
    $region34: #{dueling_cnn_dqn_forward.1} parent=1 // pred_check
      _
    $region35: #{dueling_cnn_dqn_forward.1} parent=1 // pred_check_branch
      %3536 = sbr.rel (0) target = $region37
    $region36: #{dueling_cnn_dqn_forward.1} parent=1 // pred_region
      %3537 = dma.done [#allocation5], 32
    $region37: #{dueling_cnn_dqn_forward.1} parent=1 // pred_fallthru
      _
    %3538 = vsyncpa [#allocation5], 1

</llo_original>
